<compile_context>
chip_gen: v7x
topology: tpu7x:2x2x1
jax: 0.10.0
libtpu: 0.0.40
codegen_flags: <defaults>
</compile_context>

<pallas_src>
import math
from functools import partial

import jax
import jax.numpy as jnp
from jax import lax
from jax.experimental import pallas as pl
from jax.experimental.pallas import tpu as pltpu

# MXU operand / HBM weight dtype. bf16 engages the fast MXU path and halves weight
# traffic; accumulation stays f32. Set to jnp.float32 for a bit-closer match to the
# f32 PyTorch reference.
MATMUL_DTYPE = jnp.bfloat16
LN_EPS = 1e-6


# ----------------------------- Fused full-decoder kernel --------------------

def _decoder_kernel(
    x_ref, mem_ref, tgt_bias_ref, src_bias_ref,
    ln0a_ref, ln0b_ref, sa_wqkv_ref, sa_bqkv_ref, sa_wo_ref, sa_bo_ref,
    ln1a_ref, ln1b_ref, ca_wq_ref, ca_bq_ref, ca_wkv_ref, ca_bkv_ref,
    ca_wo_ref, ca_bo_ref,
    ln2a_ref, ln2b_ref, ff_w1_ref, ff_b1_ref, ff_w2_ref, ff_b2_ref,
    fnorm_a_ref, fnorm_b_ref,
    o_ref, x_scr,
    *, num_heads, num_layers, eps, mm_dtype):

    layer = pl.program_id(1)

    # Load the HBM activation only once per batch element (layer == 0); afterwards the
    # running activation stays resident in VMEM scratch across the layer axis.
    @pl.when(layer == 0)
    def _():
        x_scr[...] = x_ref[...]

    x = x_scr[0]          # (T, D) f32 running activation
    mem = mem_ref[0]      # (S, D) f32 encoder memory
    T, D = x.shape
    dk = D // num_heads
    scale = 1.0 / math.sqrt(dk)

    def _mm(a, b):
        # MXU matmul with f32 accumulation; weights already stored in mm_dtype.
        a = a if a.dtype == mm_dtype else a.astype(mm_dtype)
        b = b if b.dtype == mm_dtype else b.astype(mm_dtype)
        return jnp.dot(a, b, preferred_element_type=jnp.float32)

    def _ln(v, a, b):
        # LayerNorm exactly as the reference: unbiased std, (x-mean)/(std+eps).
        # Divide replaced by reciprocal-multiply (EUP slot, off the VPU).
        mean = jnp.mean(v, axis=-1, keepdims=True)
        var = jnp.sum((v - mean) ** 2, axis=-1, keepdims=True) / (v.shape[-1] - 1)
        inv = pl.reciprocal(jnp.sqrt(var) + eps, approx=False)
        return a * (v - mean) * inv + b

    def _mha(q, k, v, bias, wo, bo):
        # q: (T, D), k/v: (Tk, D), bias: (T, Tk) or (1, Tk) additive f32.
        # Heads computed with static lane slices; per-head outputs concatenated
        # lane-contiguously and projected with ONE full-depth matmul.
        heads = []
        for h in range(num_heads):              # static unroll (H is small)
            sl = slice(h * dk, (h + 1) * dk)
            s = lax.dot_general(q[:, sl].astype(mm_dtype), k[:, sl].astype(mm_dtype),
                                (((1,), (1,)), ((), ())),
                                preferred_element_type=jnp.float32) * scale
            s = s + bias
            s = s - jnp.max(s, axis=-1, keepdims=True)
            p = jnp.exp(s)
            p = p * pl.reciprocal(jnp.sum(p, axis=-1, keepdims=True), approx=True)
            heads.append(_mm(p, v[:, sl]))      # (T, dk)
        cat = jnp.concatenate(heads, axis=-1)   # (T, D) lane-contiguous
        return _mm(cat, wo) + bo                # single full-depth output projection

    # ---- sublayer 0: masked self-attention (fused QKV matmul) ----
    xn = _ln(x, ln0a_ref[0], ln0b_ref[0])
    qkv = _mm(xn, sa_wqkv_ref[0]) + sa_bqkv_ref[0]
    tgt_bias = tgt_bias_ref[0].astype(jnp.float32)
    x = x + _mha(qkv[:, :D], qkv[:, D:2 * D], qkv[:, 2 * D:], tgt_bias,
                 sa_wo_ref[0], sa_bo_ref[0])

    # ---- sublayer 1: cross-attention over encoder memory (fused KV matmul) ----
    xn = _ln(x, ln1a_ref[0], ln1b_ref[0])
    q = _mm(xn, ca_wq_ref[0]) + ca_bq_ref[0]
    kv = _mm(mem, ca_wkv_ref[0]) + ca_bkv_ref[0]
    src_bias = src_bias_ref[0].astype(jnp.float32)
    x = x + _mha(q, kv[:, :D], kv[:, D:], src_bias, ca_wo_ref[0], ca_bo_ref[0])

    # ---- sublayer 2: position-wise FFN ----
    xn = _ln(x, ln2a_ref[0], ln2b_ref[0])
    h1 = jnp.maximum(_mm(xn, ff_w1_ref[0]) + ff_b1_ref[0], 0.0)
    x = x + _mm(h1, ff_w2_ref[0]) + ff_b2_ref[0]

    x_scr[0] = x

    # ---- final LayerNorm fused into the last layer step ----
    @pl.when(layer == num_layers - 1)
    def _():
        y = _ln(x, fnorm_a_ref[...], fnorm_b_ref[...])
        o_ref[0] = y.astype(o_ref.dtype)


# ----------------------------- Forward (single pallas_call) -----------------

def decoder_forward(params, x, memory, src_mask, tgt_mask, num_heads):
    B, T, D = x.shape
    S = memory.shape[1]
    n_layers = params["sa_wqkv"].shape[0]

    # Convert masks once per forward into compact additive bf16 biases.
    tgt_bias = jnp.where(jnp.broadcast_to(tgt_mask, (B, T, T)) == 0,
                         jnp.float32(-1e9), jnp.float32(0.0)).astype(jnp.bfloat16)
    src_bias = jnp.where(jnp.broadcast_to(src_mask, (B, 1, S)) == 0,
                         jnp.float32(-1e9), jnp.float32(0.0)).astype(jnp.bfloat16)

    def stacked_spec(a):
        # One layer-slice of a [N_layers, ...] stacked weight, indexed by the layer axis.
        return pl.BlockSpec((1,) + a.shape[1:],
                            lambda b, l: (l,) + (0,) * (a.ndim - 1))

    def const_spec(a):
        return pl.BlockSpec(a.shape, lambda b, l: (0,) * a.ndim)

    weight_names = ["ln0_a", "ln0_b", "sa_wqkv", "sa_bqkv", "sa_wo", "sa_bo",
                    "ln1_a", "ln1_b", "ca_wq", "ca_bq", "ca_wkv", "ca_bkv",
                    "ca_wo", "ca_bo", "ln2_a", "ln2_b",
                    "ff_w1", "ff_b1", "ff_w2", "ff_b2"]
    weights = [params[n] for n in weight_names]

    return pl.pallas_call(
        partial(_decoder_kernel, num_heads=num_heads, num_layers=n_layers,
                eps=LN_EPS, mm_dtype=MATMUL_DTYPE),
        out_shape=jax.ShapeDtypeStruct((B, T, D), x.dtype),
        grid=(B, n_layers),
        in_specs=[pl.BlockSpec((1, T, D), lambda b, l: (b, 0, 0)),
                  pl.BlockSpec((1, S, D), lambda b, l: (b, 0, 0)),
                  pl.BlockSpec((1, T, T), lambda b, l: (b, 0, 0)),
                  pl.BlockSpec((1, 1, S), lambda b, l: (b, 0, 0))]
                 + [stacked_spec(w) for w in weights]
                 + [const_spec(params["norm_a"]), const_spec(params["norm_b"])],
        out_specs=pl.BlockSpec((1, T, D), lambda b, l: (b, 0, 0)),
        scratch_shapes=[pltpu.VMEM((1, T, D), jnp.float32)],
        compiler_params=pltpu.CompilerParams(
            dimension_semantics=("parallel", "arbitrary"),  # batch across TCs, layers sequential
            vmem_limit_bytes=32 * 1024 * 1024),
    )(x, memory, tgt_bias, src_bias, *weights, params["norm_a"], params["norm_b"])


# ----------------------------- Param init (pre-fused / pre-transposed / bf16) -

def _init_linear(key, dout, din, scale=0.02):
    kw, kb = jax.random.split(key)
    w = scale * jax.random.normal(kw, (dout, din), jnp.float32)   # torch [dout, din]
    b = scale * jax.random.normal(kb, (dout,), jnp.float32)
    return w, b


def init_params(key, N, D, d_ff, w_dtype=MATMUL_DTYPE):
    per_layer = []
    for _ in range(N):
        keys = jax.random.split(key, 11)
        key = keys[0]
        # self-attention: fuse q/k/v weights -> [D, 3D] (pre-transposed to x @ W form)
        wq, bq = _init_linear(keys[1], D, D)
        wk, bk = _init_linear(keys[2], D, D)
        wv, bv = _init_linear(keys[3], D, D)
        wo, bo = _init_linear(keys[4], D, D)
        sa_wqkv = jnp.concatenate([wq.T, wk.T, wv.T], axis=1).astype(w_dtype)
        sa_bqkv = jnp.concatenate([bq, bk, bv]).reshape(1, 3 * D)
        sa_wo, sa_bo = wo.T.astype(w_dtype), bo.reshape(1, D)
        # cross-attention: q separate (applied to x), k/v fused (applied to memory)
        wq, bq = _init_linear(keys[5], D, D)
        wk, bk = _init_linear(keys[6], D, D)
        wv, bv = _init_linear(keys[7], D, D)
        wo, bo = _init_linear(keys[8], D, D)
        ca_wq, ca_bq = wq.T.astype(w_dtype), bq.reshape(1, D)
        ca_wkv = jnp.concatenate([wk.T, wv.T], axis=1).astype(w_dtype)
        ca_bkv = jnp.concatenate([bk, bv]).reshape(1, 2 * D)
        ca_wo, ca_bo = wo.T.astype(w_dtype), bo.reshape(1, D)
        # FFN
        w1, b1 = _init_linear(keys[9], d_ff, D)
        w2, b2 = _init_linear(keys[10], D, d_ff)
        per_layer.append(dict(
            sa_wqkv=sa_wqkv, sa_bqkv=sa_bqkv, sa_wo=sa_wo, sa_bo=sa_bo,
            ca_wq=ca_wq, ca_bq=ca_bq, ca_wkv=ca_wkv, ca_bkv=ca_bkv,
            ca_wo=ca_wo, ca_bo=ca_bo,
            ff_w1=w1.T.astype(w_dtype), ff_b1=b1.reshape(1, d_ff),
            ff_w2=w2.T.astype(w_dtype), ff_b2=b2.reshape(1, D),
            # LayerNorm init matches the given source: a_2 = ones, b_2 = ones.
            ln0_a=jnp.ones((1, D), jnp.float32), ln0_b=jnp.ones((1, D), jnp.float32),
            ln1_a=jnp.ones((1, D), jnp.float32), ln1_b=jnp.ones((1, D), jnp.float32),
            ln2_a=jnp.ones((1, D), jnp.float32), ln2_b=jnp.ones((1, D), jnp.float32),
        ))
    # Stack per-layer params along a new leading layer axis for the layer grid dim.
    stacked = {k: jnp.stack([lp[k] for lp in per_layer], axis=0) for k in per_layer[0]}
    stacked["norm_a"] = jnp.ones((1, D), jnp.float32)
    stacked["norm_b"] = jnp.ones((1, D), jnp.float32)
    return stacked


# ----------------------------- Main ------------------------------------------

if __name__ == "__main__":
    B, T, S, D, H, D_FF, N_LAYERS = 2, 8, 8, 32, 4, 64, 2

    key = jax.random.PRNGKey(0)
    k_x, k_mem, k_p = jax.random.split(key, 3)

    x = jax.random.normal(k_x, (B, T, D), jnp.float32)
    memory = jax.random.normal(k_mem, (B, S, D), jnp.float32)
    src_mask = jnp.ones((B, 1, S), jnp.int32)                              # all visible
    tgt_mask = jnp.tril(jnp.ones((T, T), jnp.int32))[None].repeat(B, 0)    # causal

    params = init_params(k_p, N_LAYERS, D, D_FF)

    fwd = jax.jit(partial(decoder_forward, num_heads=H))
    out = fwd(params, x, memory, src_mask, tgt_mask)
    jax.block_until_ready(out)
    assert out.shape == (B, T, D)
    assert bool(jnp.isfinite(out).all())
    print("KERNEL_OK")
</pallas_src>

<mosaic_0001>
module attributes {stable_mosaic.version = 11 : i64} {
  func.func @_decoder_kernel(%arg0: i32, %arg1: i32, %arg2: memref<1x8x32xf32, #tpu.memory_space<vmem>>, %arg3: memref<1x8x32xf32, #tpu.memory_space<vmem>>, %arg4: memref<1x8x8xbf16, #tpu.memory_space<vmem>>, %arg5: memref<1x1x8xbf16, #tpu.memory_space<vmem>>, %arg6: memref<1x1x32xf32, #tpu.memory_space<vmem>>, %arg7: memref<1x1x32xf32, #tpu.memory_space<vmem>>, %arg8: memref<1x32x96xbf16, #tpu.memory_space<vmem>>, %arg9: memref<1x1x96xf32, #tpu.memory_space<vmem>>, %arg10: memref<1x32x32xbf16, #tpu.memory_space<vmem>>, %arg11: memref<1x1x32xf32, #tpu.memory_space<vmem>>, %arg12: memref<1x1x32xf32, #tpu.memory_space<vmem>>, %arg13: memref<1x1x32xf32, #tpu.memory_space<vmem>>, %arg14: memref<1x32x32xbf16, #tpu.memory_space<vmem>>, %arg15: memref<1x1x32xf32, #tpu.memory_space<vmem>>, %arg16: memref<1x32x64xbf16, #tpu.memory_space<vmem>>, %arg17: memref<1x1x64xf32, #tpu.memory_space<vmem>>, %arg18: memref<1x32x32xbf16, #tpu.memory_space<vmem>>, %arg19: memref<1x1x32xf32, #tpu.memory_space<vmem>>, %arg20: memref<1x1x32xf32, #tpu.memory_space<vmem>>, %arg21: memref<1x1x32xf32, #tpu.memory_space<vmem>>, %arg22: memref<1x32x64xbf16, #tpu.memory_space<vmem>>, %arg23: memref<1x1x64xf32, #tpu.memory_space<vmem>>, %arg24: memref<1x64x32xbf16, #tpu.memory_space<vmem>>, %arg25: memref<1x1x32xf32, #tpu.memory_space<vmem>>, %arg26: memref<1x32xf32, #tpu.memory_space<vmem>>, %arg27: memref<1x32xf32, #tpu.memory_space<vmem>>, %arg28: memref<1x8x32xf32, #tpu.memory_space<vmem>>, %arg29: memref<1x8x32xf32, #tpu.memory_space<vmem>>) attributes {dimension_semantics = [#tpu.dimension_semantics<parallel>, #tpu.dimension_semantics<arbitrary>], iteration_bounds = array<i64: 2, 2>, scalar_prefetch = 0 : i64, scratch_operands = 1 : i64, tpu.core_type = #tpu.core_type<tc>, window_params = [{transform_indices = @transform_0, window_bounds = array<i64: 1, 8, 32>}, {transform_indices = @transform_1, window_bounds = array<i64: 1, 8, 32>}, {transform_indices = @transform_2, window_bounds = array<i64: 1, 8, 8>}, {transform_indices = @transform_3, window_bounds = array<i64: 1, 1, 8>}, {transform_indices = @transform_4, window_bounds = array<i64: 1, 1, 32>}, {transform_indices = @transform_5, window_bounds = array<i64: 1, 1, 32>}, {transform_indices = @transform_6, window_bounds = array<i64: 1, 32, 96>}, {transform_indices = @transform_7, window_bounds = array<i64: 1, 1, 96>}, {transform_indices = @transform_8, window_bounds = array<i64: 1, 32, 32>}, {transform_indices = @transform_9, window_bounds = array<i64: 1, 1, 32>}, {transform_indices = @transform_10, window_bounds = array<i64: 1, 1, 32>}, {transform_indices = @transform_11, window_bounds = array<i64: 1, 1, 32>}, {transform_indices = @transform_12, window_bounds = array<i64: 1, 32, 32>}, {transform_indices = @transform_13, window_bounds = array<i64: 1, 1, 32>}, {transform_indices = @transform_14, window_bounds = array<i64: 1, 32, 64>}, {transform_indices = @transform_15, window_bounds = array<i64: 1, 1, 64>}, {transform_indices = @transform_16, window_bounds = array<i64: 1, 32, 32>}, {transform_indices = @transform_17, window_bounds = array<i64: 1, 1, 32>}, {transform_indices = @transform_18, window_bounds = array<i64: 1, 1, 32>}, {transform_indices = @transform_19, window_bounds = array<i64: 1, 1, 32>}, {transform_indices = @transform_20, window_bounds = array<i64: 1, 32, 64>}, {transform_indices = @transform_21, window_bounds = array<i64: 1, 1, 64>}, {transform_indices = @transform_22, window_bounds = array<i64: 1, 64, 32>}, {transform_indices = @transform_23, window_bounds = array<i64: 1, 1, 32>}, {pipeline_mode = #tpu.pipeline_mode<synchronous>, transform_indices = @transform_24, window_bounds = array<i64: 1, 32>}, {pipeline_mode = #tpu.pipeline_mode<synchronous>, transform_indices = @transform_25, window_bounds = array<i64: 1, 32>}, {transform_indices = @transform_26, window_bounds = array<i64: 1, 8, 32>}]} {
    %c0_i32 = arith.constant 0 : i32
    %0 = arith.cmpi eq, %arg1, %c0_i32 : i32
    %1 = arith.extui %0 : i1 to i32
    %c0_i32_0 = arith.constant 0 : i32
    %2 = arith.cmpi ne, %1, %c0_i32_0 : i32
    scf.if %2 {
      %c0_138 = arith.constant 0 : index
      %c0_139 = arith.constant 0 : index
      %c0_140 = arith.constant 0 : index
      %348 = vector.load %arg2[%c0_138, %c0_139, %c0_140] : memref<1x8x32xf32, #tpu.memory_space<vmem>>, vector<1x8x32xf32>
      %c0_141 = arith.constant 0 : index
      %c0_142 = arith.constant 0 : index
      %c0_143 = arith.constant 0 : index
      %349 = vector.load %arg29[%c0_141, %c0_142, %c0_143] : memref<1x8x32xf32, #tpu.memory_space<vmem>>, vector<1x8x32xf32>
      tpu.vector_store %arg29[%c0_141, %c0_142, %c0_143], %348 {strides = array<i32>} : memref<1x8x32xf32, #tpu.memory_space<vmem>>, vector<1x8x32xf32>,
    } else {
    }
    %c0 = arith.constant 0 : index
    %c0_1 = arith.constant 0 : index
    %c0_2 = arith.constant 0 : index
    %3 = vector.load %arg29[%c0, %c0_1, %c0_2] : memref<1x8x32xf32, #tpu.memory_space<vmem>>, vector<1x8x32xf32>
    %4 = vector.shape_cast %3 : vector<1x8x32xf32> to vector<8x32xf32>
    %c0_3 = arith.constant 0 : index
    %c0_4 = arith.constant 0 : index
    %c0_5 = arith.constant 0 : index
    %5 = vector.load %arg3[%c0_3, %c0_4, %c0_5] : memref<1x8x32xf32, #tpu.memory_space<vmem>>, vector<1x8x32xf32>
    %6 = vector.shape_cast %5 : vector<1x8x32xf32> to vector<8x32xf32>
    %c0_6 = arith.constant 0 : index
    %c0_7 = arith.constant 0 : index
    %c0_8 = arith.constant 0 : index
    %7 = vector.load %arg6[%c0_6, %c0_7, %c0_8] : memref<1x1x32xf32, #tpu.memory_space<vmem>>, vector<1x1x32xf32>
    %8 = vector.shape_cast %7 : vector<1x1x32xf32> to vector<1x32xf32>
    %c0_9 = arith.constant 0 : index
    %c0_10 = arith.constant 0 : index
    %c0_11 = arith.constant 0 : index
    %9 = vector.load %arg7[%c0_9, %c0_10, %c0_11] : memref<1x1x32xf32, #tpu.memory_space<vmem>>, vector<1x1x32xf32>
    %10 = vector.shape_cast %9 : vector<1x1x32xf32> to vector<1x32xf32>
    %cst = arith.constant dense<0.000000e+00> : vector<8xf32>
    %11 = vector.multi_reduction <add>, %4, %cst [1] : vector<8x32xf32> to vector<8xf32>
    %12 = vector.shape_cast %11 : vector<8xf32> to vector<8x1xf32>
    %cst_12 = arith.constant 3.200000e+01 : f32
    %13 = vector.broadcast %cst_12 : f32 to vector<8x1xf32>
    %14 = arith.divf %12, %13 : vector<8x1xf32>
    %15 = vector.broadcast %14 : vector<8x1xf32> to vector<8x32xf32>
    %16 = arith.subf %4, %15 : vector<8x32xf32>
    %17 = arith.mulf %16, %16 : vector<8x32xf32>
    %cst_13 = arith.constant dense<0.000000e+00> : vector<8xf32>
    %18 = vector.multi_reduction <add>, %17, %cst_13 [1] : vector<8x32xf32> to vector<8xf32>
    %19 = vector.shape_cast %18 : vector<8xf32> to vector<8x1xf32>
    %cst_14 = arith.constant 3.100000e+01 : f32
    %20 = vector.broadcast %cst_14 : f32 to vector<8x1xf32>
    %21 = arith.divf %19, %20 : vector<8x1xf32>
    %22 = math.sqrt %21 : vector<8x1xf32>
    %cst_15 = arith.constant 9.99999997E-7 : f32
    %23 = vector.broadcast %cst_15 : f32 to vector<8x1xf32>
    %24 = arith.addf %22, %23 : vector<8x1xf32>
    %25 = tpu.reciprocal %24 : vector<8x1xf32> -> vector<8x1xf32>
    %26 = vector.broadcast %14 : vector<8x1xf32> to vector<8x32xf32>
    %27 = arith.subf %4, %26 : vector<8x32xf32>
    %28 = vector.broadcast %8 : vector<1x32xf32> to vector<8x32xf32>
    %29 = arith.mulf %28, %27 : vector<8x32xf32>
    %30 = vector.broadcast %25 : vector<8x1xf32> to vector<8x32xf32>
    %31 = arith.mulf %29, %30 : vector<8x32xf32>
    %32 = vector.broadcast %10 : vector<1x32xf32> to vector<8x32xf32>
    %33 = arith.addf %31, %32 : vector<8x32xf32>
    %c0_16 = arith.constant 0 : index
    %c0_17 = arith.constant 0 : index
    %c0_18 = arith.constant 0 : index
    %34 = vector.load %arg8[%c0_16, %c0_17, %c0_18] : memref<1x32x96xbf16, #tpu.memory_space<vmem>>, vector<1x32x96xbf16>
    %35 = vector.shape_cast %34 : vector<1x32x96xbf16> to vector<32x96xbf16>
    %36 = arith.truncf %33 : vector<8x32xf32> to vector<8x32xbf16>
    %cst_19 = arith.constant dense<0.000000e+00> : vector<8x96xf32>
    %37 = tpu.matmul %36, %35, %cst_19 {dimension_numbers = #tpu.dot_dimension_numbers<[1], [0], [0], [1], [0, 0, 1, 1], [], []>} : vector<8x32xbf16>, vector<32x96xbf16>, vector<8x96xf32> -> vector<8x96xf32>
    %c0_20 = arith.constant 0 : index
    %c0_21 = arith.constant 0 : index
    %c0_22 = arith.constant 0 : index
    %38 = vector.load %arg9[%c0_20, %c0_21, %c0_22] : memref<1x1x96xf32, #tpu.memory_space<vmem>>, vector<1x1x96xf32>
    %39 = vector.shape_cast %38 : vector<1x1x96xf32> to vector<1x96xf32>
    %40 = vector.broadcast %39 : vector<1x96xf32> to vector<8x96xf32>
    %41 = arith.addf %37, %40 : vector<8x96xf32>
    %c0_23 = arith.constant 0 : index
    %c0_24 = arith.constant 0 : index
    %c0_25 = arith.constant 0 : index
    %42 = vector.load %arg4[%c0_23, %c0_24, %c0_25] : memref<1x8x8xbf16, #tpu.memory_space<vmem>>, vector<1x8x8xbf16>
    %43 = vector.shape_cast %42 : vector<1x8x8xbf16> to vector<8x8xbf16>
    %44 = arith.extf %43 : vector<8x8xbf16> to vector<8x8xf32>
    %45 = vector.extract_strided_slice %41 {offsets = [0, 0], sizes = [8, 32], strides = [1, 1]} : vector<8x96xf32> to vector<8x32xf32>
    %46 = vector.extract_strided_slice %41 {offsets = [0, 32], sizes = [8, 32], strides = [1, 1]} : vector<8x96xf32> to vector<8x32xf32>
    %47 = vector.extract_strided_slice %41 {offsets = [0, 64], sizes = [8, 32], strides = [1, 1]} : vector<8x96xf32> to vector<8x32xf32>
    %c0_26 = arith.constant 0 : index
    %c0_27 = arith.constant 0 : index
    %c0_28 = arith.constant 0 : index
    %48 = vector.load %arg10[%c0_26, %c0_27, %c0_28] : memref<1x32x32xbf16, #tpu.memory_space<vmem>>, vector<1x32x32xbf16>
    %49 = vector.shape_cast %48 : vector<1x32x32xbf16> to vector<32x32xbf16>
    %c0_29 = arith.constant 0 : index
    %c0_30 = arith.constant 0 : index
    %c0_31 = arith.constant 0 : index
    %50 = vector.load %arg11[%c0_29, %c0_30, %c0_31] : memref<1x1x32xf32, #tpu.memory_space<vmem>>, vector<1x1x32xf32>
    %51 = vector.shape_cast %50 : vector<1x1x32xf32> to vector<1x32xf32>
    %52 = vector.extract_strided_slice %45 {offsets = [0, 0], sizes = [8, 8], strides = [1, 1]} : vector<8x32xf32> to vector<8x8xf32>
    %53 = arith.truncf %52 : vector<8x8xf32> to vector<8x8xbf16>
    %54 = vector.extract_strided_slice %46 {offsets = [0, 0], sizes = [8, 8], strides = [1, 1]} : vector<8x32xf32> to vector<8x8xf32>
    %55 = arith.truncf %54 : vector<8x8xf32> to vector<8x8xbf16>
    %cst_32 = arith.constant dense<0.000000e+00> : vector<8x8xf32>
    %56 = tpu.matmul %53, %55, %cst_32 {dimension_numbers = #tpu.dot_dimension_numbers<[1], [1], [0], [0], [0, 0, 1, 0], [], []>} : vector<8x8xbf16>, vector<8x8xbf16>, vector<8x8xf32> -> vector<8x8xf32>
    %cst_33 = arith.constant 0.353553385 : f32
    %57 = vector.broadcast %cst_33 : f32 to vector<8x8xf32>
    %58 = arith.mulf %56, %57 : vector<8x8xf32>
    %59 = arith.addf %58, %44 : vector<8x8xf32>
    %cst_34 = arith.constant dense<0xFF800000> : vector<8xf32>
    %60 = vector.multi_reduction <maximumf>, %59, %cst_34 [1] : vector<8x8xf32> to vector<8xf32>
    %61 = vector.shape_cast %60 : vector<8xf32> to vector<8x1xf32>
    %62 = vector.broadcast %61 : vector<8x1xf32> to vector<8x8xf32>
    %63 = arith.subf %59, %62 : vector<8x8xf32>
    %64 = math.exp %63 : vector<8x8xf32>
    %cst_35 = arith.constant dense<0.000000e+00> : vector<8xf32>
    %65 = vector.multi_reduction <add>, %64, %cst_35 [1] : vector<8x8xf32> to vector<8xf32>
    %66 = vector.shape_cast %65 : vector<8xf32> to vector<8x1xf32>
    %67 = tpu.reciprocal %66 {approx = true} : vector<8x1xf32> -> vector<8x1xf32>
    %68 = vector.broadcast %67 : vector<8x1xf32> to vector<8x8xf32>
    %69 = arith.mulf %64, %68 : vector<8x8xf32>
    %70 = vector.extract_strided_slice %47 {offsets = [0, 0], sizes = [8, 8], strides = [1, 1]} : vector<8x32xf32> to vector<8x8xf32>
    %71 = arith.truncf %69 : vector<8x8xf32> to vector<8x8xbf16>
    %72 = arith.truncf %70 : vector<8x8xf32> to vector<8x8xbf16>
    %cst_36 = arith.constant dense<0.000000e+00> : vector<8x8xf32>
    %73 = tpu.matmul %71, %72, %cst_36 {dimension_numbers = #tpu.dot_dimension_numbers<[1], [0], [0], [1], [0, 0, 1, 1], [], []>} : vector<8x8xbf16>, vector<8x8xbf16>, vector<8x8xf32> -> vector<8x8xf32>
    %74 = vector.extract_strided_slice %45 {offsets = [0, 8], sizes = [8, 8], strides = [1, 1]} : vector<8x32xf32> to vector<8x8xf32>
    %75 = arith.truncf %74 : vector<8x8xf32> to vector<8x8xbf16>
    %76 = vector.extract_strided_slice %46 {offsets = [0, 8], sizes = [8, 8], strides = [1, 1]} : vector<8x32xf32> to vector<8x8xf32>
    %77 = arith.truncf %76 : vector<8x8xf32> to vector<8x8xbf16>
    %cst_37 = arith.constant dense<0.000000e+00> : vector<8x8xf32>
    %78 = tpu.matmul %75, %77, %cst_37 {dimension_numbers = #tpu.dot_dimension_numbers<[1], [1], [0], [0], [0, 0, 1, 0], [], []>} : vector<8x8xbf16>, vector<8x8xbf16>, vector<8x8xf32> -> vector<8x8xf32>
    %cst_38 = arith.constant 0.353553385 : f32
    %79 = vector.broadcast %cst_38 : f32 to vector<8x8xf32>
    %80 = arith.mulf %78, %79 : vector<8x8xf32>
    %81 = arith.addf %80, %44 : vector<8x8xf32>
    %cst_39 = arith.constant dense<0xFF800000> : vector<8xf32>
    %82 = vector.multi_reduction <maximumf>, %81, %cst_39 [1] : vector<8x8xf32> to vector<8xf32>
    %83 = vector.shape_cast %82 : vector<8xf32> to vector<8x1xf32>
    %84 = vector.broadcast %83 : vector<8x1xf32> to vector<8x8xf32>
    %85 = arith.subf %81, %84 : vector<8x8xf32>
    %86 = math.exp %85 : vector<8x8xf32>
    %cst_40 = arith.constant dense<0.000000e+00> : vector<8xf32>
    %87 = vector.multi_reduction <add>, %86, %cst_40 [1] : vector<8x8xf32> to vector<8xf32>
    %88 = vector.shape_cast %87 : vector<8xf32> to vector<8x1xf32>
    %89 = tpu.reciprocal %88 {approx = true} : vector<8x1xf32> -> vector<8x1xf32>
    %90 = vector.broadcast %89 : vector<8x1xf32> to vector<8x8xf32>
    %91 = arith.mulf %86, %90 : vector<8x8xf32>
    %92 = vector.extract_strided_slice %47 {offsets = [0, 8], sizes = [8, 8], strides = [1, 1]} : vector<8x32xf32> to vector<8x8xf32>
    %93 = arith.truncf %91 : vector<8x8xf32> to vector<8x8xbf16>
    %94 = arith.truncf %92 : vector<8x8xf32> to vector<8x8xbf16>
    %cst_41 = arith.constant dense<0.000000e+00> : vector<8x8xf32>
    %95 = tpu.matmul %93, %94, %cst_41 {dimension_numbers = #tpu.dot_dimension_numbers<[1], [0], [0], [1], [0, 0, 1, 1], [], []>} : vector<8x8xbf16>, vector<8x8xbf16>, vector<8x8xf32> -> vector<8x8xf32>
    %96 = vector.extract_strided_slice %45 {offsets = [0, 16], sizes = [8, 8], strides = [1, 1]} : vector<8x32xf32> to vector<8x8xf32>
    %97 = arith.truncf %96 : vector<8x8xf32> to vector<8x8xbf16>
    %98 = vector.extract_strided_slice %46 {offsets = [0, 16], sizes = [8, 8], strides = [1, 1]} : vector<8x32xf32> to vector<8x8xf32>
    %99 = arith.truncf %98 : vector<8x8xf32> to vector<8x8xbf16>
    %cst_42 = arith.constant dense<0.000000e+00> : vector<8x8xf32>
    %100 = tpu.matmul %97, %99, %cst_42 {dimension_numbers = #tpu.dot_dimension_numbers<[1], [1], [0], [0], [0, 0, 1, 0], [], []>} : vector<8x8xbf16>, vector<8x8xbf16>, vector<8x8xf32> -> vector<8x8xf32>
    %cst_43 = arith.constant 0.353553385 : f32
    %101 = vector.broadcast %cst_43 : f32 to vector<8x8xf32>
    %102 = arith.mulf %100, %101 : vector<8x8xf32>
    %103 = arith.addf %102, %44 : vector<8x8xf32>
    %cst_44 = arith.constant dense<0xFF800000> : vector<8xf32>
    %104 = vector.multi_reduction <maximumf>, %103, %cst_44 [1] : vector<8x8xf32> to vector<8xf32>
    %105 = vector.shape_cast %104 : vector<8xf32> to vector<8x1xf32>
    %106 = vector.broadcast %105 : vector<8x1xf32> to vector<8x8xf32>
    %107 = arith.subf %103, %106 : vector<8x8xf32>
    %108 = math.exp %107 : vector<8x8xf32>
    %cst_45 = arith.constant dense<0.000000e+00> : vector<8xf32>
    %109 = vector.multi_reduction <add>, %108, %cst_45 [1] : vector<8x8xf32> to vector<8xf32>
    %110 = vector.shape_cast %109 : vector<8xf32> to vector<8x1xf32>
    %111 = tpu.reciprocal %110 {approx = true} : vector<8x1xf32> -> vector<8x1xf32>
    %112 = vector.broadcast %111 : vector<8x1xf32> to vector<8x8xf32>
    %113 = arith.mulf %108, %112 : vector<8x8xf32>
    %114 = vector.extract_strided_slice %47 {offsets = [0, 16], sizes = [8, 8], strides = [1, 1]} : vector<8x32xf32> to vector<8x8xf32>
    %115 = arith.truncf %113 : vector<8x8xf32> to vector<8x8xbf16>
    %116 = arith.truncf %114 : vector<8x8xf32> to vector<8x8xbf16>
    %cst_46 = arith.constant dense<0.000000e+00> : vector<8x8xf32>
    %117 = tpu.matmul %115, %116, %cst_46 {dimension_numbers = #tpu.dot_dimension_numbers<[1], [0], [0], [1], [0, 0, 1, 1], [], []>} : vector<8x8xbf16>, vector<8x8xbf16>, vector<8x8xf32> -> vector<8x8xf32>
    %118 = vector.extract_strided_slice %45 {offsets = [0, 24], sizes = [8, 8], strides = [1, 1]} : vector<8x32xf32> to vector<8x8xf32>
    %119 = arith.truncf %118 : vector<8x8xf32> to vector<8x8xbf16>
    %120 = vector.extract_strided_slice %46 {offsets = [0, 24], sizes = [8, 8], strides = [1, 1]} : vector<8x32xf32> to vector<8x8xf32>
    %121 = arith.truncf %120 : vector<8x8xf32> to vector<8x8xbf16>
    %cst_47 = arith.constant dense<0.000000e+00> : vector<8x8xf32>
    %122 = tpu.matmul %119, %121, %cst_47 {dimension_numbers = #tpu.dot_dimension_numbers<[1], [1], [0], [0], [0, 0, 1, 0], [], []>} : vector<8x8xbf16>, vector<8x8xbf16>, vector<8x8xf32> -> vector<8x8xf32>
    %cst_48 = arith.constant 0.353553385 : f32
    %123 = vector.broadcast %cst_48 : f32 to vector<8x8xf32>
    %124 = arith.mulf %122, %123 : vector<8x8xf32>
    %125 = arith.addf %124, %44 : vector<8x8xf32>
    %cst_49 = arith.constant dense<0xFF800000> : vector<8xf32>
    %126 = vector.multi_reduction <maximumf>, %125, %cst_49 [1] : vector<8x8xf32> to vector<8xf32>
    %127 = vector.shape_cast %126 : vector<8xf32> to vector<8x1xf32>
    %128 = vector.broadcast %127 : vector<8x1xf32> to vector<8x8xf32>
    %129 = arith.subf %125, %128 : vector<8x8xf32>
    %130 = math.exp %129 : vector<8x8xf32>
    %cst_50 = arith.constant dense<0.000000e+00> : vector<8xf32>
    %131 = vector.multi_reduction <add>, %130, %cst_50 [1] : vector<8x8xf32> to vector<8xf32>
    %132 = vector.shape_cast %131 : vector<8xf32> to vector<8x1xf32>
    %133 = tpu.reciprocal %132 {approx = true} : vector<8x1xf32> -> vector<8x1xf32>
    %134 = vector.broadcast %133 : vector<8x1xf32> to vector<8x8xf32>
    %135 = arith.mulf %130, %134 : vector<8x8xf32>
    %136 = vector.extract_strided_slice %47 {offsets = [0, 24], sizes = [8, 8], strides = [1, 1]} : vector<8x32xf32> to vector<8x8xf32>
    %137 = arith.truncf %135 : vector<8x8xf32> to vector<8x8xbf16>
    %138 = arith.truncf %136 : vector<8x8xf32> to vector<8x8xbf16>
    %cst_51 = arith.constant dense<0.000000e+00> : vector<8x8xf32>
    %139 = tpu.matmul %137, %138, %cst_51 {dimension_numbers = #tpu.dot_dimension_numbers<[1], [0], [0], [1], [0, 0, 1, 1], [], []>} : vector<8x8xbf16>, vector<8x8xbf16>, vector<8x8xf32> -> vector<8x8xf32>
    %140 = tpu.concatenate %73, %95, %117, %139 in 1 : vector<8x8xf32>, vector<8x8xf32>, vector<8x8xf32>, vector<8x8xf32> -> vector<8x32xf32>
    %141 = arith.truncf %140 : vector<8x32xf32> to vector<8x32xbf16>
    %cst_52 = arith.constant dense<0.000000e+00> : vector<8x32xf32>
    %142 = tpu.matmul %141, %49, %cst_52 {dimension_numbers = #tpu.dot_dimension_numbers<[1], [0], [0], [1], [0, 0, 1, 1], [], []>} : vector<8x32xbf16>, vector<32x32xbf16>, vector<8x32xf32> -> vector<8x32xf32>
    %143 = vector.broadcast %51 : vector<1x32xf32> to vector<8x32xf32>
    %144 = arith.addf %142, %143 : vector<8x32xf32>
    %145 = arith.addf %4, %144 : vector<8x32xf32>
    %c0_53 = arith.constant 0 : index
    %c0_54 = arith.constant 0 : index
    %c0_55 = arith.constant 0 : index
    %146 = vector.load %arg12[%c0_53, %c0_54, %c0_55] : memref<1x1x32xf32, #tpu.memory_space<vmem>>, vector<1x1x32xf32>
    %147 = vector.shape_cast %146 : vector<1x1x32xf32> to vector<1x32xf32>
    %c0_56 = arith.constant 0 : index
    %c0_57 = arith.constant 0 : index
    %c0_58 = arith.constant 0 : index
    %148 = vector.load %arg13[%c0_56, %c0_57, %c0_58] : memref<1x1x32xf32, #tpu.memory_space<vmem>>, vector<1x1x32xf32>
    %149 = vector.shape_cast %148 : vector<1x1x32xf32> to vector<1x32xf32>
    %cst_59 = arith.constant dense<0.000000e+00> : vector<8xf32>
    %150 = vector.multi_reduction <add>, %145, %cst_59 [1] : vector<8x32xf32> to vector<8xf32>
    %151 = vector.shape_cast %150 : vector<8xf32> to vector<8x1xf32>
    %cst_60 = arith.constant 3.200000e+01 : f32
    %152 = vector.broadcast %cst_60 : f32 to vector<8x1xf32>
    %153 = arith.divf %151, %152 : vector<8x1xf32>
    %154 = vector.broadcast %153 : vector<8x1xf32> to vector<8x32xf32>
    %155 = arith.subf %145, %154 : vector<8x32xf32>
    %156 = arith.mulf %155, %155 : vector<8x32xf32>
    %cst_61 = arith.constant dense<0.000000e+00> : vector<8xf32>
    %157 = vector.multi_reduction <add>, %156, %cst_61 [1] : vector<8x32xf32> to vector<8xf32>
    %158 = vector.shape_cast %157 : vector<8xf32> to vector<8x1xf32>
    %cst_62 = arith.constant 3.100000e+01 : f32
    %159 = vector.broadcast %cst_62 : f32 to vector<8x1xf32>
    %160 = arith.divf %158, %159 : vector<8x1xf32>
    %161 = math.sqrt %160 : vector<8x1xf32>
    %cst_63 = arith.constant 9.99999997E-7 : f32
    %162 = vector.broadcast %cst_63 : f32 to vector<8x1xf32>
    %163 = arith.addf %161, %162 : vector<8x1xf32>
    %164 = tpu.reciprocal %163 : vector<8x1xf32> -> vector<8x1xf32>
    %165 = vector.broadcast %153 : vector<8x1xf32> to vector<8x32xf32>
    %166 = arith.subf %145, %165 : vector<8x32xf32>
    %167 = vector.broadcast %147 : vector<1x32xf32> to vector<8x32xf32>
    %168 = arith.mulf %167, %166 : vector<8x32xf32>
    %169 = vector.broadcast %164 : vector<8x1xf32> to vector<8x32xf32>
    %170 = arith.mulf %168, %169 : vector<8x32xf32>
    %171 = vector.broadcast %149 : vector<1x32xf32> to vector<8x32xf32>
    %172 = arith.addf %170, %171 : vector<8x32xf32>
    %c0_64 = arith.constant 0 : index
    %c0_65 = arith.constant 0 : index
    %c0_66 = arith.constant 0 : index
    %173 = vector.load %arg14[%c0_64, %c0_65, %c0_66] : memref<1x32x32xbf16, #tpu.memory_space<vmem>>, vector<1x32x32xbf16>
    %174 = vector.shape_cast %173 : vector<1x32x32xbf16> to vector<32x32xbf16>
    %175 = arith.truncf %172 : vector<8x32xf32> to vector<8x32xbf16>
    %cst_67 = arith.constant dense<0.000000e+00> : vector<8x32xf32>
    %176 = tpu.matmul %175, %174, %cst_67 {dimension_numbers = #tpu.dot_dimension_numbers<[1], [0], [0], [1], [0, 0, 1, 1], [], []>} : vector<8x32xbf16>, vector<32x32xbf16>, vector<8x32xf32> -> vector<8x32xf32>
    %c0_68 = arith.constant 0 : index
    %c0_69 = arith.constant 0 : index
    %c0_70 = arith.constant 0 : index
    %177 = vector.load %arg15[%c0_68, %c0_69, %c0_70] : memref<1x1x32xf32, #tpu.memory_space<vmem>>, vector<1x1x32xf32>
    %178 = vector.shape_cast %177 : vector<1x1x32xf32> to vector<1x32xf32>
    %179 = vector.broadcast %178 : vector<1x32xf32> to vector<8x32xf32>
    %180 = arith.addf %176, %179 : vector<8x32xf32>
    %c0_71 = arith.constant 0 : index
    %c0_72 = arith.constant 0 : index
    %c0_73 = arith.constant 0 : index
    %181 = vector.load %arg16[%c0_71, %c0_72, %c0_73] : memref<1x32x64xbf16, #tpu.memory_space<vmem>>, vector<1x32x64xbf16>
    %182 = vector.shape_cast %181 : vector<1x32x64xbf16> to vector<32x64xbf16>
    %183 = arith.truncf %6 : vector<8x32xf32> to vector<8x32xbf16>
    %cst_74 = arith.constant dense<0.000000e+00> : vector<8x64xf32>
    %184 = tpu.matmul %183, %182, %cst_74 {dimension_numbers = #tpu.dot_dimension_numbers<[1], [0], [0], [1], [0, 0, 1, 1], [], []>} : vector<8x32xbf16>, vector<32x64xbf16>, vector<8x64xf32> -> vector<8x64xf32>
    %c0_75 = arith.constant 0 : index
    %c0_76 = arith.constant 0 : index
    %c0_77 = arith.constant 0 : index
    %185 = vector.load %arg17[%c0_75, %c0_76, %c0_77] : memref<1x1x64xf32, #tpu.memory_space<vmem>>, vector<1x1x64xf32>
    %186 = vector.shape_cast %185 : vector<1x1x64xf32> to vector<1x64xf32>
    %187 = vector.broadcast %186 : vector<1x64xf32> to vector<8x64xf32>
    %188 = arith.addf %184, %187 : vector<8x64xf32>
    %c0_78 = arith.constant 0 : index
    %c0_79 = arith.constant 0 : index
    %c0_80 = arith.constant 0 : index
    %189 = vector.load %arg5[%c0_78, %c0_79, %c0_80] : memref<1x1x8xbf16, #tpu.memory_space<vmem>>, vector<1x1x8xbf16>
    %190 = vector.shape_cast %189 : vector<1x1x8xbf16> to vector<1x8xbf16>
    %191 = arith.extf %190 : vector<1x8xbf16> to vector<1x8xf32>
    %192 = vector.extract_strided_slice %188 {offsets = [0, 0], sizes = [8, 32], strides = [1, 1]} : vector<8x64xf32> to vector<8x32xf32>
    %193 = vector.extract_strided_slice %188 {offsets = [0, 32], sizes = [8, 32], strides = [1, 1]} : vector<8x64xf32> to vector<8x32xf32>
    %c0_81 = arith.constant 0 : index
    %c0_82 = arith.constant 0 : index
    %c0_83 = arith.constant 0 : index
    %194 = vector.load %arg18[%c0_81, %c0_82, %c0_83] : memref<1x32x32xbf16, #tpu.memory_space<vmem>>, vector<1x32x32xbf16>
    %195 = vector.shape_cast %194 : vector<1x32x32xbf16> to vector<32x32xbf16>
    %c0_84 = arith.constant 0 : index
    %c0_85 = arith.constant 0 : index
    %c0_86 = arith.constant 0 : index
    %196 = vector.load %arg19[%c0_84, %c0_85, %c0_86] : memref<1x1x32xf32, #tpu.memory_space<vmem>>, vector<1x1x32xf32>
    %197 = vector.shape_cast %196 : vector<1x1x32xf32> to vector<1x32xf32>
    %198 = vector.extract_strided_slice %180 {offsets = [0, 0], sizes = [8, 8], strides = [1, 1]} : vector<8x32xf32> to vector<8x8xf32>
    %199 = arith.truncf %198 : vector<8x8xf32> to vector<8x8xbf16>
    %200 = vector.extract_strided_slice %192 {offsets = [0, 0], sizes = [8, 8], strides = [1, 1]} : vector<8x32xf32> to vector<8x8xf32>
    %201 = arith.truncf %200 : vector<8x8xf32> to vector<8x8xbf16>
    %cst_87 = arith.constant dense<0.000000e+00> : vector<8x8xf32>
    %202 = tpu.matmul %199, %201, %cst_87 {dimension_numbers = #tpu.dot_dimension_numbers<[1], [1], [0], [0], [0, 0, 1, 0], [], []>} : vector<8x8xbf16>, vector<8x8xbf16>, vector<8x8xf32> -> vector<8x8xf32>
    %cst_88 = arith.constant 0.353553385 : f32
    %203 = vector.broadcast %cst_88 : f32 to vector<8x8xf32>
    %204 = arith.mulf %202, %203 : vector<8x8xf32>
    %205 = vector.broadcast %191 : vector<1x8xf32> to vector<8x8xf32>
    %206 = arith.addf %204, %205 : vector<8x8xf32>
    %cst_89 = arith.constant dense<0xFF800000> : vector<8xf32>
    %207 = vector.multi_reduction <maximumf>, %206, %cst_89 [1] : vector<8x8xf32> to vector<8xf32>
    %208 = vector.shape_cast %207 : vector<8xf32> to vector<8x1xf32>
    %209 = vector.broadcast %208 : vector<8x1xf32> to vector<8x8xf32>
    %210 = arith.subf %206, %209 : vector<8x8xf32>
    %211 = math.exp %210 : vector<8x8xf32>
    %cst_90 = arith.constant dense<0.000000e+00> : vector<8xf32>
    %212 = vector.multi_reduction <add>, %211, %cst_90 [1] : vector<8x8xf32> to vector<8xf32>
    %213 = vector.shape_cast %212 : vector<8xf32> to vector<8x1xf32>
    %214 = tpu.reciprocal %213 {approx = true} : vector<8x1xf32> -> vector<8x1xf32>
    %215 = vector.broadcast %214 : vector<8x1xf32> to vector<8x8xf32>
    %216 = arith.mulf %211, %215 : vector<8x8xf32>
    %217 = vector.extract_strided_slice %193 {offsets = [0, 0], sizes = [8, 8], strides = [1, 1]} : vector<8x32xf32> to vector<8x8xf32>
    %218 = arith.truncf %216 : vector<8x8xf32> to vector<8x8xbf16>
    %219 = arith.truncf %217 : vector<8x8xf32> to vector<8x8xbf16>
    %cst_91 = arith.constant dense<0.000000e+00> : vector<8x8xf32>
    %220 = tpu.matmul %218, %219, %cst_91 {dimension_numbers = #tpu.dot_dimension_numbers<[1], [0], [0], [1], [0, 0, 1, 1], [], []>} : vector<8x8xbf16>, vector<8x8xbf16>, vector<8x8xf32> -> vector<8x8xf32>
    %221 = vector.extract_strided_slice %180 {offsets = [0, 8], sizes = [8, 8], strides = [1, 1]} : vector<8x32xf32> to vector<8x8xf32>
    %222 = arith.truncf %221 : vector<8x8xf32> to vector<8x8xbf16>
    %223 = vector.extract_strided_slice %192 {offsets = [0, 8], sizes = [8, 8], strides = [1, 1]} : vector<8x32xf32> to vector<8x8xf32>
    %224 = arith.truncf %223 : vector<8x8xf32> to vector<8x8xbf16>
    %cst_92 = arith.constant dense<0.000000e+00> : vector<8x8xf32>
    %225 = tpu.matmul %222, %224, %cst_92 {dimension_numbers = #tpu.dot_dimension_numbers<[1], [1], [0], [0], [0, 0, 1, 0], [], []>} : vector<8x8xbf16>, vector<8x8xbf16>, vector<8x8xf32> -> vector<8x8xf32>
    %cst_93 = arith.constant 0.353553385 : f32
    %226 = vector.broadcast %cst_93 : f32 to vector<8x8xf32>
    %227 = arith.mulf %225, %226 : vector<8x8xf32>
    %228 = vector.broadcast %191 : vector<1x8xf32> to vector<8x8xf32>
    %229 = arith.addf %227, %228 : vector<8x8xf32>
    %cst_94 = arith.constant dense<0xFF800000> : vector<8xf32>
    %230 = vector.multi_reduction <maximumf>, %229, %cst_94 [1] : vector<8x8xf32> to vector<8xf32>
    %231 = vector.shape_cast %230 : vector<8xf32> to vector<8x1xf32>
    %232 = vector.broadcast %231 : vector<8x1xf32> to vector<8x8xf32>
    %233 = arith.subf %229, %232 : vector<8x8xf32>
    %234 = math.exp %233 : vector<8x8xf32>
    %cst_95 = arith.constant dense<0.000000e+00> : vector<8xf32>
    %235 = vector.multi_reduction <add>, %234, %cst_95 [1] : vector<8x8xf32> to vector<8xf32>
    %236 = vector.shape_cast %235 : vector<8xf32> to vector<8x1xf32>
    %237 = tpu.reciprocal %236 {approx = true} : vector<8x1xf32> -> vector<8x1xf32>
    %238 = vector.broadcast %237 : vector<8x1xf32> to vector<8x8xf32>
    %239 = arith.mulf %234, %238 : vector<8x8xf32>
    %240 = vector.extract_strided_slice %193 {offsets = [0, 8], sizes = [8, 8], strides = [1, 1]} : vector<8x32xf32> to vector<8x8xf32>
    %241 = arith.truncf %239 : vector<8x8xf32> to vector<8x8xbf16>
    %242 = arith.truncf %240 : vector<8x8xf32> to vector<8x8xbf16>
    %cst_96 = arith.constant dense<0.000000e+00> : vector<8x8xf32>
    %243 = tpu.matmul %241, %242, %cst_96 {dimension_numbers = #tpu.dot_dimension_numbers<[1], [0], [0], [1], [0, 0, 1, 1], [], []>} : vector<8x8xbf16>, vector<8x8xbf16>, vector<8x8xf32> -> vector<8x8xf32>
    %244 = vector.extract_strided_slice %180 {offsets = [0, 16], sizes = [8, 8], strides = [1, 1]} : vector<8x32xf32> to vector<8x8xf32>
    %245 = arith.truncf %244 : vector<8x8xf32> to vector<8x8xbf16>
    %246 = vector.extract_strided_slice %192 {offsets = [0, 16], sizes = [8, 8], strides = [1, 1]} : vector<8x32xf32> to vector<8x8xf32>
    %247 = arith.truncf %246 : vector<8x8xf32> to vector<8x8xbf16>
    %cst_97 = arith.constant dense<0.000000e+00> : vector<8x8xf32>
    %248 = tpu.matmul %245, %247, %cst_97 {dimension_numbers = #tpu.dot_dimension_numbers<[1], [1], [0], [0], [0, 0, 1, 0], [], []>} : vector<8x8xbf16>, vector<8x8xbf16>, vector<8x8xf32> -> vector<8x8xf32>
    %cst_98 = arith.constant 0.353553385 : f32
    %249 = vector.broadcast %cst_98 : f32 to vector<8x8xf32>
    %250 = arith.mulf %248, %249 : vector<8x8xf32>
    %251 = vector.broadcast %191 : vector<1x8xf32> to vector<8x8xf32>
    %252 = arith.addf %250, %251 : vector<8x8xf32>
    %cst_99 = arith.constant dense<0xFF800000> : vector<8xf32>
    %253 = vector.multi_reduction <maximumf>, %252, %cst_99 [1] : vector<8x8xf32> to vector<8xf32>
    %254 = vector.shape_cast %253 : vector<8xf32> to vector<8x1xf32>
    %255 = vector.broadcast %254 : vector<8x1xf32> to vector<8x8xf32>
    %256 = arith.subf %252, %255 : vector<8x8xf32>
    %257 = math.exp %256 : vector<8x8xf32>
    %cst_100 = arith.constant dense<0.000000e+00> : vector<8xf32>
    %258 = vector.multi_reduction <add>, %257, %cst_100 [1] : vector<8x8xf32> to vector<8xf32>
    %259 = vector.shape_cast %258 : vector<8xf32> to vector<8x1xf32>
    %260 = tpu.reciprocal %259 {approx = true} : vector<8x1xf32> -> vector<8x1xf32>
    %261 = vector.broadcast %260 : vector<8x1xf32> to vector<8x8xf32>
    %262 = arith.mulf %257, %261 : vector<8x8xf32>
    %263 = vector.extract_strided_slice %193 {offsets = [0, 16], sizes = [8, 8], strides = [1, 1]} : vector<8x32xf32> to vector<8x8xf32>
    %264 = arith.truncf %262 : vector<8x8xf32> to vector<8x8xbf16>
    %265 = arith.truncf %263 : vector<8x8xf32> to vector<8x8xbf16>
    %cst_101 = arith.constant dense<0.000000e+00> : vector<8x8xf32>
    %266 = tpu.matmul %264, %265, %cst_101 {dimension_numbers = #tpu.dot_dimension_numbers<[1], [0], [0], [1], [0, 0, 1, 1], [], []>} : vector<8x8xbf16>, vector<8x8xbf16>, vector<8x8xf32> -> vector<8x8xf32>
    %267 = vector.extract_strided_slice %180 {offsets = [0, 24], sizes = [8, 8], strides = [1, 1]} : vector<8x32xf32> to vector<8x8xf32>
    %268 = arith.truncf %267 : vector<8x8xf32> to vector<8x8xbf16>
    %269 = vector.extract_strided_slice %192 {offsets = [0, 24], sizes = [8, 8], strides = [1, 1]} : vector<8x32xf32> to vector<8x8xf32>
    %270 = arith.truncf %269 : vector<8x8xf32> to vector<8x8xbf16>
    %cst_102 = arith.constant dense<0.000000e+00> : vector<8x8xf32>
    %271 = tpu.matmul %268, %270, %cst_102 {dimension_numbers = #tpu.dot_dimension_numbers<[1], [1], [0], [0], [0, 0, 1, 0], [], []>} : vector<8x8xbf16>, vector<8x8xbf16>, vector<8x8xf32> -> vector<8x8xf32>
    %cst_103 = arith.constant 0.353553385 : f32
    %272 = vector.broadcast %cst_103 : f32 to vector<8x8xf32>
    %273 = arith.mulf %271, %272 : vector<8x8xf32>
    %274 = vector.broadcast %191 : vector<1x8xf32> to vector<8x8xf32>
    %275 = arith.addf %273, %274 : vector<8x8xf32>
    %cst_104 = arith.constant dense<0xFF800000> : vector<8xf32>
    %276 = vector.multi_reduction <maximumf>, %275, %cst_104 [1] : vector<8x8xf32> to vector<8xf32>
    %277 = vector.shape_cast %276 : vector<8xf32> to vector<8x1xf32>
    %278 = vector.broadcast %277 : vector<8x1xf32> to vector<8x8xf32>
    %279 = arith.subf %275, %278 : vector<8x8xf32>
    %280 = math.exp %279 : vector<8x8xf32>
    %cst_105 = arith.constant dense<0.000000e+00> : vector<8xf32>
    %281 = vector.multi_reduction <add>, %280, %cst_105 [1] : vector<8x8xf32> to vector<8xf32>
    %282 = vector.shape_cast %281 : vector<8xf32> to vector<8x1xf32>
    %283 = tpu.reciprocal %282 {approx = true} : vector<8x1xf32> -> vector<8x1xf32>
    %284 = vector.broadcast %283 : vector<8x1xf32> to vector<8x8xf32>
    %285 = arith.mulf %280, %284 : vector<8x8xf32>
    %286 = vector.extract_strided_slice %193 {offsets = [0, 24], sizes = [8, 8], strides = [1, 1]} : vector<8x32xf32> to vector<8x8xf32>
    %287 = arith.truncf %285 : vector<8x8xf32> to vector<8x8xbf16>
    %288 = arith.truncf %286 : vector<8x8xf32> to vector<8x8xbf16>
    %cst_106 = arith.constant dense<0.000000e+00> : vector<8x8xf32>
    %289 = tpu.matmul %287, %288, %cst_106 {dimension_numbers = #tpu.dot_dimension_numbers<[1], [0], [0], [1], [0, 0, 1, 1], [], []>} : vector<8x8xbf16>, vector<8x8xbf16>, vector<8x8xf32> -> vector<8x8xf32>
    %290 = tpu.concatenate %220, %243, %266, %289 in 1 : vector<8x8xf32>, vector<8x8xf32>, vector<8x8xf32>, vector<8x8xf32> -> vector<8x32xf32>
    %291 = arith.truncf %290 : vector<8x32xf32> to vector<8x32xbf16>
    %cst_107 = arith.constant dense<0.000000e+00> : vector<8x32xf32>
    %292 = tpu.matmul %291, %195, %cst_107 {dimension_numbers = #tpu.dot_dimension_numbers<[1], [0], [0], [1], [0, 0, 1, 1], [], []>} : vector<8x32xbf16>, vector<32x32xbf16>, vector<8x32xf32> -> vector<8x32xf32>
    %293 = vector.broadcast %197 : vector<1x32xf32> to vector<8x32xf32>
    %294 = arith.addf %292, %293 : vector<8x32xf32>
    %295 = arith.addf %145, %294 : vector<8x32xf32>
    %c0_108 = arith.constant 0 : index
    %c0_109 = arith.constant 0 : index
    %c0_110 = arith.constant 0 : index
    %296 = vector.load %arg20[%c0_108, %c0_109, %c0_110] : memref<1x1x32xf32, #tpu.memory_space<vmem>>, vector<1x1x32xf32>
    %297 = vector.shape_cast %296 : vector<1x1x32xf32> to vector<1x32xf32>
    %c0_111 = arith.constant 0 : index
    %c0_112 = arith.constant 0 : index
    %c0_113 = arith.constant 0 : index
    %298 = vector.load %arg21[%c0_111, %c0_112, %c0_113] : memref<1x1x32xf32, #tpu.memory_space<vmem>>, vector<1x1x32xf32>
    %299 = vector.shape_cast %298 : vector<1x1x32xf32> to vector<1x32xf32>
    %cst_114 = arith.constant dense<0.000000e+00> : vector<8xf32>
    %300 = vector.multi_reduction <add>, %295, %cst_114 [1] : vector<8x32xf32> to vector<8xf32>
    %301 = vector.shape_cast %300 : vector<8xf32> to vector<8x1xf32>
    %cst_115 = arith.constant 3.200000e+01 : f32
    %302 = vector.broadcast %cst_115 : f32 to vector<8x1xf32>
    %303 = arith.divf %301, %302 : vector<8x1xf32>
    %304 = vector.broadcast %303 : vector<8x1xf32> to vector<8x32xf32>
    %305 = arith.subf %295, %304 : vector<8x32xf32>
    %306 = arith.mulf %305, %305 : vector<8x32xf32>
    %cst_116 = arith.constant dense<0.000000e+00> : vector<8xf32>
    %307 = vector.multi_reduction <add>, %306, %cst_116 [1] : vector<8x32xf32> to vector<8xf32>
    %308 = vector.shape_cast %307 : vector<8xf32> to vector<8x1xf32>
    %cst_117 = arith.constant 3.100000e+01 : f32
    %309 = vector.broadcast %cst_117 : f32 to vector<8x1xf32>
    %310 = arith.divf %308, %309 : vector<8x1xf32>
    %311 = math.sqrt %310 : vector<8x1xf32>
    %cst_118 = arith.constant 9.99999997E-7 : f32
    %312 = vector.broadcast %cst_118 : f32 to vector<8x1xf32>
    %313 = arith.addf %311, %312 : vector<8x1xf32>
    %314 = tpu.reciprocal %313 : vector<8x1xf32> -> vector<8x1xf32>
    %315 = vector.broadcast %303 : vector<8x1xf32> to vector<8x32xf32>
    %316 = arith.subf %295, %315 : vector<8x32xf32>
    %317 = vector.broadcast %297 : vector<1x32xf32> to vector<8x32xf32>
    %318 = arith.mulf %317, %316 : vector<8x32xf32>
    %319 = vector.broadcast %314 : vector<8x1xf32> to vector<8x32xf32>
    %320 = arith.mulf %318, %319 : vector<8x32xf32>
    %321 = vector.broadcast %299 : vector<1x32xf32> to vector<8x32xf32>
    %322 = arith.addf %320, %321 : vector<8x32xf32>
    %c0_119 = arith.constant 0 : index
    %c0_120 = arith.constant 0 : index
    %c0_121 = arith.constant 0 : index
    %323 = vector.load %arg22[%c0_119, %c0_120, %c0_121] : memref<1x32x64xbf16, #tpu.memory_space<vmem>>, vector<1x32x64xbf16>
    %324 = vector.shape_cast %323 : vector<1x32x64xbf16> to vector<32x64xbf16>
    %325 = arith.truncf %322 : vector<8x32xf32> to vector<8x32xbf16>
    %cst_122 = arith.constant dense<0.000000e+00> : vector<8x64xf32>
    %326 = tpu.matmul %325, %324, %cst_122 {dimension_numbers = #tpu.dot_dimension_numbers<[1], [0], [0], [1], [0, 0, 1, 1], [], []>} : vector<8x32xbf16>, vector<32x64xbf16>, vector<8x64xf32> -> vector<8x64xf32>
    %c0_123 = arith.constant 0 : index
    %c0_124 = arith.constant 0 : index
    %c0_125 = arith.constant 0 : index
    %327 = vector.load %arg23[%c0_123, %c0_124, %c0_125] : memref<1x1x64xf32, #tpu.memory_space<vmem>>, vector<1x1x64xf32>
    %328 = vector.shape_cast %327 : vector<1x1x64xf32> to vector<1x64xf32>
    %329 = vector.broadcast %328 : vector<1x64xf32> to vector<8x64xf32>
    %330 = arith.addf %326, %329 : vector<8x64xf32>
    %cst_126 = arith.constant 0.000000e+00 : f32
    %331 = vector.broadcast %cst_126 : f32 to vector<8x64xf32>
    %332 = arith.maximumf %330, %331 : vector<8x64xf32>
    %c0_127 = arith.constant 0 : index
    %c0_128 = arith.constant 0 : index
    %c0_129 = arith.constant 0 : index
    %333 = vector.load %arg24[%c0_127, %c0_128, %c0_129] : memref<1x64x32xbf16, #tpu.memory_space<vmem>>, vector<1x64x32xbf16>
    %334 = vector.shape_cast %333 : vector<1x64x32xbf16> to vector<64x32xbf16>
    %335 = arith.truncf %332 : vector<8x64xf32> to vector<8x64xbf16>
    %cst_130 = arith.constant dense<0.000000e+00> : vector<8x32xf32>
    %336 = tpu.matmul %335, %334, %cst_130 {dimension_numbers = #tpu.dot_dimension_numbers<[1], [0], [0], [1], [0, 0, 1, 1], [], []>} : vector<8x64xbf16>, vector<64x32xbf16>, vector<8x32xf32> -> vector<8x32xf32>
    %337 = arith.addf %295, %336 : vector<8x32xf32>
    %c0_131 = arith.constant 0 : index
    %c0_132 = arith.constant 0 : index
    %c0_133 = arith.constant 0 : index
    %338 = vector.load %arg25[%c0_131, %c0_132, %c0_133] : memref<1x1x32xf32, #tpu.memory_space<vmem>>, vector<1x1x32xf32>
    %339 = vector.shape_cast %338 : vector<1x1x32xf32> to vector<1x32xf32>
    %340 = vector.broadcast %339 : vector<1x32xf32> to vector<8x32xf32>
    %341 = arith.addf %337, %340 : vector<8x32xf32>
    %c0_134 = arith.constant 0 : index
    %c0_135 = arith.constant 0 : index
    %c0_136 = arith.constant 0 : index
    %342 = vector.load %arg29[%c0_134, %c0_135, %c0_136] : memref<1x8x32xf32, #tpu.memory_space<vmem>>, vector<1x8x32xf32>
    %343 = vector.shape_cast %342 : vector<1x8x32xf32> to vector<8x32xf32>
    %344 = vector.shape_cast %341 : vector<8x32xf32> to vector<1x8x32xf32>
    tpu.vector_store %arg29[%c0_134, %c0_135, %c0_136], %344 {strides = array<i32>} : memref<1x8x32xf32, #tpu.memory_space<vmem>>, vector<1x8x32xf32>,
    %c1_i32 = arith.constant 1 : i32
    %345 = arith.cmpi eq, %arg1, %c1_i32 : i32
    %346 = arith.extui %345 : i1 to i32
    %c0_i32_137 = arith.constant 0 : i32
    %347 = arith.cmpi ne, %346, %c0_i32_137 : i32
    scf.if %347 {
      %c0_138 = arith.constant 0 : index
      %c0_139 = arith.constant 0 : index
      %348 = vector.load %arg26[%c0_138, %c0_139] : memref<1x32xf32, #tpu.memory_space<vmem>>, vector<1x32xf32>
      %c0_140 = arith.constant 0 : index
      %c0_141 = arith.constant 0 : index
      %349 = vector.load %arg27[%c0_140, %c0_141] : memref<1x32xf32, #tpu.memory_space<vmem>>, vector<1x32xf32>
      %cst_142 = arith.constant dense<0.000000e+00> : vector<8xf32>
      %350 = vector.multi_reduction <add>, %341, %cst_142 [1] : vector<8x32xf32> to vector<8xf32>
      %351 = vector.shape_cast %350 : vector<8xf32> to vector<8x1xf32>
      %cst_143 = arith.constant 3.200000e+01 : f32
      %352 = vector.broadcast %cst_143 : f32 to vector<8x1xf32>
      %353 = arith.divf %351, %352 : vector<8x1xf32>
      %354 = vector.broadcast %353 : vector<8x1xf32> to vector<8x32xf32>
      %355 = arith.subf %341, %354 : vector<8x32xf32>
      %356 = arith.mulf %355, %355 : vector<8x32xf32>
      %cst_144 = arith.constant dense<0.000000e+00> : vector<8xf32>
      %357 = vector.multi_reduction <add>, %356, %cst_144 [1] : vector<8x32xf32> to vector<8xf32>
      %358 = vector.shape_cast %357 : vector<8xf32> to vector<8x1xf32>
      %cst_145 = arith.constant 3.100000e+01 : f32
      %359 = vector.broadcast %cst_145 : f32 to vector<8x1xf32>
      %360 = arith.divf %358, %359 : vector<8x1xf32>
      %361 = math.sqrt %360 : vector<8x1xf32>
      %cst_146 = arith.constant 9.99999997E-7 : f32
      %362 = vector.broadcast %cst_146 : f32 to vector<8x1xf32>
      %363 = arith.addf %361, %362 : vector<8x1xf32>
      %364 = tpu.reciprocal %363 : vector<8x1xf32> -> vector<8x1xf32>
      %365 = vector.broadcast %353 : vector<8x1xf32> to vector<8x32xf32>
      %366 = arith.subf %341, %365 : vector<8x32xf32>
      %367 = vector.broadcast %348 : vector<1x32xf32> to vector<8x32xf32>
      %368 = arith.mulf %367, %366 : vector<8x32xf32>
      %369 = vector.broadcast %364 : vector<8x1xf32> to vector<8x32xf32>
      %370 = arith.mulf %368, %369 : vector<8x32xf32>
      %371 = vector.broadcast %349 : vector<1x32xf32> to vector<8x32xf32>
      %372 = arith.addf %370, %371 : vector<8x32xf32>
      %c0_147 = arith.constant 0 : index
      %c0_148 = arith.constant 0 : index
      %c0_149 = arith.constant 0 : index
      %373 = vector.load %arg28[%c0_147, %c0_148, %c0_149] : memref<1x8x32xf32, #tpu.memory_space<vmem>>, vector<1x8x32xf32>
      %374 = vector.shape_cast %373 : vector<1x8x32xf32> to vector<8x32xf32>
      %375 = vector.shape_cast %372 : vector<8x32xf32> to vector<1x8x32xf32>
      tpu.vector_store %arg28[%c0_147, %c0_148, %c0_149], %375 {strides = array<i32>} : memref<1x8x32xf32, #tpu.memory_space<vmem>>, vector<1x8x32xf32>,
    } else {
    }
    return
  }
  func.func @transform_0(%arg0: i32, %arg1: i32) -> (i32, i32, i32) {
    %c0_i32 = arith.constant 0 : i32
    %c0_i32_0 = arith.constant 0 : i32
    %c0_i32_1 = arith.constant 0 : i32
    return %arg0, %c0_i32, %c0_i32_0 : i32, i32, i32
  }
  func.func @transform_1(%arg0: i32, %arg1: i32) -> (i32, i32, i32) {
    %c0_i32 = arith.constant 0 : i32
    %c0_i32_0 = arith.constant 0 : i32
    %c0_i32_1 = arith.constant 0 : i32
    return %arg0, %c0_i32, %c0_i32_0 : i32, i32, i32
  }
  func.func @transform_2(%arg0: i32, %arg1: i32) -> (i32, i32, i32) {
    %c0_i32 = arith.constant 0 : i32
    %c0_i32_0 = arith.constant 0 : i32
    %c0_i32_1 = arith.constant 0 : i32
    return %arg0, %c0_i32, %c0_i32_0 : i32, i32, i32
  }
  func.func @transform_3(%arg0: i32, %arg1: i32) -> (i32, i32, i32) {
    %c0_i32 = arith.constant 0 : i32
    %c0_i32_0 = arith.constant 0 : i32
    %c0_i32_1 = arith.constant 0 : i32
    return %arg0, %c0_i32, %c0_i32_0 : i32, i32, i32
  }
  func.func @transform_4(%arg0: i32, %arg1: i32) -> (i32, i32, i32) {
    %c0_i32 = arith.constant 0 : i32
    %c0_i32_0 = arith.constant 0 : i32
    %c0_i32_1 = arith.constant 0 : i32
    return %arg1, %c0_i32, %c0_i32_0 : i32, i32, i32
  }
  func.func @transform_5(%arg0: i32, %arg1: i32) -> (i32, i32, i32) {
    %c0_i32 = arith.constant 0 : i32
    %c0_i32_0 = arith.constant 0 : i32
    %c0_i32_1 = arith.constant 0 : i32
    return %arg1, %c0_i32, %c0_i32_0 : i32, i32, i32
  }
  func.func @transform_6(%arg0: i32, %arg1: i32) -> (i32, i32, i32) {
    %c0_i32 = arith.constant 0 : i32
    %c0_i32_0 = arith.constant 0 : i32
    %c0_i32_1 = arith.constant 0 : i32
    return %arg1, %c0_i32, %c0_i32_0 : i32, i32, i32
  }
  func.func @transform_7(%arg0: i32, %arg1: i32) -> (i32, i32, i32) {
    %c0_i32 = arith.constant 0 : i32
    %c0_i32_0 = arith.constant 0 : i32
    %c0_i32_1 = arith.constant 0 : i32
    return %arg1, %c0_i32, %c0_i32_0 : i32, i32, i32
  }
  func.func @transform_8(%arg0: i32, %arg1: i32) -> (i32, i32, i32) {
    %c0_i32 = arith.constant 0 : i32
    %c0_i32_0 = arith.constant 0 : i32
    %c0_i32_1 = arith.constant 0 : i32
    return %arg1, %c0_i32, %c0_i32_0 : i32, i32, i32
  }
  func.func @transform_9(%arg0: i32, %arg1: i32) -> (i32, i32, i32) {
    %c0_i32 = arith.constant 0 : i32
    %c0_i32_0 = arith.constant 0 : i32
    %c0_i32_1 = arith.constant 0 : i32
    return %arg1, %c0_i32, %c0_i32_0 : i32, i32, i32
  }
  func.func @transform_10(%arg0: i32, %arg1: i32) -> (i32, i32, i32) {
    %c0_i32 = arith.constant 0 : i32
    %c0_i32_0 = arith.constant 0 : i32
    %c0_i32_1 = arith.constant 0 : i32
    return %arg1, %c0_i32, %c0_i32_0 : i32, i32, i32
  }
  func.func @transform_11(%arg0: i32, %arg1: i32) -> (i32, i32, i32) {
    %c0_i32 = arith.constant 0 : i32
    %c0_i32_0 = arith.constant 0 : i32
    %c0_i32_1 = arith.constant 0 : i32
    return %arg1, %c0_i32, %c0_i32_0 : i32, i32, i32
  }
  func.func @transform_12(%arg0: i32, %arg1: i32) -> (i32, i32, i32) {
    %c0_i32 = arith.constant 0 : i32
    %c0_i32_0 = arith.constant 0 : i32
    %c0_i32_1 = arith.constant 0 : i32
    return %arg1, %c0_i32, %c0_i32_0 : i32, i32, i32
  }
  func.func @transform_13(%arg0: i32, %arg1: i32) -> (i32, i32, i32) {
    %c0_i32 = arith.constant 0 : i32
    %c0_i32_0 = arith.constant 0 : i32
    %c0_i32_1 = arith.constant 0 : i32
    return %arg1, %c0_i32, %c0_i32_0 : i32, i32, i32
  }
  func.func @transform_14(%arg0: i32, %arg1: i32) -> (i32, i32, i32) {
    %c0_i32 = arith.constant 0 : i32
    %c0_i32_0 = arith.constant 0 : i32
    %c0_i32_1 = arith.constant 0 : i32
    return %arg1, %c0_i32, %c0_i32_0 : i32, i32, i32
  }
  func.func @transform_15(%arg0: i32, %arg1: i32) -> (i32, i32, i32) {
    %c0_i32 = arith.constant 0 : i32
    %c0_i32_0 = arith.constant 0 : i32
    %c0_i32_1 = arith.constant 0 : i32
    return %arg1, %c0_i32, %c0_i32_0 : i32, i32, i32
  }
  func.func @transform_16(%arg0: i32, %arg1: i32) -> (i32, i32, i32) {
    %c0_i32 = arith.constant 0 : i32
    %c0_i32_0 = arith.constant 0 : i32
    %c0_i32_1 = arith.constant 0 : i32
    return %arg1, %c0_i32, %c0_i32_0 : i32, i32, i32
  }
  func.func @transform_17(%arg0: i32, %arg1: i32) -> (i32, i32, i32) {
    %c0_i32 = arith.constant 0 : i32
    %c0_i32_0 = arith.constant 0 : i32
    %c0_i32_1 = arith.constant 0 : i32
    return %arg1, %c0_i32, %c0_i32_0 : i32, i32, i32
  }
  func.func @transform_18(%arg0: i32, %arg1: i32) -> (i32, i32, i32) {
    %c0_i32 = arith.constant 0 : i32
    %c0_i32_0 = arith.constant 0 : i32
    %c0_i32_1 = arith.constant 0 : i32
    return %arg1, %c0_i32, %c0_i32_0 : i32, i32, i32
  }
  func.func @transform_19(%arg0: i32, %arg1: i32) -> (i32, i32, i32) {
    %c0_i32 = arith.constant 0 : i32
    %c0_i32_0 = arith.constant 0 : i32
    %c0_i32_1 = arith.constant 0 : i32
    return %arg1, %c0_i32, %c0_i32_0 : i32, i32, i32
  }
  func.func @transform_20(%arg0: i32, %arg1: i32) -> (i32, i32, i32) {
    %c0_i32 = arith.constant 0 : i32
    %c0_i32_0 = arith.constant 0 : i32
    %c0_i32_1 = arith.constant 0 : i32
    return %arg1, %c0_i32, %c0_i32_0 : i32, i32, i32
  }
  func.func @transform_21(%arg0: i32, %arg1: i32) -> (i32, i32, i32) {
    %c0_i32 = arith.constant 0 : i32
    %c0_i32_0 = arith.constant 0 : i32
    %c0_i32_1 = arith.constant 0 : i32
    return %arg1, %c0_i32, %c0_i32_0 : i32, i32, i32
  }
  func.func @transform_22(%arg0: i32, %arg1: i32) -> (i32, i32, i32) {
    %c0_i32 = arith.constant 0 : i32
    %c0_i32_0 = arith.constant 0 : i32
    %c0_i32_1 = arith.constant 0 : i32
    return %arg1, %c0_i32, %c0_i32_0 : i32, i32, i32
  }
  func.func @transform_23(%arg0: i32, %arg1: i32) -> (i32, i32, i32) {
    %c0_i32 = arith.constant 0 : i32
    %c0_i32_0 = arith.constant 0 : i32
    %c0_i32_1 = arith.constant 0 : i32
    return %arg1, %c0_i32, %c0_i32_0 : i32, i32, i32
  }
  func.func @transform_24(%arg0: i32, %arg1: i32) -> (i32, i32) {
    %c0_i32 = arith.constant 0 : i32
    %c0_i32_0 = arith.constant 0 : i32
    %c0_i32_1 = arith.constant 0 : i32
    return %c0_i32, %c0_i32_0 : i32, i32
  }
  func.func @transform_25(%arg0: i32, %arg1: i32) -> (i32, i32) {
    %c0_i32 = arith.constant 0 : i32
    %c0_i32_0 = arith.constant 0 : i32
    %c0_i32_1 = arith.constant 0 : i32
    return %c0_i32, %c0_i32_0 : i32, i32
  }
  func.func @transform_26(%arg0: i32, %arg1: i32) -> (i32, i32, i32) {
    %c0_i32 = arith.constant 0 : i32
    %c0_i32_0 = arith.constant 0 : i32
    %c0_i32_1 = arith.constant 0 : i32
    return %arg0, %c0_i32, %c0_i32_0 : i32, i32, i32
  }
}

</mosaic_0001>

<llo_original>
// kernel: decoder_forward.1
$region0: #{decoder_forward.1}
  #allocation0 [shape = 'u32[]', space=smem, size = 0x4, offset = 0x4, fixed_abs, tag = 'smem constant byte address 0x4 - core index']
  #allocation1 [shape = 'u32[144,128]{1,0:T(1,128)}', space=vmem, size = 0x12000, scoped, tag = 'internal scratch']
  #allocation2 [shape = 'f32[1,8,32]{2,1,0:T(8,128)}', space=vmem, size = 0x1000, scoped, tag = 'scratch operand']
  %s0 = inlined_call_operand.vmem [shape: f32[2,8,32], index: 0, kind: input, shape index: {}]
  %s1 = inlined_call_operand.vmem [shape: f32[2,8,32], index: 1, kind: input, shape index: {}]
  %s2 = inlined_call_operand.vmem [shape: bf16[2,8,8], index: 2, kind: input, shape index: {}]
  %s3 = inlined_call_operand.vmem [shape: bf16[2,1,8], index: 3, kind: input, shape index: {}]
  %s4 = inlined_call_operand.hbm [shape: f32[2,1,32], index: 4, kind: input, shape index: {}]
  %s5 = inlined_call_operand.hbm [shape: f32[2,1,32], index: 5, kind: input, shape index: {}]
  %s6 = inlined_call_operand.vmem [shape: bf16[2,32,96], index: 6, kind: input, shape index: {}]
  %s7 = inlined_call_operand.vmem [shape: f32[2,1,96], index: 7, kind: input, shape index: {}]
  %s8 = inlined_call_operand.vmem [shape: bf16[2,32,32], index: 8, kind: input, shape index: {}]
  %s9 = inlined_call_operand.vmem [shape: f32[2,1,32], index: 9, kind: input, shape index: {}]
  %s10 = inlined_call_operand.hbm [shape: f32[2,1,32], index: 10, kind: input, shape index: {}]
  %s11 = inlined_call_operand.hbm [shape: f32[2,1,32], index: 11, kind: input, shape index: {}]
  %s12 = inlined_call_operand.vmem [shape: bf16[2,32,32], index: 12, kind: input, shape index: {}]
  %s13 = inlined_call_operand.hbm [shape: f32[2,1,32], index: 13, kind: input, shape index: {}]
  %s14 = inlined_call_operand.hbm [shape: bf16[2,32,64], index: 14, kind: input, shape index: {}]
  %s15 = inlined_call_operand.hbm [shape: f32[2,1,64], index: 15, kind: input, shape index: {}]
  %s16 = inlined_call_operand.hbm [shape: bf16[2,32,32], index: 16, kind: input, shape index: {}]
  %s17 = inlined_call_operand.hbm [shape: f32[2,1,32], index: 17, kind: input, shape index: {}]
  %s18 = inlined_call_operand.hbm [shape: f32[2,1,32], index: 18, kind: input, shape index: {}]
  %s19 = inlined_call_operand.hbm [shape: f32[2,1,32], index: 19, kind: input, shape index: {}]
  %s20 = inlined_call_operand.hbm [shape: bf16[2,32,64], index: 20, kind: input, shape index: {}]
  %s21 = inlined_call_operand.hbm [shape: f32[2,1,64], index: 21, kind: input, shape index: {}]
  %s22 = inlined_call_operand.vmem [shape: bf16[2,64,32], index: 22, kind: input, shape index: {}]
  %s23 = inlined_call_operand.hbm [shape: f32[2,1,32], index: 23, kind: input, shape index: {}]
  %s24 = inlined_call_operand.vmem [shape: f32[1,32], index: 24, kind: input, shape index: {}]
  %s25 = inlined_call_operand.vmem [shape: f32[1,32], index: 25, kind: input, shape index: {}]
  %s26 = inlined_call_operand.hbm [shape: f32[2,8,32], index: 26, kind: output, shape index: {}]
  %s27 = sld [smem:[#allocation0]]
  $region201: #{decoder_forward.1} parent=0
    _
  %s29 = ssub.s32 1, %s27
  %s30 = scalar_select 0, %s29, %s27
  $region1: #{decoder_forward.1} parent=0
    #allocation3 [shape = 'u8[1024]{0}', space=vmem, size = 0x400, scoped, tag = 'input window, operand 4']
    #allocation4 [shape = 's32[2]{0}', space=sflag, size = 0x8, scoped, tag = 'scoped memory for decoder_forward.1']
    #allocation5 [shape = 's32[2]{0}', space=sflag, size = 0x8, scoped, tag = 'scoped memory for decoder_forward.1']
    #allocation6 [shape = 'u8[1024]{0}', space=vmem, size = 0x400, scoped, tag = 'input window, operand 5']
    #allocation7 [shape = 's32[2]{0}', space=sflag, size = 0x8, scoped, tag = 'scoped memory for decoder_forward.1']
    #allocation8 [shape = 'u8[1024]{0}', space=vmem, size = 0x400, scoped, tag = 'input window, operand 10']
    #allocation9 [shape = 'u8[1024]{0}', space=vmem, size = 0x400, scoped, tag = 'input window, operand 11']
    #allocation10 [shape = 's32[2]{0}', space=sflag, size = 0x8, scoped, tag = 'scoped memory for decoder_forward.1']
    #allocation11 [shape = 'u8[1024]{0}', space=vmem, size = 0x400, scoped, tag = 'input window, operand 13']
    #allocation12 [shape = 'u8[16384]{0}', space=vmem, size = 0x4000, scoped, tag = 'input window, operand 14']
    #allocation13 [shape = 's32[2]{0}', space=sflag, size = 0x8, scoped, tag = 'scoped memory for decoder_forward.1']
    #allocation14 [shape = 'u8[1024]{0}', space=vmem, size = 0x400, scoped, tag = 'input window, operand 15']
    #allocation15 [shape = 'u8[16384]{0}', space=vmem, size = 0x4000, scoped, tag = 'input window, operand 16']
    #allocation16 [shape = 's32[2]{0}', space=sflag, size = 0x8, scoped, tag = 'scoped memory for decoder_forward.1']
    #allocation17 [shape = 'u8[1024]{0}', space=vmem, size = 0x400, scoped, tag = 'input window, operand 17']
    #allocation18 [shape = 'u8[1024]{0}', space=vmem, size = 0x400, scoped, tag = 'input window, operand 18']
    #allocation19 [shape = 's32[2]{0}', space=sflag, size = 0x8, scoped, tag = 'scoped memory for decoder_forward.1']
    #allocation20 [shape = 'u8[1024]{0}', space=vmem, size = 0x400, scoped, tag = 'input window, operand 19']
    #allocation21 [shape = 'u8[16384]{0}', space=vmem, size = 0x4000, scoped, tag = 'input window, operand 20']
    #allocation22 [shape = 's32[2]{0}', space=sflag, size = 0x8, scoped, tag = 'scoped memory for decoder_forward.1']
    #allocation23 [shape = 'u8[1024]{0}', space=vmem, size = 0x400, scoped, tag = 'input window, operand 21']
    #allocation24 [shape = 'u8[1024]{0}', space=vmem, size = 0x400, scoped, tag = 'input window, operand 23']
    #allocation25 [shape = 's32[2]{0}', space=sflag, size = 0x8, scoped, tag = 'scoped memory for decoder_forward.1']
    #allocation26 [shape = 'u8[8192]{0}', space=vmem, size = 0x2000, scoped, tag = 'output window, operand 0']
    %31 = vsyncpa [#allocation4], 0
    %s32 = scalar_lea.sflag [#allocation4], 1
    %33 = vsyncpa %s32, 0
    %34 = vsyncpa [#allocation7], 0
    %s35 = scalar_lea.sflag [#allocation7], 1
    %36 = vsyncpa %s35, 0
    %37 = vsyncpa [#allocation10], 0
    %s38 = scalar_lea.sflag [#allocation10], 1
    %39 = vsyncpa %s38, 0
    %40 = vsyncpa [#allocation13], 0
    %s41 = scalar_lea.sflag [#allocation13], 1
    %42 = vsyncpa %s41, 0
    %43 = vsyncpa [#allocation16], 0
    %s44 = scalar_lea.sflag [#allocation16], 1
    %45 = vsyncpa %s44, 0
    %46 = vsyncpa [#allocation19], 0
    %s47 = scalar_lea.sflag [#allocation19], 1
    %48 = vsyncpa %s47, 0
    %49 = vsyncpa [#allocation22], 0
    %s50 = scalar_lea.sflag [#allocation22], 1
    %51 = vsyncpa %s50, 0
    %52 = vsyncpa [#allocation25], 0
    %s53 = scalar_lea.sflag [#allocation25], 1
    %54 = vsyncpa %s53, 0
    %55 = vsyncpa [#allocation5], 0
    %s56 = scalar_lea.sflag [#allocation5], 1
    %57 = vsyncpa %s56, 0
    loop: start=0, step=1, limit=6
    $region2: #{decoder_forward.1} parent=1 // loop_pre_header
      _
    $region3: #{decoder_forward.1} parent=1 // loop_header
      %s59 = sphi 0, %s63
      %p60 = scmp.ge.s32.totalorder %s59, 6
      %s66 = sphi 0, %s78
      %s67 = sphi 0, %s74
      %s68 = sphi 0, %s66
      %s69 = sphi 0, %s67
      %s70 = sphi 0, %s68
      %s71 = sphi 0, %s69
      %s81 = sphi 0, %s83
      %s84 = sphi 0, %s81
      %s85 = sphi 0, %s84
      %s101 = sphi 0, %s85
      %s107 = sphi 0, %s109
      %s110 = sphi 0, %s107
      %s111 = sphi 0, %s110
      %s127 = sphi 0, %s111
      %s133 = sphi 0, %s135
      %s136 = sphi 0, %s133
      %s137 = sphi 0, %s136
      %s153 = sphi 0, %s137
      %s159 = sphi 0, %s161
      %s162 = sphi 0, %s159
      %s163 = sphi 0, %s162
      %s179 = sphi 0, %s163
      %s185 = sphi 0, %s187
      %s188 = sphi 0, %s185
      %s189 = sphi 0, %s188
      %s205 = sphi 0, %s189
      %s211 = sphi 0, %s213
      %s214 = sphi 0, %s211
      %s215 = sphi 0, %s214
      %s231 = sphi 0, %s215
      %s237 = sphi 0, %s239
      %s240 = sphi 0, %s237
      %s241 = sphi 0, %s240
      %s257 = sphi 0, %s241
      %s263 = sphi 0, %s265
      %s266 = sphi 0, %s263
      %s267 = sphi 0, %s266
      %s283 = sphi 0, %s267
      %s289 = sphi 0, %s291
      %s292 = sphi 0, %s289
      %s293 = sphi 0, %s292
      %s309 = sphi 0, %s293
      %s315 = sphi 0, %s317
      %s318 = sphi 0, %s315
      %s319 = sphi 0, %s318
      %s335 = sphi 0, %s319
      %s341 = sphi 0, %s343
      %s344 = sphi 0, %s341
      %s345 = sphi 0, %s344
      %s361 = sphi 0, %s345
      %s367 = sphi 0, %s369
      %s370 = sphi 0, %s367
      %s371 = sphi 0, %s370
      %s387 = sphi 0, %s371
      %s393 = sphi 0, %s395
      %s396 = sphi 0, %s393
      %s397 = sphi 0, %s396
      %s413 = sphi 0, %s397
      %s419 = sphi 0, %s421
      %s422 = sphi 0, %s419
      %s423 = sphi 0, %s422
      %s439 = sphi 0, %s423
      %s445 = sphi 0, %s447
      %s448 = sphi 0, %s445
      %s449 = sphi 0, %s448
      %s465 = sphi 0, %s449
      %s471 = sphi 0, %s473
      %s474 = sphi 0, %s471
      %s475 = sphi 0, %s474
      %s491 = sphi 0, %s475
      %s497 = sphi 0, %s499
      %s500 = sphi 0, %s497
      %s501 = sphi 0, %s500
      %s517 = sphi 0, %s501
      %s523 = sphi 0, %s525
      %s526 = sphi 0, %s523
      %s527 = sphi 0, %s526
      %s543 = sphi 0, %s527
      %s549 = sphi 0, %s551
      %s552 = sphi 0, %s549
      %s553 = sphi 0, %s552
      %s569 = sphi 0, %s553
      %s575 = sphi 0, %s577
      %s578 = sphi 0, %s575
      %s579 = sphi 0, %s578
      %s595 = sphi 0, %s579
      %s601 = sphi 0, %s603
      %s604 = sphi 0, %s601
      %s605 = sphi 0, %s604
      %s621 = sphi 0, %s605
      %s627 = sphi 0, %s629
      %s630 = sphi 0, %s627
      %s631 = sphi 0, %s630
      %s647 = sphi 0, %s631
      %s653 = sphi 0, %s655
      %s656 = sphi 0, %s653
      %s657 = sphi 0, %s656
      %s673 = sphi 0, %s657
      %s679 = sphi 0, %s681
      %s682 = sphi 0, %s679
      %s683 = sphi 0, %s682
      %s699 = sphi 0, %s683
      %s703 = sphi 0, %s703
      %s705 = sphi 0, %s703
      %s706 = sphi 0, %s705
      %s720 = sphi 0, %s706
      %s724 = sphi 0, %s724
      %s726 = sphi 0, %s724
      %s727 = sphi 0, %s726
      %s741 = sphi 0, %s727
      %s747 = sphi 0, %s749
      %s750 = sphi 0, %s747
      %s751 = sphi 0, %s750
      %s767 = sphi 0, %s751
    $region4: #{decoder_forward.1} parent=1 // loop_header_branch
      %62 = sbr.rel (%p60) target = $region8
    $region5: #{decoder_forward.1} parent=1 // loop_body
      %s64 = ssub.s32 %s59, 1
      %s65 = ssub.s32 %s59, 2
      %s72 = sadd.s32 1, %s67
      %p73 = scmp.ge.s32.totalorder %s72, 2
      %s74 = scalar_select %p73, 0, %s72
      %s75 = sadd.s32 1, %s66
      %s76 = scalar_select %p73, %s75, %s66
      %p77 = scmp.ge.s32.totalorder %s76, 2
      %s78 = scalar_select %p77, 0, %s76
      %s79 = ssub.s32 %s66, %s78
      %p80 = scmp.eq.s32.totalorder %s79, 0
      %s82 = sadd.s32 %s81, 1
      %s83 = scalar_select %p80, %s81, %s82
      %p86 = pneg %p80
      %p87 = scmp.eq.s32.totalorder %s59, 3
      %p88 = por %p86, %p87
      %p89 = scmp.ne.s32.totalorder %s81, %s84
      %p90 = scmp.eq.s32.totalorder %s59, 0
      %p91 = por %p89, %p90
      %p92 = scmp.ne.s32.totalorder %s81, %s84
      %p93 = scmp.eq.s32.totalorder %s64, 3
      %p94 = por %p92, %p93
      %p95 = scmp.ne.s32.totalorder %s84, %s85
      %p96 = scmp.eq.s32.totalorder %s64, 0
      %p97 = por %p95, %p96
      %p98 = scmp.ne.s32.totalorder %s84, %s85
      %p99 = scmp.eq.s32.totalorder %s65, 3
      %p100 = por %p98, %p99
      %p102 = scmp.ne.s32.totalorder %s85, %s101
      %p103 = scmp.eq.s32.totalorder %s65, 0
      %p104 = por %p102, %p103
      %s105 = ssub.s32 %s66, %s78
      %p106 = scmp.eq.s32.totalorder %s105, 0
      %s108 = sadd.s32 %s107, 1
      %s109 = scalar_select %p106, %s107, %s108
      %p112 = pneg %p106
      %p113 = scmp.eq.s32.totalorder %s59, 3
      %p114 = por %p112, %p113
      %p115 = scmp.ne.s32.totalorder %s107, %s110
      %p116 = scmp.eq.s32.totalorder %s59, 0
      %p117 = por %p115, %p116
      %p118 = scmp.ne.s32.totalorder %s107, %s110
      %p119 = scmp.eq.s32.totalorder %s64, 3
      %p120 = por %p118, %p119
      %p121 = scmp.ne.s32.totalorder %s110, %s111
      %p122 = scmp.eq.s32.totalorder %s64, 0
      %p123 = por %p121, %p122
      %p124 = scmp.ne.s32.totalorder %s110, %s111
      %p125 = scmp.eq.s32.totalorder %s65, 3
      %p126 = por %p124, %p125
      %p128 = scmp.ne.s32.totalorder %s111, %s127
      %p129 = scmp.eq.s32.totalorder %s65, 0
      %p130 = por %p128, %p129
      %s131 = ssub.s32 %s66, %s78
      %p132 = scmp.eq.s32.totalorder %s131, 0
      %s134 = sadd.s32 %s133, 1
      %s135 = scalar_select %p132, %s133, %s134
      %p138 = pneg %p132
      %p139 = scmp.eq.s32.totalorder %s59, 3
      %p140 = por %p138, %p139
      %p141 = scmp.ne.s32.totalorder %s133, %s136
      %p142 = scmp.eq.s32.totalorder %s59, 0
      %p143 = por %p141, %p142
      %p144 = scmp.ne.s32.totalorder %s133, %s136
      %p145 = scmp.eq.s32.totalorder %s64, 3
      %p146 = por %p144, %p145
      %p147 = scmp.ne.s32.totalorder %s136, %s137
      %p148 = scmp.eq.s32.totalorder %s64, 0
      %p149 = por %p147, %p148
      %p150 = scmp.ne.s32.totalorder %s136, %s137
      %p151 = scmp.eq.s32.totalorder %s65, 3
      %p152 = por %p150, %p151
      %p154 = scmp.ne.s32.totalorder %s137, %s153
      %p155 = scmp.eq.s32.totalorder %s65, 0
      %p156 = por %p154, %p155
      %s157 = ssub.s32 %s66, %s78
      %p158 = scmp.eq.s32.totalorder %s157, 0
      %s160 = sadd.s32 %s159, 1
      %s161 = scalar_select %p158, %s159, %s160
      %p164 = pneg %p158
      %p165 = scmp.eq.s32.totalorder %s59, 3
      %p166 = por %p164, %p165
      %p167 = scmp.ne.s32.totalorder %s159, %s162
      %p168 = scmp.eq.s32.totalorder %s59, 0
      %p169 = por %p167, %p168
      %p170 = scmp.ne.s32.totalorder %s159, %s162
      %p171 = scmp.eq.s32.totalorder %s64, 3
      %p172 = por %p170, %p171
      %p173 = scmp.ne.s32.totalorder %s162, %s163
      %p174 = scmp.eq.s32.totalorder %s64, 0
      %p175 = por %p173, %p174
      %p176 = scmp.ne.s32.totalorder %s162, %s163
      %p177 = scmp.eq.s32.totalorder %s65, 3
      %p178 = por %p176, %p177
      %p180 = scmp.ne.s32.totalorder %s163, %s179
      %p181 = scmp.eq.s32.totalorder %s65, 0
      %p182 = por %p180, %p181
      %s183 = ssub.s32 %s67, %s74
      %p184 = scmp.eq.s32.totalorder %s183, 0
      %s186 = sadd.s32 %s185, 1
      %s187 = scalar_select %p184, %s185, %s186
      %p190 = pneg %p184
      %p191 = scmp.eq.s32.totalorder %s59, 3
      %p192 = por %p190, %p191
      %p193 = scmp.ne.s32.totalorder %s185, %s188
      %p194 = scmp.eq.s32.totalorder %s59, 0
      %p195 = por %p193, %p194
      %p196 = scmp.ne.s32.totalorder %s185, %s188
      %p197 = scmp.eq.s32.totalorder %s64, 3
      %p198 = por %p196, %p197
      %p199 = scmp.ne.s32.totalorder %s188, %s189
      %p200 = scmp.eq.s32.totalorder %s64, 0
      %p201 = por %p199, %p200
      %p202 = scmp.ne.s32.totalorder %s188, %s189
      %p203 = scmp.eq.s32.totalorder %s65, 3
      %p204 = por %p202, %p203
      %p206 = scmp.ne.s32.totalorder %s189, %s205
      %p207 = scmp.eq.s32.totalorder %s65, 0
      %p208 = por %p206, %p207
      %s209 = ssub.s32 %s67, %s74
      %p210 = scmp.eq.s32.totalorder %s209, 0
      %s212 = sadd.s32 %s211, 1
      %s213 = scalar_select %p210, %s211, %s212
      %p216 = pneg %p210
      %p217 = scmp.eq.s32.totalorder %s59, 3
      %p218 = por %p216, %p217
      %p219 = scmp.ne.s32.totalorder %s211, %s214
      %p220 = scmp.eq.s32.totalorder %s59, 0
      %p221 = por %p219, %p220
      %p222 = scmp.ne.s32.totalorder %s211, %s214
      %p223 = scmp.eq.s32.totalorder %s64, 3
      %p224 = por %p222, %p223
      %p225 = scmp.ne.s32.totalorder %s214, %s215
      %p226 = scmp.eq.s32.totalorder %s64, 0
      %p227 = por %p225, %p226
      %p228 = scmp.ne.s32.totalorder %s214, %s215
      %p229 = scmp.eq.s32.totalorder %s65, 3
      %p230 = por %p228, %p229
      %p232 = scmp.ne.s32.totalorder %s215, %s231
      %p233 = scmp.eq.s32.totalorder %s65, 0
      %p234 = por %p232, %p233
      %s235 = ssub.s32 %s67, %s74
      %p236 = scmp.eq.s32.totalorder %s235, 0
      %s238 = sadd.s32 %s237, 1
      %s239 = scalar_select %p236, %s237, %s238
      %p242 = pneg %p236
      %p243 = scmp.eq.s32.totalorder %s59, 3
      %p244 = por %p242, %p243
      %p245 = scmp.ne.s32.totalorder %s237, %s240
      %p246 = scmp.eq.s32.totalorder %s59, 0
      %p247 = por %p245, %p246
      %p248 = scmp.ne.s32.totalorder %s237, %s240
      %p249 = scmp.eq.s32.totalorder %s64, 3
      %p250 = por %p248, %p249
      %p251 = scmp.ne.s32.totalorder %s240, %s241
      %p252 = scmp.eq.s32.totalorder %s64, 0
      %p253 = por %p251, %p252
      %p254 = scmp.ne.s32.totalorder %s240, %s241
      %p255 = scmp.eq.s32.totalorder %s65, 3
      %p256 = por %p254, %p255
      %p258 = scmp.ne.s32.totalorder %s241, %s257
      %p259 = scmp.eq.s32.totalorder %s65, 0
      %p260 = por %p258, %p259
      %s261 = ssub.s32 %s67, %s74
      %p262 = scmp.eq.s32.totalorder %s261, 0
      %s264 = sadd.s32 %s263, 1
      %s265 = scalar_select %p262, %s263, %s264
      %p268 = pneg %p262
      %p269 = scmp.eq.s32.totalorder %s59, 3
      %p270 = por %p268, %p269
      %p271 = scmp.ne.s32.totalorder %s263, %s266
      %p272 = scmp.eq.s32.totalorder %s59, 0
      %p273 = por %p271, %p272
      %p274 = scmp.ne.s32.totalorder %s263, %s266
      %p275 = scmp.eq.s32.totalorder %s64, 3
      %p276 = por %p274, %p275
      %p277 = scmp.ne.s32.totalorder %s266, %s267
      %p278 = scmp.eq.s32.totalorder %s64, 0
      %p279 = por %p277, %p278
      %p280 = scmp.ne.s32.totalorder %s266, %s267
      %p281 = scmp.eq.s32.totalorder %s65, 3
      %p282 = por %p280, %p281
      %p284 = scmp.ne.s32.totalorder %s267, %s283
      %p285 = scmp.eq.s32.totalorder %s65, 0
      %p286 = por %p284, %p285
      %s287 = ssub.s32 %s67, %s74
      %p288 = scmp.eq.s32.totalorder %s287, 0
      %s290 = sadd.s32 %s289, 1
      %s291 = scalar_select %p288, %s289, %s290
      %p294 = pneg %p288
      %p295 = scmp.eq.s32.totalorder %s59, 3
      %p296 = por %p294, %p295
      %p297 = scmp.ne.s32.totalorder %s289, %s292
      %p298 = scmp.eq.s32.totalorder %s59, 0
      %p299 = por %p297, %p298
      %p300 = scmp.ne.s32.totalorder %s289, %s292
      %p301 = scmp.eq.s32.totalorder %s64, 3
      %p302 = por %p300, %p301
      %p303 = scmp.ne.s32.totalorder %s292, %s293
      %p304 = scmp.eq.s32.totalorder %s64, 0
      %p305 = por %p303, %p304
      %p306 = scmp.ne.s32.totalorder %s292, %s293
      %p307 = scmp.eq.s32.totalorder %s65, 3
      %p308 = por %p306, %p307
      %p310 = scmp.ne.s32.totalorder %s293, %s309
      %p311 = scmp.eq.s32.totalorder %s65, 0
      %p312 = por %p310, %p311
      %s313 = ssub.s32 %s67, %s74
      %p314 = scmp.eq.s32.totalorder %s313, 0
      %s316 = sadd.s32 %s315, 1
      %s317 = scalar_select %p314, %s315, %s316
      %p320 = pneg %p314
      %p321 = scmp.eq.s32.totalorder %s59, 3
      %p322 = por %p320, %p321
      %p323 = scmp.ne.s32.totalorder %s315, %s318
      %p324 = scmp.eq.s32.totalorder %s59, 0
      %p325 = por %p323, %p324
      %p326 = scmp.ne.s32.totalorder %s315, %s318
      %p327 = scmp.eq.s32.totalorder %s64, 3
      %p328 = por %p326, %p327
      %p329 = scmp.ne.s32.totalorder %s318, %s319
      %p330 = scmp.eq.s32.totalorder %s64, 0
      %p331 = por %p329, %p330
      %p332 = scmp.ne.s32.totalorder %s318, %s319
      %p333 = scmp.eq.s32.totalorder %s65, 3
      %p334 = por %p332, %p333
      %p336 = scmp.ne.s32.totalorder %s319, %s335
      %p337 = scmp.eq.s32.totalorder %s65, 0
      %p338 = por %p336, %p337
      %s339 = ssub.s32 %s67, %s74
      %p340 = scmp.eq.s32.totalorder %s339, 0
      %s342 = sadd.s32 %s341, 1
      %s343 = scalar_select %p340, %s341, %s342
      %p346 = pneg %p340
      %p347 = scmp.eq.s32.totalorder %s59, 3
      %p348 = por %p346, %p347
      %p349 = scmp.ne.s32.totalorder %s341, %s344
      %p350 = scmp.eq.s32.totalorder %s59, 0
      %p351 = por %p349, %p350
      %p352 = scmp.ne.s32.totalorder %s341, %s344
      %p353 = scmp.eq.s32.totalorder %s64, 3
      %p354 = por %p352, %p353
      %p355 = scmp.ne.s32.totalorder %s344, %s345
      %p356 = scmp.eq.s32.totalorder %s64, 0
      %p357 = por %p355, %p356
      %p358 = scmp.ne.s32.totalorder %s344, %s345
      %p359 = scmp.eq.s32.totalorder %s65, 3
      %p360 = por %p358, %p359
      %p362 = scmp.ne.s32.totalorder %s345, %s361
      %p363 = scmp.eq.s32.totalorder %s65, 0
      %p364 = por %p362, %p363
      %s365 = ssub.s32 %s67, %s74
      %p366 = scmp.eq.s32.totalorder %s365, 0
      %s368 = sadd.s32 %s367, 1
      %s369 = scalar_select %p366, %s367, %s368
      %p372 = pneg %p366
      %p373 = scmp.eq.s32.totalorder %s59, 3
      %p374 = por %p372, %p373
      %p375 = scmp.ne.s32.totalorder %s367, %s370
      %p376 = scmp.eq.s32.totalorder %s59, 0
      %p377 = por %p375, %p376
      %p378 = scmp.ne.s32.totalorder %s367, %s370
      %p379 = scmp.eq.s32.totalorder %s64, 3
      %p380 = por %p378, %p379
      %p381 = scmp.ne.s32.totalorder %s370, %s371
      %p382 = scmp.eq.s32.totalorder %s64, 0
      %p383 = por %p381, %p382
      %p384 = scmp.ne.s32.totalorder %s370, %s371
      %p385 = scmp.eq.s32.totalorder %s65, 3
      %p386 = por %p384, %p385
      %p388 = scmp.ne.s32.totalorder %s371, %s387
      %p389 = scmp.eq.s32.totalorder %s65, 0
      %p390 = por %p388, %p389
      %s391 = ssub.s32 %s67, %s74
      %p392 = scmp.eq.s32.totalorder %s391, 0
      %s394 = sadd.s32 %s393, 1
      %s395 = scalar_select %p392, %s393, %s394
      %p398 = pneg %p392
      %p399 = scmp.eq.s32.totalorder %s59, 3
      %p400 = por %p398, %p399
      %p401 = scmp.ne.s32.totalorder %s393, %s396
      %p402 = scmp.eq.s32.totalorder %s59, 0
      %p403 = por %p401, %p402
      %p404 = scmp.ne.s32.totalorder %s393, %s396
      %p405 = scmp.eq.s32.totalorder %s64, 3
      %p406 = por %p404, %p405
      %p407 = scmp.ne.s32.totalorder %s396, %s397
      %p408 = scmp.eq.s32.totalorder %s64, 0
      %p409 = por %p407, %p408
      %p410 = scmp.ne.s32.totalorder %s396, %s397
      %p411 = scmp.eq.s32.totalorder %s65, 3
      %p412 = por %p410, %p411
      %p414 = scmp.ne.s32.totalorder %s397, %s413
      %p415 = scmp.eq.s32.totalorder %s65, 0
      %p416 = por %p414, %p415
      %s417 = ssub.s32 %s67, %s74
      %p418 = scmp.eq.s32.totalorder %s417, 0
      %s420 = sadd.s32 %s419, 1
      %s421 = scalar_select %p418, %s419, %s420
      %p424 = pneg %p418
      %p425 = scmp.eq.s32.totalorder %s59, 3
      %p426 = por %p424, %p425
      %p427 = scmp.ne.s32.totalorder %s419, %s422
      %p428 = scmp.eq.s32.totalorder %s59, 0
      %p429 = por %p427, %p428
      %p430 = scmp.ne.s32.totalorder %s419, %s422
      %p431 = scmp.eq.s32.totalorder %s64, 3
      %p432 = por %p430, %p431
      %p433 = scmp.ne.s32.totalorder %s422, %s423
      %p434 = scmp.eq.s32.totalorder %s64, 0
      %p435 = por %p433, %p434
      %p436 = scmp.ne.s32.totalorder %s422, %s423
      %p437 = scmp.eq.s32.totalorder %s65, 3
      %p438 = por %p436, %p437
      %p440 = scmp.ne.s32.totalorder %s423, %s439
      %p441 = scmp.eq.s32.totalorder %s65, 0
      %p442 = por %p440, %p441
      %s443 = ssub.s32 %s67, %s74
      %p444 = scmp.eq.s32.totalorder %s443, 0
      %s446 = sadd.s32 %s445, 1
      %s447 = scalar_select %p444, %s445, %s446
      %p450 = pneg %p444
      %p451 = scmp.eq.s32.totalorder %s59, 3
      %p452 = por %p450, %p451
      %p453 = scmp.ne.s32.totalorder %s445, %s448
      %p454 = scmp.eq.s32.totalorder %s59, 0
      %p455 = por %p453, %p454
      %p456 = scmp.ne.s32.totalorder %s445, %s448
      %p457 = scmp.eq.s32.totalorder %s64, 3
      %p458 = por %p456, %p457
      %p459 = scmp.ne.s32.totalorder %s448, %s449
      %p460 = scmp.eq.s32.totalorder %s64, 0
      %p461 = por %p459, %p460
      %p462 = scmp.ne.s32.totalorder %s448, %s449
      %p463 = scmp.eq.s32.totalorder %s65, 3
      %p464 = por %p462, %p463
      %p466 = scmp.ne.s32.totalorder %s449, %s465
      %p467 = scmp.eq.s32.totalorder %s65, 0
      %p468 = por %p466, %p467
      %s469 = ssub.s32 %s67, %s74
      %p470 = scmp.eq.s32.totalorder %s469, 0
      %s472 = sadd.s32 %s471, 1
      %s473 = scalar_select %p470, %s471, %s472
      %p476 = pneg %p470
      %p477 = scmp.eq.s32.totalorder %s59, 3
      %p478 = por %p476, %p477
      %p479 = scmp.ne.s32.totalorder %s471, %s474
      %p480 = scmp.eq.s32.totalorder %s59, 0
      %p481 = por %p479, %p480
      %p482 = scmp.ne.s32.totalorder %s471, %s474
      %p483 = scmp.eq.s32.totalorder %s64, 3
      %p484 = por %p482, %p483
      %p485 = scmp.ne.s32.totalorder %s474, %s475
      %p486 = scmp.eq.s32.totalorder %s64, 0
      %p487 = por %p485, %p486
      %p488 = scmp.ne.s32.totalorder %s474, %s475
      %p489 = scmp.eq.s32.totalorder %s65, 3
      %p490 = por %p488, %p489
      %p492 = scmp.ne.s32.totalorder %s475, %s491
      %p493 = scmp.eq.s32.totalorder %s65, 0
      %p494 = por %p492, %p493
      %s495 = ssub.s32 %s67, %s74
      %p496 = scmp.eq.s32.totalorder %s495, 0
      %s498 = sadd.s32 %s497, 1
      %s499 = scalar_select %p496, %s497, %s498
      %p502 = pneg %p496
      %p503 = scmp.eq.s32.totalorder %s59, 3
      %p504 = por %p502, %p503
      %p505 = scmp.ne.s32.totalorder %s497, %s500
      %p506 = scmp.eq.s32.totalorder %s59, 0
      %p507 = por %p505, %p506
      %p508 = scmp.ne.s32.totalorder %s497, %s500
      %p509 = scmp.eq.s32.totalorder %s64, 3
      %p510 = por %p508, %p509
      %p511 = scmp.ne.s32.totalorder %s500, %s501
      %p512 = scmp.eq.s32.totalorder %s64, 0
      %p513 = por %p511, %p512
      %p514 = scmp.ne.s32.totalorder %s500, %s501
      %p515 = scmp.eq.s32.totalorder %s65, 3
      %p516 = por %p514, %p515
      %p518 = scmp.ne.s32.totalorder %s501, %s517
      %p519 = scmp.eq.s32.totalorder %s65, 0
      %p520 = por %p518, %p519
      %s521 = ssub.s32 %s67, %s74
      %p522 = scmp.eq.s32.totalorder %s521, 0
      %s524 = sadd.s32 %s523, 1
      %s525 = scalar_select %p522, %s523, %s524
      %p528 = pneg %p522
      %p529 = scmp.eq.s32.totalorder %s59, 3
      %p530 = por %p528, %p529
      %p531 = scmp.ne.s32.totalorder %s523, %s526
      %p532 = scmp.eq.s32.totalorder %s59, 0
      %p533 = por %p531, %p532
      %p534 = scmp.ne.s32.totalorder %s523, %s526
      %p535 = scmp.eq.s32.totalorder %s64, 3
      %p536 = por %p534, %p535
      %p537 = scmp.ne.s32.totalorder %s526, %s527
      %p538 = scmp.eq.s32.totalorder %s64, 0
      %p539 = por %p537, %p538
      %p540 = scmp.ne.s32.totalorder %s526, %s527
      %p541 = scmp.eq.s32.totalorder %s65, 3
      %p542 = por %p540, %p541
      %p544 = scmp.ne.s32.totalorder %s527, %s543
      %p545 = scmp.eq.s32.totalorder %s65, 0
      %p546 = por %p544, %p545
      %s547 = ssub.s32 %s67, %s74
      %p548 = scmp.eq.s32.totalorder %s547, 0
      %s550 = sadd.s32 %s549, 1
      %s551 = scalar_select %p548, %s549, %s550
      %p554 = pneg %p548
      %p555 = scmp.eq.s32.totalorder %s59, 3
      %p556 = por %p554, %p555
      %p557 = scmp.ne.s32.totalorder %s549, %s552
      %p558 = scmp.eq.s32.totalorder %s59, 0
      %p559 = por %p557, %p558
      %p560 = scmp.ne.s32.totalorder %s549, %s552
      %p561 = scmp.eq.s32.totalorder %s64, 3
      %p562 = por %p560, %p561
      %p563 = scmp.ne.s32.totalorder %s552, %s553
      %p564 = scmp.eq.s32.totalorder %s64, 0
      %p565 = por %p563, %p564
      %p566 = scmp.ne.s32.totalorder %s552, %s553
      %p567 = scmp.eq.s32.totalorder %s65, 3
      %p568 = por %p566, %p567
      %p570 = scmp.ne.s32.totalorder %s553, %s569
      %p571 = scmp.eq.s32.totalorder %s65, 0
      %p572 = por %p570, %p571
      %s573 = ssub.s32 %s67, %s74
      %p574 = scmp.eq.s32.totalorder %s573, 0
      %s576 = sadd.s32 %s575, 1
      %s577 = scalar_select %p574, %s575, %s576
      %p580 = pneg %p574
      %p581 = scmp.eq.s32.totalorder %s59, 3
      %p582 = por %p580, %p581
      %p583 = scmp.ne.s32.totalorder %s575, %s578
      %p584 = scmp.eq.s32.totalorder %s59, 0
      %p585 = por %p583, %p584
      %p586 = scmp.ne.s32.totalorder %s575, %s578
      %p587 = scmp.eq.s32.totalorder %s64, 3
      %p588 = por %p586, %p587
      %p589 = scmp.ne.s32.totalorder %s578, %s579
      %p590 = scmp.eq.s32.totalorder %s64, 0
      %p591 = por %p589, %p590
      %p592 = scmp.ne.s32.totalorder %s578, %s579
      %p593 = scmp.eq.s32.totalorder %s65, 3
      %p594 = por %p592, %p593
      %p596 = scmp.ne.s32.totalorder %s579, %s595
      %p597 = scmp.eq.s32.totalorder %s65, 0
      %p598 = por %p596, %p597
      %s599 = ssub.s32 %s67, %s74
      %p600 = scmp.eq.s32.totalorder %s599, 0
      %s602 = sadd.s32 %s601, 1
      %s603 = scalar_select %p600, %s601, %s602
      %p606 = pneg %p600
      %p607 = scmp.eq.s32.totalorder %s59, 3
      %p608 = por %p606, %p607
      %p609 = scmp.ne.s32.totalorder %s601, %s604
      %p610 = scmp.eq.s32.totalorder %s59, 0
      %p611 = por %p609, %p610
      %p612 = scmp.ne.s32.totalorder %s601, %s604
      %p613 = scmp.eq.s32.totalorder %s64, 3
      %p614 = por %p612, %p613
      %p615 = scmp.ne.s32.totalorder %s604, %s605
      %p616 = scmp.eq.s32.totalorder %s64, 0
      %p617 = por %p615, %p616
      %p618 = scmp.ne.s32.totalorder %s604, %s605
      %p619 = scmp.eq.s32.totalorder %s65, 3
      %p620 = por %p618, %p619
      %p622 = scmp.ne.s32.totalorder %s605, %s621
      %p623 = scmp.eq.s32.totalorder %s65, 0
      %p624 = por %p622, %p623
      %s625 = ssub.s32 %s67, %s74
      %p626 = scmp.eq.s32.totalorder %s625, 0
      %s628 = sadd.s32 %s627, 1
      %s629 = scalar_select %p626, %s627, %s628
      %p632 = pneg %p626
      %p633 = scmp.eq.s32.totalorder %s59, 3
      %p634 = por %p632, %p633
      %p635 = scmp.ne.s32.totalorder %s627, %s630
      %p636 = scmp.eq.s32.totalorder %s59, 0
      %p637 = por %p635, %p636
      %p638 = scmp.ne.s32.totalorder %s627, %s630
      %p639 = scmp.eq.s32.totalorder %s64, 3
      %p640 = por %p638, %p639
      %p641 = scmp.ne.s32.totalorder %s630, %s631
      %p642 = scmp.eq.s32.totalorder %s64, 0
      %p643 = por %p641, %p642
      %p644 = scmp.ne.s32.totalorder %s630, %s631
      %p645 = scmp.eq.s32.totalorder %s65, 3
      %p646 = por %p644, %p645
      %p648 = scmp.ne.s32.totalorder %s631, %s647
      %p649 = scmp.eq.s32.totalorder %s65, 0
      %p650 = por %p648, %p649
      %s651 = ssub.s32 %s67, %s74
      %p652 = scmp.eq.s32.totalorder %s651, 0
      %s654 = sadd.s32 %s653, 1
      %s655 = scalar_select %p652, %s653, %s654
      %p658 = pneg %p652
      %p659 = scmp.eq.s32.totalorder %s59, 3
      %p660 = por %p658, %p659
      %p661 = scmp.ne.s32.totalorder %s653, %s656
      %p662 = scmp.eq.s32.totalorder %s59, 0
      %p663 = por %p661, %p662
      %p664 = scmp.ne.s32.totalorder %s653, %s656
      %p665 = scmp.eq.s32.totalorder %s64, 3
      %p666 = por %p664, %p665
      %p667 = scmp.ne.s32.totalorder %s656, %s657
      %p668 = scmp.eq.s32.totalorder %s64, 0
      %p669 = por %p667, %p668
      %p670 = scmp.ne.s32.totalorder %s656, %s657
      %p671 = scmp.eq.s32.totalorder %s65, 3
      %p672 = por %p670, %p671
      %p674 = scmp.ne.s32.totalorder %s657, %s673
      %p675 = scmp.eq.s32.totalorder %s65, 0
      %p676 = por %p674, %p675
      %s677 = ssub.s32 %s67, %s74
      %p678 = scmp.eq.s32.totalorder %s677, 0
      %s680 = sadd.s32 %s679, 1
      %s681 = scalar_select %p678, %s679, %s680
      %p684 = pneg %p678
      %p685 = scmp.eq.s32.totalorder %s59, 3
      %p686 = por %p684, %p685
      %p687 = scmp.ne.s32.totalorder %s679, %s682
      %p688 = scmp.eq.s32.totalorder %s59, 0
      %p689 = por %p687, %p688
      %p690 = scmp.ne.s32.totalorder %s679, %s682
      %p691 = scmp.eq.s32.totalorder %s64, 3
      %p692 = por %p690, %p691
      %p693 = scmp.ne.s32.totalorder %s682, %s683
      %p694 = scmp.eq.s32.totalorder %s64, 0
      %p695 = por %p693, %p694
      %p696 = scmp.ne.s32.totalorder %s682, %s683
      %p697 = scmp.eq.s32.totalorder %s65, 3
      %p698 = por %p696, %p697
      %p700 = scmp.ne.s32.totalorder %s683, %s699
      %p701 = scmp.eq.s32.totalorder %s65, 0
      %p702 = por %p700, %p701
      %s704 = sadd.s32 %s703, 1
      %p707 = scmp.eq.s32.totalorder %s59, 3
      %p708 = scmp.ne.s32.totalorder %s703, %s705
      %p709 = scmp.eq.s32.totalorder %s59, 0
      %p710 = por %p708, %p709
      %p711 = scmp.ne.s32.totalorder %s703, %s705
      %p712 = scmp.eq.s32.totalorder %s64, 3
      %p713 = por %p711, %p712
      %p714 = scmp.ne.s32.totalorder %s705, %s706
      %p715 = scmp.eq.s32.totalorder %s64, 0
      %p716 = por %p714, %p715
      %p717 = scmp.ne.s32.totalorder %s705, %s706
      %p718 = scmp.eq.s32.totalorder %s65, 3
      %p719 = por %p717, %p718
      %p721 = scmp.ne.s32.totalorder %s706, %s720
      %p722 = scmp.eq.s32.totalorder %s65, 0
      %p723 = por %p721, %p722
      %s725 = sadd.s32 %s724, 1
      %p728 = scmp.eq.s32.totalorder %s59, 3
      %p729 = scmp.ne.s32.totalorder %s724, %s726
      %p730 = scmp.eq.s32.totalorder %s59, 0
      %p731 = por %p729, %p730
      %p732 = scmp.ne.s32.totalorder %s724, %s726
      %p733 = scmp.eq.s32.totalorder %s64, 3
      %p734 = por %p732, %p733
      %p735 = scmp.ne.s32.totalorder %s726, %s727
      %p736 = scmp.eq.s32.totalorder %s64, 0
      %p737 = por %p735, %p736
      %p738 = scmp.ne.s32.totalorder %s726, %s727
      %p739 = scmp.eq.s32.totalorder %s65, 3
      %p740 = por %p738, %p739
      %p742 = scmp.ne.s32.totalorder %s727, %s741
      %p743 = scmp.eq.s32.totalorder %s65, 0
      %p744 = por %p742, %p743
      %s745 = ssub.s32 %s66, %s78
      %p746 = scmp.eq.s32.totalorder %s745, 0
      %s748 = sadd.s32 %s747, 1
      %s749 = scalar_select %p746, %s747, %s748
      %p752 = pneg %p746
      %p753 = scmp.eq.s32.totalorder %s59, 3
      %p754 = por %p752, %p753
      %p755 = scmp.ne.s32.totalorder %s747, %s750
      %p756 = scmp.eq.s32.totalorder %s59, 0
      %p757 = por %p755, %p756
      %p758 = scmp.ne.s32.totalorder %s747, %s750
      %p759 = scmp.eq.s32.totalorder %s64, 3
      %p760 = por %p758, %p759
      %p761 = scmp.ne.s32.totalorder %s750, %s751
      %p762 = scmp.eq.s32.totalorder %s64, 0
      %p763 = por %p761, %p762
      %p764 = scmp.ne.s32.totalorder %s750, %s751
      %p765 = scmp.eq.s32.totalorder %s65, 3
      %p766 = por %p764, %p765
      %p768 = scmp.ne.s32.totalorder %s751, %s767
      %p769 = scmp.eq.s32.totalorder %s65, 0
      %p770 = por %p768, %p769
      %p771 = scmp.le.s32.totalorder 1, %s59
      %p772 = scmp.lt.s32.totalorder %s59, 5
      %p773 = pnand %p771, %p772
      %p774 = pneg %p773
      // Predicated region
      $region9: #{decoder_forward.1} parent=5 // pred_check
        _
      $region10: #{decoder_forward.1} parent=5 // pred_check_branch
        %776 = sbr.rel (%p773) target = $region12
      $region11: #{decoder_forward.1} parent=5 // pred_region
        %s777 = ssub.s32 %s59, 1
        // Predicated region
        $region13: #{decoder_forward.1} parent=11 // pred_check
          %p778 = pneg %p716
        $region14: #{decoder_forward.1} parent=11 // pred_check_branch
          %780 = sbr.rel (%p778) target = $region16
        $region15: #{decoder_forward.1} parent=11 // pred_region
          _
        $region16: #{decoder_forward.1} parent=11 // pred_fallthru
          _
        // Predicated region
        $region17: #{decoder_forward.1} parent=11 // pred_check
          %p781 = pneg %p737
        $region18: #{decoder_forward.1} parent=11 // pred_check_branch
          %783 = sbr.rel (%p781) target = $region20
        $region19: #{decoder_forward.1} parent=11 // pred_region
          _
        $region20: #{decoder_forward.1} parent=11 // pred_fallthru
          _
      $region12: #{decoder_forward.1} parent=5 // pred_fallthru
        _
      %p784 = scmp.lt.s32.totalorder %s59, 4
      // Predicated region
      $region21: #{decoder_forward.1} parent=5 // pred_check
        %p785 = pneg %p784
      $region22: #{decoder_forward.1} parent=5 // pred_check_branch
        %787 = sbr.rel (%p785) target = $region24
      $region23: #{decoder_forward.1} parent=5 // pred_region
        // Predicated region
        $region25: #{decoder_forward.1} parent=23 // pred_check
          %p788 = pneg %p91
        $region26: #{decoder_forward.1} parent=23 // pred_check_branch
          %790 = sbr.rel (%p788) target = $region28
        $region27: #{decoder_forward.1} parent=23 // pred_region
          %p791 = scmp.lt.s32.totalorder %s66, 1
          %s792 = scalar_select %p791, %s66, 1
          %s793 = smul.addr %s792, 8
          %s794 = scalar_lea.vmem %s0, %s793
        $region28: #{decoder_forward.1} parent=23 // pred_fallthru
          _
        // Predicated region
        $region29: #{decoder_forward.1} parent=23 // pred_check
          %p795 = pneg %p117
        $region30: #{decoder_forward.1} parent=23 // pred_check_branch
          %797 = sbr.rel (%p795) target = $region32
        $region31: #{decoder_forward.1} parent=23 // pred_region
          %p798 = scmp.lt.s32.totalorder %s66, 1
          %s799 = scalar_select %p798, %s66, 1
          %s800 = smul.addr %s799, 8
          %s801 = scalar_lea.vmem %s1, %s800
        $region32: #{decoder_forward.1} parent=23 // pred_fallthru
          _
        // Predicated region
        $region33: #{decoder_forward.1} parent=23 // pred_check
          %p802 = pneg %p143
        $region34: #{decoder_forward.1} parent=23 // pred_check_branch
          %804 = sbr.rel (%p802) target = $region36
        $region35: #{decoder_forward.1} parent=23 // pred_region
          %p805 = scmp.lt.s32.totalorder %s66, 1
          %s806 = scalar_select %p805, %s66, 1
          %s807 = smul.addr %s806, 4
          %s808 = scalar_lea.vmem %s2, %s807
        $region36: #{decoder_forward.1} parent=23 // pred_fallthru
          _
        // Predicated region
        $region37: #{decoder_forward.1} parent=23 // pred_check
          %p809 = pneg %p169
        $region38: #{decoder_forward.1} parent=23 // pred_check_branch
          %811 = sbr.rel (%p809) target = $region40
        $region39: #{decoder_forward.1} parent=23 // pred_region
          %p812 = scmp.lt.s32.totalorder %s66, 1
          %s813 = scalar_select %p812, %s66, 1
          %s814 = scalar_lea.vmem %s3, %s813
        $region40: #{decoder_forward.1} parent=23 // pred_fallthru
          _
        // Predicated region
        $region41: #{decoder_forward.1} parent=23 // pred_check
          %p815 = pneg %p195
        $region42: #{decoder_forward.1} parent=23 // pred_check_branch
          %817 = sbr.rel (%p815) target = $region44
        $region43: #{decoder_forward.1} parent=23 // pred_region
          %s818 = sand.u32 %s185, 1
          %s819 = scalar_lea.sflag [#allocation4], %s818
          %s820 = sand.u32 %s185, 1
          %s821 = scalar_lea.vmem [#allocation3], %s820
          %s823 = ssub.s32 16, 16
          %824 = vsyncadd %s819, %s823
          %s825 = smul.addr %s67, 16
          %s826 = scalar_lea.hbm %s4, %s825
          %s828 = sshll.u32 %s821, 4
          %s829 = int_to_ptr.vmem [resolvable:$true] %s828
          %831 = dma.hbm_to_vmem [thread:$0]  %s826, 16, %s829, %s819
        $region44: #{decoder_forward.1} parent=23 // pred_fallthru
          _
        // Predicated region
        $region45: #{decoder_forward.1} parent=23 // pred_check
          %p832 = pneg %p221
        $region46: #{decoder_forward.1} parent=23 // pred_check_branch
          %834 = sbr.rel (%p832) target = $region48
        $region47: #{decoder_forward.1} parent=23 // pred_region
          %s835 = sand.u32 %s59, 1
          %s836 = scalar_lea.sflag [#allocation7], %s835
          %s837 = sand.u32 %s211, 1
          %s838 = scalar_lea.vmem [#allocation6], %s837
          %s840 = ssub.s32 16, 16
          %841 = vsyncadd %s836, %s840
          %s842 = smul.addr %s67, 16
          %s843 = scalar_lea.hbm %s5, %s842
          %s845 = sshll.u32 %s838, 4
          %s846 = int_to_ptr.vmem [resolvable:$true] %s845
          %848 = dma.hbm_to_vmem [thread:$0]  %s843, 16, %s846, %s836
        $region48: #{decoder_forward.1} parent=23 // pred_fallthru
          _
        // Predicated region
        $region49: #{decoder_forward.1} parent=23 // pred_check
          %p849 = pneg %p247
        $region50: #{decoder_forward.1} parent=23 // pred_check_branch
          %851 = sbr.rel (%p849) target = $region52
        $region51: #{decoder_forward.1} parent=23 // pred_region
          %p852 = scmp.lt.s32.totalorder %s67, 1
          %s853 = scalar_select %p852, %s67, 1
          %s854 = smul.addr %s853, 4
          %s855 = smul.addr %s854, 4
          %s856 = scalar_lea.vmem %s6, %s855
        $region52: #{decoder_forward.1} parent=23 // pred_fallthru
          _
        // Predicated region
        $region53: #{decoder_forward.1} parent=23 // pred_check
          %p857 = pneg %p273
        $region54: #{decoder_forward.1} parent=23 // pred_check_branch
          %859 = sbr.rel (%p857) target = $region56
        $region55: #{decoder_forward.1} parent=23 // pred_region
          %p860 = scmp.lt.s32.totalorder %s67, 1
          %s861 = scalar_select %p860, %s67, 1
          %s862 = scalar_lea.vmem %s7, %s861
        $region56: #{decoder_forward.1} parent=23 // pred_fallthru
          _
        // Predicated region
        $region57: #{decoder_forward.1} parent=23 // pred_check
          %p863 = pneg %p299
        $region58: #{decoder_forward.1} parent=23 // pred_check_branch
          %865 = sbr.rel (%p863) target = $region60
        $region59: #{decoder_forward.1} parent=23 // pred_region
          %p866 = scmp.lt.s32.totalorder %s67, 1
          %s867 = scalar_select %p866, %s67, 1
          %s868 = smul.addr %s867, 4
          %s869 = smul.addr %s868, 4
          %s870 = scalar_lea.vmem %s8, %s869
        $region60: #{decoder_forward.1} parent=23 // pred_fallthru
          _
        // Predicated region
        $region61: #{decoder_forward.1} parent=23 // pred_check
          %p871 = pneg %p325
        $region62: #{decoder_forward.1} parent=23 // pred_check_branch
          %873 = sbr.rel (%p871) target = $region64
        $region63: #{decoder_forward.1} parent=23 // pred_region
          %p874 = scmp.lt.s32.totalorder %s67, 1
          %s875 = scalar_select %p874, %s67, 1
          %s876 = scalar_lea.vmem %s9, %s875
        $region64: #{decoder_forward.1} parent=23 // pred_fallthru
          _
        // Predicated region
        $region65: #{decoder_forward.1} parent=23 // pred_check
          %p877 = pneg %p351
        $region66: #{decoder_forward.1} parent=23 // pred_check_branch
          %879 = sbr.rel (%p877) target = $region68
        $region67: #{decoder_forward.1} parent=23 // pred_region
          %s880 = sand.u32 %s59, 1
          %s881 = scalar_lea.sflag [#allocation7], %s880
          %s882 = sand.u32 %s341, 1
          %s883 = scalar_lea.vmem [#allocation8], %s882
          %s885 = ssub.s32 16, 16
          %886 = vsyncadd %s881, %s885
          %s887 = smul.addr %s67, 16
          %s888 = scalar_lea.hbm %s10, %s887
          %s890 = sshll.u32 %s883, 4
          %s891 = int_to_ptr.vmem [resolvable:$true] %s890
          %893 = dma.hbm_to_vmem [thread:$0]  %s888, 16, %s891, %s881
        $region68: #{decoder_forward.1} parent=23 // pred_fallthru
          _
        // Predicated region
        $region69: #{decoder_forward.1} parent=23 // pred_check
          %p894 = pneg %p377
        $region70: #{decoder_forward.1} parent=23 // pred_check_branch
          %896 = sbr.rel (%p894) target = $region72
        $region71: #{decoder_forward.1} parent=23 // pred_region
          %s897 = sand.u32 %s59, 1
          %s898 = scalar_lea.sflag [#allocation10], %s897
          %s899 = sand.u32 %s367, 1
          %s900 = scalar_lea.vmem [#allocation9], %s899
          %s902 = ssub.s32 16, 16
          %903 = vsyncadd %s898, %s902
          %s904 = smul.addr %s67, 16
          %s905 = scalar_lea.hbm %s11, %s904
          %s907 = sshll.u32 %s900, 4
          %s908 = int_to_ptr.vmem [resolvable:$true] %s907
          %910 = dma.hbm_to_vmem [thread:$0]  %s905, 16, %s908, %s898
        $region72: #{decoder_forward.1} parent=23 // pred_fallthru
          _
        // Predicated region
        $region73: #{decoder_forward.1} parent=23 // pred_check
          %p911 = pneg %p403
        $region74: #{decoder_forward.1} parent=23 // pred_check_branch
          %913 = sbr.rel (%p911) target = $region76
        $region75: #{decoder_forward.1} parent=23 // pred_region
          %p914 = scmp.lt.s32.totalorder %s67, 1
          %s915 = scalar_select %p914, %s67, 1
          %s916 = smul.addr %s915, 4
          %s917 = smul.addr %s916, 4
          %s918 = scalar_lea.vmem %s12, %s917
        $region76: #{decoder_forward.1} parent=23 // pred_fallthru
          _
        // Predicated region
        $region77: #{decoder_forward.1} parent=23 // pred_check
          %p919 = pneg %p429
        $region78: #{decoder_forward.1} parent=23 // pred_check_branch
          %921 = sbr.rel (%p919) target = $region80
        $region79: #{decoder_forward.1} parent=23 // pred_region
          %s922 = sand.u32 %s59, 1
          %s923 = scalar_lea.sflag [#allocation10], %s922
          %s924 = sand.u32 %s419, 1
          %s925 = scalar_lea.vmem [#allocation11], %s924
          %s927 = ssub.s32 16, 16
          %928 = vsyncadd %s923, %s927
          %s929 = smul.addr %s67, 16
          %s930 = scalar_lea.hbm %s13, %s929
          %s932 = sshll.u32 %s925, 4
          %s933 = int_to_ptr.vmem [resolvable:$true] %s932
          %935 = dma.hbm_to_vmem [thread:$0]  %s930, 16, %s933, %s923
        $region80: #{decoder_forward.1} parent=23 // pred_fallthru
          _
        // Predicated region
        $region81: #{decoder_forward.1} parent=23 // pred_check
          %p936 = pneg %p455
        $region82: #{decoder_forward.1} parent=23 // pred_check_branch
          %938 = sbr.rel (%p936) target = $region84
        $region83: #{decoder_forward.1} parent=23 // pred_region
          %s939 = sand.u32 %s59, 1
          %s940 = scalar_lea.sflag [#allocation13], %s939
          %s941 = sand.u32 %s445, 1
          %s942 = smul.addr %s941, 16
          %s943 = scalar_lea.vmem [#allocation12], %s942
          %s945 = ssub.s32 256, 256
          %946 = vsyncadd %s940, %s945
          %s947 = smul.addr %s67, 4
          %s948 = smul.addr %s947, 64
          %s949 = scalar_lea.hbm %s14, %s948
          %s950 = sshll.u32 %s943, 4
          %s951 = int_to_ptr.vmem [resolvable:$true] %s950
          %956 = dma.hbm_to_vmem [thread:$0]  %s949, 256, %s951, %s940, 64, 64, 4
        $region84: #{decoder_forward.1} parent=23 // pred_fallthru
          _
        // Predicated region
        $region85: #{decoder_forward.1} parent=23 // pred_check
          %p957 = pneg %p481
        $region86: #{decoder_forward.1} parent=23 // pred_check_branch
          %959 = sbr.rel (%p957) target = $region88
        $region87: #{decoder_forward.1} parent=23 // pred_region
          %s960 = sand.u32 %s59, 1
          %s961 = scalar_lea.sflag [#allocation13], %s960
          %s962 = sand.u32 %s471, 1
          %s963 = scalar_lea.vmem [#allocation14], %s962
          %s965 = ssub.s32 16, 16
          %966 = vsyncadd %s961, %s965
          %s967 = smul.addr %s67, 16
          %s968 = scalar_lea.hbm %s15, %s967
          %s970 = sshll.u32 %s963, 4
          %s971 = int_to_ptr.vmem [resolvable:$true] %s970
          %973 = dma.hbm_to_vmem [thread:$0]  %s968, 16, %s971, %s961
        $region88: #{decoder_forward.1} parent=23 // pred_fallthru
          _
        // Predicated region
        $region89: #{decoder_forward.1} parent=23 // pred_check
          %p974 = pneg %p507
        $region90: #{decoder_forward.1} parent=23 // pred_check_branch
          %976 = sbr.rel (%p974) target = $region92
        $region91: #{decoder_forward.1} parent=23 // pred_region
          %s977 = sand.u32 %s59, 1
          %s978 = scalar_lea.sflag [#allocation16], %s977
          %s979 = sand.u32 %s497, 1
          %s980 = smul.addr %s979, 16
          %s981 = scalar_lea.vmem [#allocation15], %s980
          %s983 = ssub.s32 256, 256
          %984 = vsyncadd %s978, %s983
          %s985 = smul.addr %s67, 4
          %s986 = smul.addr %s985, 64
          %s987 = scalar_lea.hbm %s16, %s986
          %s988 = sshll.u32 %s981, 4
          %s989 = int_to_ptr.vmem [resolvable:$true] %s988
          %994 = dma.hbm_to_vmem [thread:$0]  %s987, 256, %s989, %s978, 64, 64, 4
        $region92: #{decoder_forward.1} parent=23 // pred_fallthru
          _
        // Predicated region
        $region93: #{decoder_forward.1} parent=23 // pred_check
          %p995 = pneg %p533
        $region94: #{decoder_forward.1} parent=23 // pred_check_branch
          %997 = sbr.rel (%p995) target = $region96
        $region95: #{decoder_forward.1} parent=23 // pred_region
          %s998 = sand.u32 %s59, 1
          %s999 = scalar_lea.sflag [#allocation16], %s998
          %s1000 = sand.u32 %s523, 1
          %s1001 = scalar_lea.vmem [#allocation17], %s1000
          %s1003 = ssub.s32 16, 16
          %1004 = vsyncadd %s999, %s1003
          %s1005 = smul.addr %s67, 16
          %s1006 = scalar_lea.hbm %s17, %s1005
          %s1008 = sshll.u32 %s1001, 4
          %s1009 = int_to_ptr.vmem [resolvable:$true] %s1008
          %1011 = dma.hbm_to_vmem [thread:$0]  %s1006, 16, %s1009, %s999
        $region96: #{decoder_forward.1} parent=23 // pred_fallthru
          _
        // Predicated region
        $region97: #{decoder_forward.1} parent=23 // pred_check
          %p1012 = pneg %p559
        $region98: #{decoder_forward.1} parent=23 // pred_check_branch
          %1014 = sbr.rel (%p1012) target = $region100
        $region99: #{decoder_forward.1} parent=23 // pred_region
          %s1015 = sand.u32 %s59, 1
          %s1016 = scalar_lea.sflag [#allocation19], %s1015
          %s1017 = sand.u32 %s549, 1
          %s1018 = scalar_lea.vmem [#allocation18], %s1017
          %s1020 = ssub.s32 16, 16
          %1021 = vsyncadd %s1016, %s1020
          %s1022 = smul.addr %s67, 16
          %s1023 = scalar_lea.hbm %s18, %s1022
          %s1025 = sshll.u32 %s1018, 4
          %s1026 = int_to_ptr.vmem [resolvable:$true] %s1025
          %1028 = dma.hbm_to_vmem [thread:$0]  %s1023, 16, %s1026, %s1016
        $region100: #{decoder_forward.1} parent=23 // pred_fallthru
          _
        // Predicated region
        $region101: #{decoder_forward.1} parent=23 // pred_check
          %p1029 = pneg %p585
        $region102: #{decoder_forward.1} parent=23 // pred_check_branch
          %1031 = sbr.rel (%p1029) target = $region104
        $region103: #{decoder_forward.1} parent=23 // pred_region
          %s1032 = sand.u32 %s59, 1
          %s1033 = scalar_lea.sflag [#allocation19], %s1032
          %s1034 = sand.u32 %s575, 1
          %s1035 = scalar_lea.vmem [#allocation20], %s1034
          %s1037 = ssub.s32 16, 16
          %1038 = vsyncadd %s1033, %s1037
          %s1039 = smul.addr %s67, 16
          %s1040 = scalar_lea.hbm %s19, %s1039
          %s1042 = sshll.u32 %s1035, 4
          %s1043 = int_to_ptr.vmem [resolvable:$true] %s1042
          %1045 = dma.hbm_to_vmem [thread:$0]  %s1040, 16, %s1043, %s1033
        $region104: #{decoder_forward.1} parent=23 // pred_fallthru
          _
        // Predicated region
        $region105: #{decoder_forward.1} parent=23 // pred_check
          %p1046 = pneg %p611
        $region106: #{decoder_forward.1} parent=23 // pred_check_branch
          %1048 = sbr.rel (%p1046) target = $region108
        $region107: #{decoder_forward.1} parent=23 // pred_region
          %s1049 = sand.u32 %s59, 1
          %s1050 = scalar_lea.sflag [#allocation22], %s1049
          %s1051 = sand.u32 %s601, 1
          %s1052 = smul.addr %s1051, 16
          %s1053 = scalar_lea.vmem [#allocation21], %s1052
          %s1055 = ssub.s32 256, 256
          %1056 = vsyncadd %s1050, %s1055
          %s1057 = smul.addr %s67, 4
          %s1058 = smul.addr %s1057, 64
          %s1059 = scalar_lea.hbm %s20, %s1058
          %s1060 = sshll.u32 %s1053, 4
          %s1061 = int_to_ptr.vmem [resolvable:$true] %s1060
          %1066 = dma.hbm_to_vmem [thread:$0]  %s1059, 256, %s1061, %s1050, 64, 64, 4
        $region108: #{decoder_forward.1} parent=23 // pred_fallthru
          _
        // Predicated region
        $region109: #{decoder_forward.1} parent=23 // pred_check
          %p1067 = pneg %p637
        $region110: #{decoder_forward.1} parent=23 // pred_check_branch
          %1069 = sbr.rel (%p1067) target = $region112
        $region111: #{decoder_forward.1} parent=23 // pred_region
          %s1070 = sand.u32 %s59, 1
          %s1071 = scalar_lea.sflag [#allocation22], %s1070
          %s1072 = sand.u32 %s627, 1
          %s1073 = scalar_lea.vmem [#allocation23], %s1072
          %s1075 = ssub.s32 16, 16
          %1076 = vsyncadd %s1071, %s1075
          %s1077 = smul.addr %s67, 16
          %s1078 = scalar_lea.hbm %s21, %s1077
          %s1080 = sshll.u32 %s1073, 4
          %s1081 = int_to_ptr.vmem [resolvable:$true] %s1080
          %1083 = dma.hbm_to_vmem [thread:$0]  %s1078, 16, %s1081, %s1071
        $region112: #{decoder_forward.1} parent=23 // pred_fallthru
          _
        // Predicated region
        $region113: #{decoder_forward.1} parent=23 // pred_check
          %p1084 = pneg %p663
        $region114: #{decoder_forward.1} parent=23 // pred_check_branch
          %1086 = sbr.rel (%p1084) target = $region116
        $region115: #{decoder_forward.1} parent=23 // pred_region
          %p1087 = scmp.lt.s32.totalorder %s67, 1
          %s1088 = scalar_select %p1087, %s67, 1
          %s1089 = smul.addr %s1088, 8
          %s1090 = smul.addr %s1089, 4
          %s1091 = scalar_lea.vmem %s22, %s1090
        $region116: #{decoder_forward.1} parent=23 // pred_fallthru
          _
        // Predicated region
        $region117: #{decoder_forward.1} parent=23 // pred_check
          %p1092 = pneg %p689
        $region118: #{decoder_forward.1} parent=23 // pred_check_branch
          %1094 = sbr.rel (%p1092) target = $region120
        $region119: #{decoder_forward.1} parent=23 // pred_region
          %s1095 = sand.u32 %s679, 1
          %s1096 = scalar_lea.sflag [#allocation25], %s1095
          %s1097 = sand.u32 %s679, 1
          %s1098 = scalar_lea.vmem [#allocation24], %s1097
          %s1100 = ssub.s32 16, 16
          %1101 = vsyncadd %s1096, %s1100
          %s1102 = smul.addr %s67, 16
          %s1103 = scalar_lea.hbm %s23, %s1102
          %s1105 = sshll.u32 %s1098, 4
          %s1106 = int_to_ptr.vmem [resolvable:$true] %s1105
          %1108 = dma.hbm_to_vmem [thread:$0]  %s1103, 16, %s1106, %s1096
        $region120: #{decoder_forward.1} parent=23 // pred_fallthru
          _
      $region24: #{decoder_forward.1} parent=5 // pred_fallthru
        _
      %p1109 = scmp.le.s32.totalorder 1, %s59
      %p1110 = scmp.lt.s32.totalorder %s59, 5
      %p1111 = pnand %p1109, %p1110
      %p1112 = pneg %p1111
      // Predicated region
      $region121: #{decoder_forward.1} parent=5 // pred_check
        _
      $region122: #{decoder_forward.1} parent=5 // pred_check_branch
        %1114 = sbr.rel (%p1111) target = $region124
      $region123: #{decoder_forward.1} parent=5 // pred_region
        %s1115 = ssub.s32 %s59, 1
        %s1116 = sand.u32 %s188, 1
        %s1117 = scalar_lea.sflag [#allocation4], %s1116
        %s1118 = sand.u32 %s188, 1
        %s1119 = scalar_lea.vmem [#allocation3], %s1118
        // Predicated region
        $region125: #{decoder_forward.1} parent=123 // pred_check
          %p1120 = pneg %p201
        $region126: #{decoder_forward.1} parent=123 // pred_check_branch
          %1122 = sbr.rel (%p1120) target = $region128
        $region127: #{decoder_forward.1} parent=123 // pred_region
          %1123 = dma.done %s1117, 16
        $region128: #{decoder_forward.1} parent=123 // pred_fallthru
          _
        %s1124 = sand.u32 %s64, 1
        %s1125 = scalar_lea.sflag [#allocation7], %s1124
        %s1126 = sand.u32 %s214, 1
        %s1127 = scalar_lea.vmem [#allocation6], %s1126
        // Predicated region
        $region129: #{decoder_forward.1} parent=123 // pred_check
          %p1128 = pneg %p227
        $region130: #{decoder_forward.1} parent=123 // pred_check_branch
          %1130 = sbr.rel (%p1128) target = $region132
        $region131: #{decoder_forward.1} parent=123 // pred_region
          %1131 = dma.done %s1125, 16
        $region132: #{decoder_forward.1} parent=123 // pred_fallthru
          _
        %s1132 = sand.u32 %s64, 1
        %s1133 = scalar_lea.sflag [#allocation7], %s1132
        %s1134 = sand.u32 %s344, 1
        %s1135 = scalar_lea.vmem [#allocation8], %s1134
        // Predicated region
        $region133: #{decoder_forward.1} parent=123 // pred_check
          %p1136 = pneg %p357
        $region134: #{decoder_forward.1} parent=123 // pred_check_branch
          %1138 = sbr.rel (%p1136) target = $region136
        $region135: #{decoder_forward.1} parent=123 // pred_region
          %1139 = dma.done %s1133, 16
        $region136: #{decoder_forward.1} parent=123 // pred_fallthru
          _
        %s1140 = sand.u32 %s64, 1
        %s1141 = scalar_lea.sflag [#allocation10], %s1140
        %s1142 = sand.u32 %s370, 1
        %s1143 = scalar_lea.vmem [#allocation9], %s1142
        // Predicated region
        $region137: #{decoder_forward.1} parent=123 // pred_check
          %p1144 = pneg %p383
        $region138: #{decoder_forward.1} parent=123 // pred_check_branch
          %1146 = sbr.rel (%p1144) target = $region140
        $region139: #{decoder_forward.1} parent=123 // pred_region
          %1147 = dma.done %s1141, 16
        $region140: #{decoder_forward.1} parent=123 // pred_fallthru
          _
        %s1148 = sand.u32 %s64, 1
        %s1149 = scalar_lea.sflag [#allocation10], %s1148
        %s1150 = sand.u32 %s422, 1
        %s1151 = scalar_lea.vmem [#allocation11], %s1150
        // Predicated region
        $region141: #{decoder_forward.1} parent=123 // pred_check
          %p1152 = pneg %p435
        $region142: #{decoder_forward.1} parent=123 // pred_check_branch
          %1154 = sbr.rel (%p1152) target = $region144
        $region143: #{decoder_forward.1} parent=123 // pred_region
          %1155 = dma.done %s1149, 16
        $region144: #{decoder_forward.1} parent=123 // pred_fallthru
          _
        %s1156 = sand.u32 %s64, 1
        %s1157 = scalar_lea.sflag [#allocation13], %s1156
        %s1158 = sand.u32 %s448, 1
        %s1159 = smul.addr %s1158, 16
        %s1160 = scalar_lea.vmem [#allocation12], %s1159
        // Predicated region
        $region145: #{decoder_forward.1} parent=123 // pred_check
          %p1161 = pneg %p461
        $region146: #{decoder_forward.1} parent=123 // pred_check_branch
          %1163 = sbr.rel (%p1161) target = $region148
        $region147: #{decoder_forward.1} parent=123 // pred_region
          %1164 = dma.done %s1157, 256
        $region148: #{decoder_forward.1} parent=123 // pred_fallthru
          _
        %s1165 = sand.u32 %s64, 1
        %s1166 = scalar_lea.sflag [#allocation13], %s1165
        %s1167 = sand.u32 %s474, 1
        %s1168 = scalar_lea.vmem [#allocation14], %s1167
        // Predicated region
        $region149: #{decoder_forward.1} parent=123 // pred_check
          %p1169 = pneg %p487
        $region150: #{decoder_forward.1} parent=123 // pred_check_branch
          %1171 = sbr.rel (%p1169) target = $region152
        $region151: #{decoder_forward.1} parent=123 // pred_region
          %1172 = dma.done %s1166, 16
        $region152: #{decoder_forward.1} parent=123 // pred_fallthru
          _
        %s1173 = sand.u32 %s64, 1
        %s1174 = scalar_lea.sflag [#allocation16], %s1173
        %s1175 = sand.u32 %s500, 1
        %s1176 = smul.addr %s1175, 16
        %s1177 = scalar_lea.vmem [#allocation15], %s1176
        // Predicated region
        $region153: #{decoder_forward.1} parent=123 // pred_check
          %p1178 = pneg %p513
        $region154: #{decoder_forward.1} parent=123 // pred_check_branch
          %1180 = sbr.rel (%p1178) target = $region156
        $region155: #{decoder_forward.1} parent=123 // pred_region
          %1181 = dma.done %s1174, 256
        $region156: #{decoder_forward.1} parent=123 // pred_fallthru
          _
        %s1182 = sand.u32 %s64, 1
        %s1183 = scalar_lea.sflag [#allocation16], %s1182
        %s1184 = sand.u32 %s526, 1
        %s1185 = scalar_lea.vmem [#allocation17], %s1184
        // Predicated region
        $region157: #{decoder_forward.1} parent=123 // pred_check
          %p1186 = pneg %p539
        $region158: #{decoder_forward.1} parent=123 // pred_check_branch
          %1188 = sbr.rel (%p1186) target = $region160
        $region159: #{decoder_forward.1} parent=123 // pred_region
          %1189 = dma.done %s1183, 16
        $region160: #{decoder_forward.1} parent=123 // pred_fallthru
          _
        %s1190 = sand.u32 %s64, 1
        %s1191 = scalar_lea.sflag [#allocation19], %s1190
        %s1192 = sand.u32 %s552, 1
        %s1193 = scalar_lea.vmem [#allocation18], %s1192
        // Predicated region
        $region161: #{decoder_forward.1} parent=123 // pred_check
          %p1194 = pneg %p565
        $region162: #{decoder_forward.1} parent=123 // pred_check_branch
          %1196 = sbr.rel (%p1194) target = $region164
        $region163: #{decoder_forward.1} parent=123 // pred_region
          %1197 = dma.done %s1191, 16
        $region164: #{decoder_forward.1} parent=123 // pred_fallthru
          _
        %s1198 = sand.u32 %s64, 1
        %s1199 = scalar_lea.sflag [#allocation19], %s1198
        %s1200 = sand.u32 %s578, 1
        %s1201 = scalar_lea.vmem [#allocation20], %s1200
        // Predicated region
        $region165: #{decoder_forward.1} parent=123 // pred_check
          %p1202 = pneg %p591
        $region166: #{decoder_forward.1} parent=123 // pred_check_branch
          %1204 = sbr.rel (%p1202) target = $region168
        $region167: #{decoder_forward.1} parent=123 // pred_region
          %1205 = dma.done %s1199, 16
        $region168: #{decoder_forward.1} parent=123 // pred_fallthru
          _
        %s1206 = sand.u32 %s64, 1
        %s1207 = scalar_lea.sflag [#allocation22], %s1206
        %s1208 = sand.u32 %s604, 1
        %s1209 = smul.addr %s1208, 16
        %s1210 = scalar_lea.vmem [#allocation21], %s1209
        // Predicated region
        $region169: #{decoder_forward.1} parent=123 // pred_check
          %p1211 = pneg %p617
        $region170: #{decoder_forward.1} parent=123 // pred_check_branch
          %1213 = sbr.rel (%p1211) target = $region172
        $region171: #{decoder_forward.1} parent=123 // pred_region
          %1214 = dma.done %s1207, 256
        $region172: #{decoder_forward.1} parent=123 // pred_fallthru
          _
        %s1215 = sand.u32 %s64, 1
        %s1216 = scalar_lea.sflag [#allocation22], %s1215
        %s1217 = sand.u32 %s630, 1
        %s1218 = scalar_lea.vmem [#allocation23], %s1217
        // Predicated region
        $region173: #{decoder_forward.1} parent=123 // pred_check
          %p1219 = pneg %p643
        $region174: #{decoder_forward.1} parent=123 // pred_check_branch
          %1221 = sbr.rel (%p1219) target = $region176
        $region175: #{decoder_forward.1} parent=123 // pred_region
          %1222 = dma.done %s1216, 16
        $region176: #{decoder_forward.1} parent=123 // pred_fallthru
          _
        %s1223 = sand.u32 %s682, 1
        %s1224 = scalar_lea.sflag [#allocation25], %s1223
        %s1225 = sand.u32 %s682, 1
        %s1226 = scalar_lea.vmem [#allocation24], %s1225
        // Predicated region
        $region177: #{decoder_forward.1} parent=123 // pred_check
          %p1227 = pneg %p695
        $region178: #{decoder_forward.1} parent=123 // pred_check_branch
          %1229 = sbr.rel (%p1227) target = $region180
        $region179: #{decoder_forward.1} parent=123 // pred_region
          %1230 = dma.done %s1224, 16
        $region180: #{decoder_forward.1} parent=123 // pred_fallthru
          _
        %p1231 = scmp.lt.s32.totalorder %s68, 1
        %s1232 = scalar_select %p1231, %s68, 1
        %s1233 = smul.addr %s1232, 8
        %s1234 = scalar_lea.vmem %s0, %s1233
        %p1235 = pneg %p97
        %p1236 = pneg %p94
        %p1237 = scmp.lt.s32.totalorder %s68, 1
        %s1238 = scalar_select %p1237, %s68, 1
        %s1239 = smul.addr %s1238, 8
        %s1240 = scalar_lea.vmem %s1, %s1239
        %p1241 = pneg %p123
        %p1242 = pneg %p120
        %p1243 = scmp.lt.s32.totalorder %s68, 1
        %s1244 = scalar_select %p1243, %s68, 1
        %s1245 = smul.addr %s1244, 4
        %s1246 = scalar_lea.vmem %s2, %s1245
        %p1247 = pneg %p149
        %p1248 = pneg %p146
        %p1249 = scmp.lt.s32.totalorder %s68, 1
        %s1250 = scalar_select %p1249, %s68, 1
        %s1251 = scalar_lea.vmem %s3, %s1250
        %p1252 = pneg %p175
        %p1253 = pneg %p172
        %s1254 = sand.u32 %s188, 1
        %s1255 = scalar_lea.sflag [#allocation4], %s1254
        %s1256 = sand.u32 %s188, 1
        %s1257 = scalar_lea.vmem [#allocation3], %s1256
        %p1258 = pneg %p201
        %p1259 = pneg %p198
        %s1260 = sand.u32 %s64, 1
        %s1261 = scalar_lea.sflag [#allocation7], %s1260
        %s1262 = sand.u32 %s214, 1
        %s1263 = scalar_lea.vmem [#allocation6], %s1262
        %p1264 = pneg %p227
        %p1265 = pneg %p224
        %p1266 = scmp.lt.s32.totalorder %s69, 1
        %s1267 = scalar_select %p1266, %s69, 1
        %s1268 = smul.addr %s1267, 4
        %s1269 = smul.addr %s1268, 4
        %s1270 = scalar_lea.vmem %s6, %s1269
        %p1271 = pneg %p253
        %p1272 = pneg %p250
        %p1273 = scmp.lt.s32.totalorder %s69, 1
        %s1274 = scalar_select %p1273, %s69, 1
        %s1275 = scalar_lea.vmem %s7, %s1274
        %p1276 = pneg %p279
        %p1277 = pneg %p276
        %p1278 = scmp.lt.s32.totalorder %s69, 1
        %s1279 = scalar_select %p1278, %s69, 1
        %s1280 = smul.addr %s1279, 4
        %s1281 = smul.addr %s1280, 4
        %s1282 = scalar_lea.vmem %s8, %s1281
        %p1283 = pneg %p305
        %p1284 = pneg %p302
        %p1285 = scmp.lt.s32.totalorder %s69, 1
        %s1286 = scalar_select %p1285, %s69, 1
        %s1287 = scalar_lea.vmem %s9, %s1286
        %p1288 = pneg %p331
        %p1289 = pneg %p328
        %s1290 = sand.u32 %s64, 1
        %s1291 = scalar_lea.sflag [#allocation7], %s1290
        %s1292 = sand.u32 %s344, 1
        %s1293 = scalar_lea.vmem [#allocation8], %s1292
        %p1294 = pneg %p357
        %p1295 = pneg %p354
        %s1296 = sand.u32 %s64, 1
        %s1297 = scalar_lea.sflag [#allocation10], %s1296
        %s1298 = sand.u32 %s370, 1
        %s1299 = scalar_lea.vmem [#allocation9], %s1298
        %p1300 = pneg %p383
        %p1301 = pneg %p380
        %p1302 = scmp.lt.s32.totalorder %s69, 1
        %s1303 = scalar_select %p1302, %s69, 1
        %s1304 = smul.addr %s1303, 4
        %s1305 = smul.addr %s1304, 4
        %s1306 = scalar_lea.vmem %s12, %s1305
        %p1307 = pneg %p409
        %p1308 = pneg %p406
        %s1309 = sand.u32 %s64, 1
        %s1310 = scalar_lea.sflag [#allocation10], %s1309
        %s1311 = sand.u32 %s422, 1
        %s1312 = scalar_lea.vmem [#allocation11], %s1311
        %p1313 = pneg %p435
        %p1314 = pneg %p432
        %s1315 = sand.u32 %s64, 1
        %s1316 = scalar_lea.sflag [#allocation13], %s1315
        %s1317 = sand.u32 %s448, 1
        %s1318 = smul.addr %s1317, 16
        %s1319 = scalar_lea.vmem [#allocation12], %s1318
        %p1320 = pneg %p461
        %p1321 = pneg %p458
        %s1322 = sand.u32 %s64, 1
        %s1323 = scalar_lea.sflag [#allocation13], %s1322
        %s1324 = sand.u32 %s474, 1
        %s1325 = scalar_lea.vmem [#allocation14], %s1324
        %p1326 = pneg %p487
        %p1327 = pneg %p484
        %s1328 = sand.u32 %s64, 1
        %s1329 = scalar_lea.sflag [#allocation16], %s1328
        %s1330 = sand.u32 %s500, 1
        %s1331 = smul.addr %s1330, 16
        %s1332 = scalar_lea.vmem [#allocation15], %s1331
        %p1333 = pneg %p513
        %p1334 = pneg %p510
        %s1335 = sand.u32 %s64, 1
        %s1336 = scalar_lea.sflag [#allocation16], %s1335
        %s1337 = sand.u32 %s526, 1
        %s1338 = scalar_lea.vmem [#allocation17], %s1337
        %p1339 = pneg %p539
        %p1340 = pneg %p536
        %s1341 = sand.u32 %s64, 1
        %s1342 = scalar_lea.sflag [#allocation19], %s1341
        %s1343 = sand.u32 %s552, 1
        %s1344 = scalar_lea.vmem [#allocation18], %s1343
        %p1345 = pneg %p565
        %p1346 = pneg %p562
        %s1347 = sand.u32 %s64, 1
        %s1348 = scalar_lea.sflag [#allocation19], %s1347
        %s1349 = sand.u32 %s578, 1
        %s1350 = scalar_lea.vmem [#allocation20], %s1349
        %p1351 = pneg %p591
        %p1352 = pneg %p588
        %s1353 = sand.u32 %s64, 1
        %s1354 = scalar_lea.sflag [#allocation22], %s1353
        %s1355 = sand.u32 %s604, 1
        %s1356 = smul.addr %s1355, 16
        %s1357 = scalar_lea.vmem [#allocation21], %s1356
        %p1358 = pneg %p617
        %p1359 = pneg %p614
        %s1360 = sand.u32 %s64, 1
        %s1361 = scalar_lea.sflag [#allocation22], %s1360
        %s1362 = sand.u32 %s630, 1
        %s1363 = scalar_lea.vmem [#allocation23], %s1362
        %p1364 = pneg %p643
        %p1365 = pneg %p640
        %p1366 = scmp.lt.s32.totalorder %s69, 1
        %s1367 = scalar_select %p1366, %s69, 1
        %s1368 = smul.addr %s1367, 8
        %s1369 = smul.addr %s1368, 4
        %s1370 = scalar_lea.vmem %s22, %s1369
        %p1371 = pneg %p669
        %p1372 = pneg %p666
        %s1373 = sand.u32 %s682, 1
        %s1374 = scalar_lea.sflag [#allocation25], %s1373
        %s1375 = sand.u32 %s682, 1
        %s1376 = scalar_lea.vmem [#allocation24], %s1375
        %p1377 = pneg %p695
        %p1378 = pneg %p692
        %p1379 = pneg %p716
        %p1380 = pneg %p713
        %p1381 = pneg %p737
        %p1382 = pneg %p734
        %p1383 = pneg %p763
        %p1384 = pneg %p760
        %s1385 = sand.u32 %s750, 1
        %s1386 = scalar_lea.sflag [#allocation5], %s1385
        %s1387 = sand.u32 %s750, 1
        %s1388 = smul.addr %s1387, 8
        %s1389 = scalar_lea.vmem [#allocation26], %s1388
        %p1390 = scmp.lt.s32.totalorder %s68, 1
        %s1391 = scalar_select %p1390, %s68, 1
        %s1392 = smul.addr %s1391, 8
        %s1393 = scalar_lea.vmem %s0, %s1392
        %p1394 = scmp.lt.s32.totalorder %s68, 1
        %s1395 = scalar_select %p1394, %s68, 1
        %s1396 = smul.addr %s1395, 8
        %s1397 = scalar_lea.vmem %s1, %s1396
        %p1398 = scmp.lt.s32.totalorder %s68, 1
        %s1399 = scalar_select %p1398, %s68, 1
        %s1400 = smul.addr %s1399, 4
        %s1401 = scalar_lea.vmem %s2, %s1400
        %p1402 = scmp.lt.s32.totalorder %s68, 1
        %s1403 = scalar_select %p1402, %s68, 1
        %s1404 = scalar_lea.vmem %s3, %s1403
        %p1405 = scmp.lt.s32.totalorder %s69, 1
        %s1406 = scalar_select %p1405, %s69, 1
        %s1407 = smul.addr %s1406, 4
        %s1408 = smul.addr %s1407, 4
        %s1409 = scalar_lea.vmem %s6, %s1408
        %p1410 = scmp.lt.s32.totalorder %s69, 1
        %s1411 = scalar_select %p1410, %s69, 1
        %s1412 = scalar_lea.vmem %s7, %s1411
        %p1413 = scmp.lt.s32.totalorder %s69, 1
        %s1414 = scalar_select %p1413, %s69, 1
        %s1415 = smul.addr %s1414, 4
        %s1416 = smul.addr %s1415, 4
        %s1417 = scalar_lea.vmem %s8, %s1416
        %p1418 = scmp.lt.s32.totalorder %s69, 1
        %s1419 = scalar_select %p1418, %s69, 1
        %s1420 = scalar_lea.vmem %s9, %s1419
        %p1421 = scmp.lt.s32.totalorder %s69, 1
        %s1422 = scalar_select %p1421, %s69, 1
        %s1423 = smul.addr %s1422, 4
        %s1424 = smul.addr %s1423, 4
        %s1425 = scalar_lea.vmem %s12, %s1424
        %p1426 = scmp.lt.s32.totalorder %s69, 1
        %s1427 = scalar_select %p1426, %s69, 1
        %s1428 = smul.addr %s1427, 8
        %s1429 = smul.addr %s1428, 4
        %s1430 = scalar_lea.vmem %s22, %s1429
        %p1432 = scmp.eq.s32.totalorder %s69, 0
        // Predicated region
        $region181: #{decoder_forward.1} parent=123 // pred_check
          %p1433 = pneg %p1432
        $region182: #{decoder_forward.1} parent=123 // pred_check_branch
          %1435 = sbr.rel (%p1433) target = $region184
        $region183: #{decoder_forward.1} parent=123 // pred_region
          %v1436 = vld [vmem:[%s1393] sm:$0xff]
          %vm1437 = vcmask 261120
          %1438 = vst.msk [vmem:[#allocation2] sm:$0xff] %vm1437, %v1436
        $region184: #{decoder_forward.1} parent=123 // pred_fallthru
          _
        %v1439 = vld [vmem:[#allocation2] sm:$0xff]
        %v1440 = vld [vmem:[%s1397] sm:$0xff]
        %v1441 = vld [vmem:[%s1119] sm:$0x1]
        %v1442 = vld [vmem:[%s1127] sm:$0x1]
        %vm1443 = vcmask 261120
        %v1444 = vsel %vm1443, %v1439, 0.0
        %1445 = vadd.xlane.f32.xlu0 %v1444
        %v1446 = vpop.xlane.xlu0 %1445
        %v1447 = vrcp.pop 32.0
        %v1448 = vmul.f32 %v1446, %v1447
        %v1449 = vsub.f32 %v1439, %v1448
        %v1450 = vmul.f32 %v1449, %v1449
        %v1451 = vsel %vm1443, %v1450, 0.0
        %1452 = vadd.xlane.f32.xlu0 %v1451
        %v1453 = vpop.xlane.xlu0 %1452
        %v1454 = vrcp.pop 31.0
        %v1455 = vmul.f32 %v1453, %v1454
        %v1456 = vrsqrt.pop %v1455
        %v1457 = vmul.f32 %v1455, %v1456
        %vm1458 = vcmp.eq.f32.partialorder %v1455, inf
        %v1459 = vsel %vm1458, %v1455, %v1457
        %vm1460 = vcmp.eq.f32.partialorder %v1455, 0.0
        %v1461 = vand.u32 %v1455, 2147483648
        %v1462 = vsel %vm1460, %v1461, %v1459
        %v1463 = vadd.f32 %v1462, 1e-06
        %v1464 = vrcp.pop %v1463
        %v1466 = vlaneseq
        %v1467 = vshrl.u32 %v1466, 7
        %v1468 = vsub.s32 0, %v1467
        %v1469 = vrot.slane %v1441, %v1468
        %v1471 = vmul.f32 %v1469, %v1449
        %v1472 = vmul.f32 %v1471, %v1464
        %v1474 = vlaneseq
        %v1475 = vshrl.u32 %v1474, 7
        %v1476 = vsub.s32 0, %v1475
        %v1477 = vrot.slane %v1442, %v1476
        %v1479 = vadd.f32 %v1472, %v1477
        %v1480 = vld [vmem:[%s1409] sm:$0xf]
        %v1481 = vld [vmem:[%s1409 + $0x4] sm:$0xf]
        %v1482 = vld [vmem:[%s1409 + $0x8] sm:$0xf]
        %v1483 = vld [vmem:[%s1409 + $0xc] sm:$0xf]
        %v1484 = vpack.c.bf16 %v1479, %v1479
        %v1485 = vld [vmem:[%s1412] sm:$0x1]
        %v1487 = vlaneseq
        %v1488 = vshrl.u32 %v1487, 7
        %v1489 = vsub.s32 0, %v1488
        %v1490 = vrot.slane %v1485, %v1489
        %v1496 = vunpack.c.l.b16 %v1480
        %v1497 = vunpack.c.l.b16 %v1481
        %v1498 = vunpack.c.l.b16 %v1482
        %v1499 = vunpack.c.l.b16 %v1483
        %v1500 = vpack.c.b16 %v1497, %v1496
        %v1501 = vpack.c.b16 %v1499, %v1498
        %v1505 = vsel %vm1443, %v1484, 0
        %1507 = vmatprep.subr.bf16.mxu0 0
        %1508 = vmatpush1.bf16.msra.mxu0 %v1500
        %1509 = vmatprep.subr.bf16.mxu0 0
        %1510 = vmatpush1.bf16.msra.mxu0 %v1501
        %1511 = vmatprep.subr.bf16.mxu0 0
        %1512 = vmatpush1.bf16.msra.mxu0 0
        %1513 = vmatprep.subr.bf16.mxu0 0
        %1514 = vmatpush1.bf16.msra.mxu0 0
        %1515 = vmatprep.subr.bf16.mxu0 0
        %1516 = vmatpush1.bf16.msra.mxu0 0
        %1517 = vmatprep.subr.bf16.mxu0 0
        %1518 = vmatpush1.bf16.msra.mxu0 0
        %1519 = vmatprep.subr.bf16.mxu0 0
        %1520 = vmatpush1.bf16.msra.mxu0 0
        %1521 = vmatprep.subr.bf16.mxu0 0
        %1522 = vmatpush1.bf16.msra.mxu0 0
        %1523 = vmatprep.subr.bf16.mxu0 0
        %1524 = vmatpush1.bf16.msra.mxu0 0
        %1525 = vmatprep.subr.bf16.mxu0 0
        %1526 = vmatpush1.bf16.msra.mxu0 0
        %1527 = vmatprep.subr.bf16.mxu0 0
        %1528 = vmatpush1.bf16.msra.mxu0 0
        %1529 = vmatprep.subr.bf16.mxu0 0
        %1530 = vmatpush1.bf16.msra.mxu0 0
        %1531 = vmatprep.subr.bf16.mxu0 0
        %1532 = vmatpush1.bf16.msra.mxu0 0
        %1533 = vmatprep.subr.bf16.mxu0 0
        %1534 = vmatpush1.bf16.msra.mxu0 0
        %1535 = vmatprep.subr.bf16.mxu0 0
        %1536 = vmatpush1.bf16.msra.mxu0 0
        %1537 = vmatprep.subr.bf16.mxu0 0
        %1538 = vmatpush1.bf16.msra.mxu0 0
        %1539 = vmatprep.mubr.bf16.mxu0 0
        %1540 = vmatmul.mubr.bf16.gmra.mrb[0].mxu0 %v1505
        %v1541 = vpop.f32.mrb[0].mxu0
        %v1542 = vadd.f32 %v1490, %v1541
        %v1543 = vpop.f32.mrb[0].mxu0
        %v1544 = vpop.f32.mrb[0].mxu0
        %v1545 = vpop.f32.mrb[0].mxu0
        %1546 = vdwg.mxu0
        %v1547 = vld [vmem:[%s1401] sm:$0xf]
        %v1548 = vunpack.c.l.bf16 %v1547
        %v1549 = vld [vmem:[%s1417] sm:$0xf]
        %v1550 = vld [vmem:[%s1417 + $0x4] sm:$0xf]
        %v1551 = vld [vmem:[%s1417 + $0x8] sm:$0xf]
        %v1552 = vld [vmem:[%s1417 + $0xc] sm:$0xf]
        %v1553 = vld [vmem:[%s1420] sm:$0x1]
        %v1554 = vpack.c.bf16 %v1542, %v1542
        %1556 = vrot.lane.b32.xlu0 %v1554, 96
        %v1557 = vpop.permute.xlu0 %1556
        %vm1558 = vcmask 64512
        %v1560 = vsel %vm1558, %v1554, 0
        %v1563 = vsel %vm1558, %v1557, 0
        %1565 = vmatprep.subr.bf16.mxu0 0
        %1566 = vmatpush1.bf16.xpose.msra.mxu0 %v1563
        %1567 = vmatprep.subr.bf16.mxu0 0
        %1568 = vmatpush1.bf16.xpose.msra.mxu0 0
        %1569 = vmatprep.subr.bf16.mxu0 0
        %1570 = vmatpush1.bf16.xpose.msra.mxu0 0
        %1571 = vmatprep.subr.bf16.mxu0 0
        %1572 = vmatpush1.bf16.xpose.msra.mxu0 0
        %1573 = vmatprep.subr.bf16.mxu0 0
        %1574 = vmatpush1.bf16.xpose.msra.mxu0 0
        %1575 = vmatprep.subr.bf16.mxu0 0
        %1576 = vmatpush1.bf16.xpose.msra.mxu0 0
        %1577 = vmatprep.subr.bf16.mxu0 0
        %1578 = vmatpush1.bf16.xpose.msra.mxu0 0
        %1579 = vmatprep.subr.bf16.mxu0 0
        %1580 = vmatpush1.bf16.xpose.msra.mxu0 0
        %1581 = vmatprep.subr.bf16.mxu0 0
        %1582 = vmatpush1.bf16.xpose.msra.mxu0 0
        %1583 = vmatprep.subr.bf16.mxu0 0
        %1584 = vmatpush1.bf16.xpose.msra.mxu0 0
        %1585 = vmatprep.subr.bf16.mxu0 0
        %1586 = vmatpush1.bf16.xpose.msra.mxu0 0
        %1587 = vmatprep.subr.bf16.mxu0 0
        %1588 = vmatpush1.bf16.xpose.msra.mxu0 0
        %1589 = vmatprep.subr.bf16.mxu0 0
        %1590 = vmatpush1.bf16.xpose.msra.mxu0 0
        %1591 = vmatprep.subr.bf16.mxu0 0
        %1592 = vmatpush1.bf16.xpose.msra.mxu0 0
        %1593 = vmatprep.subr.bf16.mxu0 0
        %1594 = vmatpush1.bf16.xpose.msra.mxu0 0
        %1595 = vmatprep.subr.bf16.mxu0 0
        %1596 = vmatpush1.bf16.xpose.msra.mxu0 0
        %1597 = vmatprep.mubr.bf16.mxu0 0
        %1598 = vmatmul.mubr.bf16.gmra.mrb[0].mxu0 %v1560
        %v1599 = vpop.f32.mrb[0].mxu0
        %v1600 = vadd.f32 0.0, %v1599
        %v1601 = vpop.f32.mrb[0].mxu0
        %v1602 = vpop.f32.mrb[0].mxu0
        %v1603 = vpop.f32.mrb[0].mxu0
        %1604 = vdwg.mxu0
        %v1605 = vmul.f32 %v1600, 0.35355338
        %v1606 = vadd.f32 %v1605, %v1548
        %v1607 = vsel %vm1558, %v1606, -inf
        %1608 = vmax.xlane.f32.xlu0 %v1607
        %v1609 = vpop.xlane.xlu0 %1608
        %v1610 = vsub.f32 %v1606, %v1609
        %v1611 = vmul.f32 %v1610, 1.442695
        %v1612 = vpow.pop %v1611
        %v1613 = vsel %vm1558, %v1612, 0.0
        %1614 = vadd.xlane.f32.xlu0 %v1613
        %v1615 = vpop.xlane.xlu0 %1614
        %v1616 = vrcp.pop %v1615
        %v1617 = vmul.f32 %v1612, %v1616
        %v1618 = vpack.c.bf16 %v1617, %v1617
        %1619 = vrot.lane.b32.xlu0 %v1554, 64
        %v1620 = vpop.permute.xlu0 %1619
        %v1622 = vsel %vm1558, %v1618, 0
        %vm1624 = vcmask 1043456
        %v1626 = vsel %vm1624, %v1620, 0
        %1628 = vmatprep.subr.bf16.mxu0 0
        %1629 = vmatpush1.bf16.msra.mxu0 %v1626
        %1630 = vmatprep.subr.bf16.mxu0 0
        %1631 = vmatpush1.bf16.msra.mxu0 0
        %1632 = vmatprep.subr.bf16.mxu0 0
        %1633 = vmatpush1.bf16.msra.mxu0 0
        %1634 = vmatprep.subr.bf16.mxu0 0
        %1635 = vmatpush1.bf16.msra.mxu0 0
        %1636 = vmatprep.subr.bf16.mxu0 0
        %1637 = vmatpush1.bf16.msra.mxu0 0
        %1638 = vmatprep.subr.bf16.mxu0 0
        %1639 = vmatpush1.bf16.msra.mxu0 0
        %1640 = vmatprep.subr.bf16.mxu0 0
        %1641 = vmatpush1.bf16.msra.mxu0 0
        %1642 = vmatprep.subr.bf16.mxu0 0
        %1643 = vmatpush1.bf16.msra.mxu0 0
        %1644 = vmatprep.subr.bf16.mxu0 0
        %1645 = vmatpush1.bf16.msra.mxu0 0
        %1646 = vmatprep.subr.bf16.mxu0 0
        %1647 = vmatpush1.bf16.msra.mxu0 0
        %1648 = vmatprep.subr.bf16.mxu0 0
        %1649 = vmatpush1.bf16.msra.mxu0 0
        %1650 = vmatprep.subr.bf16.mxu0 0
        %1651 = vmatpush1.bf16.msra.mxu0 0
        %1652 = vmatprep.subr.bf16.mxu0 0
        %1653 = vmatpush1.bf16.msra.mxu0 0
        %1654 = vmatprep.subr.bf16.mxu0 0
        %1655 = vmatpush1.bf16.msra.mxu0 0
        %1656 = vmatprep.subr.bf16.mxu0 0
        %1657 = vmatpush1.bf16.msra.mxu0 0
        %1658 = vmatprep.subr.bf16.mxu0 0
        %1659 = vmatpush1.bf16.msra.mxu0 0
        %1660 = vmatprep.mubr.bf16.mxu0 0
        %1661 = vmatmul.mubr.bf16.gmra.mrb[0].mxu0 %v1622
        %v1662 = vpop.f32.mrb[0].mxu0
        %v1663 = vadd.f32 0.0, %v1662
        %v1664 = vpop.f32.mrb[0].mxu0
        %v1665 = vpop.f32.mrb[0].mxu0
        %v1666 = vpop.f32.mrb[0].mxu0
        %1667 = vdwg.mxu0
        %1668 = vrot.lane.b32.xlu0 %v1554, 120
        %v1669 = vpop.permute.xlu0 %1668
        %1670 = vrot.lane.b32.xlu0 %v1554, 88
        %v1671 = vpop.permute.xlu0 %1670
        %v1673 = vsel %vm1558, %v1669, 0
        %v1676 = vsel %vm1558, %v1671, 0
        %1678 = vmatprep.subr.bf16.mxu0 0
        %1679 = vmatpush1.bf16.xpose.msra.mxu0 %v1676
        %1680 = vmatprep.subr.bf16.mxu0 0
        %1681 = vmatpush1.bf16.xpose.msra.mxu0 0
        %1682 = vmatprep.subr.bf16.mxu0 0
        %1683 = vmatpush1.bf16.xpose.msra.mxu0 0
        %1684 = vmatprep.subr.bf16.mxu0 0
        %1685 = vmatpush1.bf16.xpose.msra.mxu0 0
        %1686 = vmatprep.subr.bf16.mxu0 0
        %1687 = vmatpush1.bf16.xpose.msra.mxu0 0
        %1688 = vmatprep.subr.bf16.mxu0 0
        %1689 = vmatpush1.bf16.xpose.msra.mxu0 0
        %1690 = vmatprep.subr.bf16.mxu0 0
        %1691 = vmatpush1.bf16.xpose.msra.mxu0 0
        %1692 = vmatprep.subr.bf16.mxu0 0
        %1693 = vmatpush1.bf16.xpose.msra.mxu0 0
        %1694 = vmatprep.subr.bf16.mxu0 0
        %1695 = vmatpush1.bf16.xpose.msra.mxu0 0
        %1696 = vmatprep.subr.bf16.mxu0 0
        %1697 = vmatpush1.bf16.xpose.msra.mxu0 0
        %1698 = vmatprep.subr.bf16.mxu0 0
        %1699 = vmatpush1.bf16.xpose.msra.mxu0 0
        %1700 = vmatprep.subr.bf16.mxu0 0
        %1701 = vmatpush1.bf16.xpose.msra.mxu0 0
        %1702 = vmatprep.subr.bf16.mxu0 0
        %1703 = vmatpush1.bf16.xpose.msra.mxu0 0
        %1704 = vmatprep.subr.bf16.mxu0 0
        %1705 = vmatpush1.bf16.xpose.msra.mxu0 0
        %1706 = vmatprep.subr.bf16.mxu0 0
        %1707 = vmatpush1.bf16.xpose.msra.mxu0 0
        %1708 = vmatprep.subr.bf16.mxu0 0
        %1709 = vmatpush1.bf16.xpose.msra.mxu0 0
        %1710 = vmatprep.mubr.bf16.mxu0 0
        %1711 = vmatmul.mubr.bf16.gmra.mrb[0].mxu0 %v1673
        %v1712 = vpop.f32.mrb[0].mxu0
        %v1713 = vadd.f32 0.0, %v1712
        %v1714 = vpop.f32.mrb[0].mxu0
        %v1715 = vpop.f32.mrb[0].mxu0
        %v1716 = vpop.f32.mrb[0].mxu0
        %1717 = vdwg.mxu0
        %v1718 = vmul.f32 %v1713, 0.35355338
        %v1719 = vadd.f32 %v1718, %v1548
        %v1720 = vsel %vm1558, %v1719, -inf
        %1721 = vmax.xlane.f32.xlu0 %v1720
        %v1722 = vpop.xlane.xlu0 %1721
        %v1723 = vsub.f32 %v1719, %v1722
        %v1724 = vmul.f32 %v1723, 1.442695
        %v1725 = vpow.pop %v1724
        %v1726 = vsel %vm1558, %v1725, 0.0
        %1727 = vadd.xlane.f32.xlu0 %v1726
        %v1728 = vpop.xlane.xlu0 %1727
        %v1729 = vrcp.pop %v1728
        %v1730 = vmul.f32 %v1725, %v1729
        %v1731 = vpack.c.bf16 %v1730, %v1730
        %1732 = vrot.lane.b32.xlu0 %v1554, 56
        %v1733 = vpop.permute.xlu0 %1732
        %v1735 = vsel %vm1558, %v1731, 0
        %v1738 = vsel %vm1624, %v1733, 0
        %1740 = vmatprep.subr.bf16.mxu0 0
        %1741 = vmatpush1.bf16.msra.mxu0 %v1738
        %1742 = vmatprep.subr.bf16.mxu0 0
        %1743 = vmatpush1.bf16.msra.mxu0 0
        %1744 = vmatprep.subr.bf16.mxu0 0
        %1745 = vmatpush1.bf16.msra.mxu0 0
        %1746 = vmatprep.subr.bf16.mxu0 0
        %1747 = vmatpush1.bf16.msra.mxu0 0
        %1748 = vmatprep.subr.bf16.mxu0 0
        %1749 = vmatpush1.bf16.msra.mxu0 0
        %1750 = vmatprep.subr.bf16.mxu0 0
        %1751 = vmatpush1.bf16.msra.mxu0 0
        %1752 = vmatprep.subr.bf16.mxu0 0
        %1753 = vmatpush1.bf16.msra.mxu0 0
        %1754 = vmatprep.subr.bf16.mxu0 0
        %1755 = vmatpush1.bf16.msra.mxu0 0
        %1756 = vmatprep.subr.bf16.mxu0 0
        %1757 = vmatpush1.bf16.msra.mxu0 0
        %1758 = vmatprep.subr.bf16.mxu0 0
        %1759 = vmatpush1.bf16.msra.mxu0 0
        %1760 = vmatprep.subr.bf16.mxu0 0
        %1761 = vmatpush1.bf16.msra.mxu0 0
        %1762 = vmatprep.subr.bf16.mxu0 0
        %1763 = vmatpush1.bf16.msra.mxu0 0
        %1764 = vmatprep.subr.bf16.mxu0 0
        %1765 = vmatpush1.bf16.msra.mxu0 0
        %1766 = vmatprep.subr.bf16.mxu0 0
        %1767 = vmatpush1.bf16.msra.mxu0 0
        %1768 = vmatprep.subr.bf16.mxu0 0
        %1769 = vmatpush1.bf16.msra.mxu0 0
        %1770 = vmatprep.subr.bf16.mxu0 0
        %1771 = vmatpush1.bf16.msra.mxu0 0
        %1772 = vmatprep.mubr.bf16.mxu0 0
        %1773 = vmatmul.mubr.bf16.gmra.mrb[0].mxu0 %v1735
        %v1774 = vpop.f32.mrb[0].mxu0
        %v1775 = vadd.f32 0.0, %v1774
        %v1776 = vpop.f32.mrb[0].mxu0
        %v1777 = vpop.f32.mrb[0].mxu0
        %v1778 = vpop.f32.mrb[0].mxu0
        %1779 = vdwg.mxu0
        %1780 = vrot.lane.b32.xlu0 %v1554, 112
        %v1781 = vpop.permute.xlu0 %1780
        %1782 = vrot.lane.b32.xlu0 %v1554, 80
        %v1783 = vpop.permute.xlu0 %1782
        %v1785 = vsel %vm1558, %v1781, 0
        %v1788 = vsel %vm1558, %v1783, 0
        %1790 = vmatprep.subr.bf16.mxu0 0
        %1791 = vmatpush1.bf16.xpose.msra.mxu0 %v1788
        %1792 = vmatprep.subr.bf16.mxu0 0
        %1793 = vmatpush1.bf16.xpose.msra.mxu0 0
        %1794 = vmatprep.subr.bf16.mxu0 0
        %1795 = vmatpush1.bf16.xpose.msra.mxu0 0
        %1796 = vmatprep.subr.bf16.mxu0 0
        %1797 = vmatpush1.bf16.xpose.msra.mxu0 0
        %1798 = vmatprep.subr.bf16.mxu0 0
        %1799 = vmatpush1.bf16.xpose.msra.mxu0 0
        %1800 = vmatprep.subr.bf16.mxu0 0
        %1801 = vmatpush1.bf16.xpose.msra.mxu0 0
        %1802 = vmatprep.subr.bf16.mxu0 0
        %1803 = vmatpush1.bf16.xpose.msra.mxu0 0
        %1804 = vmatprep.subr.bf16.mxu0 0
        %1805 = vmatpush1.bf16.xpose.msra.mxu0 0
        %1806 = vmatprep.subr.bf16.mxu0 0
        %1807 = vmatpush1.bf16.xpose.msra.mxu0 0
        %1808 = vmatprep.subr.bf16.mxu0 0
        %1809 = vmatpush1.bf16.xpose.msra.mxu0 0
        %1810 = vmatprep.subr.bf16.mxu0 0
        %1811 = vmatpush1.bf16.xpose.msra.mxu0 0
        %1812 = vmatprep.subr.bf16.mxu0 0
        %1813 = vmatpush1.bf16.xpose.msra.mxu0 0
        %1814 = vmatprep.subr.bf16.mxu0 0
        %1815 = vmatpush1.bf16.xpose.msra.mxu0 0
        %1816 = vmatprep.subr.bf16.mxu0 0
        %1817 = vmatpush1.bf16.xpose.msra.mxu0 0
        %1818 = vmatprep.subr.bf16.mxu0 0
        %1819 = vmatpush1.bf16.xpose.msra.mxu0 0
        %1820 = vmatprep.subr.bf16.mxu0 0
        %1821 = vmatpush1.bf16.xpose.msra.mxu0 0
        %1822 = vmatprep.mubr.bf16.mxu0 0
        %1823 = vmatmul.mubr.bf16.gmra.mrb[0].mxu0 %v1785
        %v1824 = vpop.f32.mrb[0].mxu0
        %v1825 = vadd.f32 0.0, %v1824
        %v1826 = vpop.f32.mrb[0].mxu0
        %v1827 = vpop.f32.mrb[0].mxu0
        %v1828 = vpop.f32.mrb[0].mxu0
        %1829 = vdwg.mxu0
        %v1830 = vmul.f32 %v1825, 0.35355338
        %v1831 = vadd.f32 %v1830, %v1548
        %v1832 = vsel %vm1558, %v1831, -inf
        %1833 = vmax.xlane.f32.xlu0 %v1832
        %v1834 = vpop.xlane.xlu0 %1833
        %v1835 = vsub.f32 %v1831, %v1834
        %v1836 = vmul.f32 %v1835, 1.442695
        %v1837 = vpow.pop %v1836
        %v1838 = vsel %vm1558, %v1837, 0.0
        %1839 = vadd.xlane.f32.xlu0 %v1838
        %v1840 = vpop.xlane.xlu0 %1839
        %v1841 = vrcp.pop %v1840
        %v1842 = vmul.f32 %v1837, %v1841
        %v1843 = vpack.c.bf16 %v1842, %v1842
        %1844 = vrot.lane.b32.xlu0 %v1554, 48
        %v1845 = vpop.permute.xlu0 %1844
        %v1847 = vsel %vm1558, %v1843, 0
        %v1850 = vsel %vm1624, %v1845, 0
        %1852 = vmatprep.subr.bf16.mxu0 0
        %1853 = vmatpush1.bf16.msra.mxu0 %v1850
        %1854 = vmatprep.subr.bf16.mxu0 0
        %1855 = vmatpush1.bf16.msra.mxu0 0
        %1856 = vmatprep.subr.bf16.mxu0 0
        %1857 = vmatpush1.bf16.msra.mxu0 0
        %1858 = vmatprep.subr.bf16.mxu0 0
        %1859 = vmatpush1.bf16.msra.mxu0 0
        %1860 = vmatprep.subr.bf16.mxu0 0
        %1861 = vmatpush1.bf16.msra.mxu0 0
        %1862 = vmatprep.subr.bf16.mxu0 0
        %1863 = vmatpush1.bf16.msra.mxu0 0
        %1864 = vmatprep.subr.bf16.mxu0 0
        %1865 = vmatpush1.bf16.msra.mxu0 0
        %1866 = vmatprep.subr.bf16.mxu0 0
        %1867 = vmatpush1.bf16.msra.mxu0 0
        %1868 = vmatprep.subr.bf16.mxu0 0
        %1869 = vmatpush1.bf16.msra.mxu0 0
        %1870 = vmatprep.subr.bf16.mxu0 0
        %1871 = vmatpush1.bf16.msra.mxu0 0
        %1872 = vmatprep.subr.bf16.mxu0 0
        %1873 = vmatpush1.bf16.msra.mxu0 0
        %1874 = vmatprep.subr.bf16.mxu0 0
        %1875 = vmatpush1.bf16.msra.mxu0 0
        %1876 = vmatprep.subr.bf16.mxu0 0
        %1877 = vmatpush1.bf16.msra.mxu0 0
        %1878 = vmatprep.subr.bf16.mxu0 0
        %1879 = vmatpush1.bf16.msra.mxu0 0
        %1880 = vmatprep.subr.bf16.mxu0 0
        %1881 = vmatpush1.bf16.msra.mxu0 0
        %1882 = vmatprep.subr.bf16.mxu0 0
        %1883 = vmatpush1.bf16.msra.mxu0 0
        %1884 = vmatprep.mubr.bf16.mxu0 0
        %1885 = vmatmul.mubr.bf16.gmra.mrb[0].mxu0 %v1847
        %v1886 = vpop.f32.mrb[0].mxu0
        %v1887 = vadd.f32 0.0, %v1886
        %v1888 = vpop.f32.mrb[0].mxu0
        %v1889 = vpop.f32.mrb[0].mxu0
        %v1890 = vpop.f32.mrb[0].mxu0
        %1891 = vdwg.mxu0
        %1892 = vrot.lane.b32.xlu0 %v1554, 104
        %v1893 = vpop.permute.xlu0 %1892
        %1894 = vrot.lane.b32.xlu0 %v1554, 72
        %v1895 = vpop.permute.xlu0 %1894
        %v1897 = vsel %vm1558, %v1893, 0
        %v1900 = vsel %vm1558, %v1895, 0
        %1902 = vmatprep.subr.bf16.mxu0 0
        %1903 = vmatpush1.bf16.xpose.msra.mxu0 %v1900
        %1904 = vmatprep.subr.bf16.mxu0 0
        %1905 = vmatpush1.bf16.xpose.msra.mxu0 0
        %1906 = vmatprep.subr.bf16.mxu0 0
        %1907 = vmatpush1.bf16.xpose.msra.mxu0 0
        %1908 = vmatprep.subr.bf16.mxu0 0
        %1909 = vmatpush1.bf16.xpose.msra.mxu0 0
        %1910 = vmatprep.subr.bf16.mxu0 0
        %1911 = vmatpush1.bf16.xpose.msra.mxu0 0
        %1912 = vmatprep.subr.bf16.mxu0 0
        %1913 = vmatpush1.bf16.xpose.msra.mxu0 0
        %1914 = vmatprep.subr.bf16.mxu0 0
        %1915 = vmatpush1.bf16.xpose.msra.mxu0 0
        %1916 = vmatprep.subr.bf16.mxu0 0
        %1917 = vmatpush1.bf16.xpose.msra.mxu0 0
        %1918 = vmatprep.subr.bf16.mxu0 0
        %1919 = vmatpush1.bf16.xpose.msra.mxu0 0
        %1920 = vmatprep.subr.bf16.mxu0 0
        %1921 = vmatpush1.bf16.xpose.msra.mxu0 0
        %1922 = vmatprep.subr.bf16.mxu0 0
        %1923 = vmatpush1.bf16.xpose.msra.mxu0 0
        %1924 = vmatprep.subr.bf16.mxu0 0
        %1925 = vmatpush1.bf16.xpose.msra.mxu0 0
        %1926 = vmatprep.subr.bf16.mxu0 0
        %1927 = vmatpush1.bf16.xpose.msra.mxu0 0
        %1928 = vmatprep.subr.bf16.mxu0 0
        %1929 = vmatpush1.bf16.xpose.msra.mxu0 0
        %1930 = vmatprep.subr.bf16.mxu0 0
        %1931 = vmatpush1.bf16.xpose.msra.mxu0 0
        %1932 = vmatprep.subr.bf16.mxu0 0
        %1933 = vmatpush1.bf16.xpose.msra.mxu0 0
        %1934 = vmatprep.mubr.bf16.mxu0 0
        %1935 = vmatmul.mubr.bf16.gmra.mrb[0].mxu0 %v1897
        %v1936 = vpop.f32.mrb[0].mxu0
        %v1937 = vadd.f32 0.0, %v1936
        %v1938 = vpop.f32.mrb[0].mxu0
        %v1939 = vpop.f32.mrb[0].mxu0
        %v1940 = vpop.f32.mrb[0].mxu0
        %1941 = vdwg.mxu0
        %v1942 = vmul.f32 %v1937, 0.35355338
        %v1943 = vadd.f32 %v1942, %v1548
        %v1944 = vsel %vm1558, %v1943, -inf
        %1945 = vmax.xlane.f32.xlu0 %v1944
        %v1946 = vpop.xlane.xlu0 %1945
        %v1947 = vsub.f32 %v1943, %v1946
        %v1948 = vmul.f32 %v1947, 1.442695
        %v1949 = vpow.pop %v1948
        %v1950 = vsel %vm1558, %v1949, 0.0
        %1951 = vadd.xlane.f32.xlu0 %v1950
        %v1952 = vpop.xlane.xlu0 %1951
        %v1953 = vrcp.pop %v1952
        %v1954 = vmul.f32 %v1949, %v1953
        %v1955 = vpack.c.bf16 %v1954, %v1954
        %1956 = vrot.lane.b32.xlu0 %v1554, 40
        %v1957 = vpop.permute.xlu0 %1956
        %v1959 = vsel %vm1558, %v1955, 0
        %v1962 = vsel %vm1624, %v1957, 0
        %1964 = vmatprep.subr.bf16.mxu0 0
        %1965 = vmatpush1.bf16.msra.mxu0 %v1962
        %1966 = vmatprep.subr.bf16.mxu0 0
        %1967 = vmatpush1.bf16.msra.mxu0 0
        %1968 = vmatprep.subr.bf16.mxu0 0
        %1969 = vmatpush1.bf16.msra.mxu0 0
        %1970 = vmatprep.subr.bf16.mxu0 0
        %1971 = vmatpush1.bf16.msra.mxu0 0
        %1972 = vmatprep.subr.bf16.mxu0 0
        %1973 = vmatpush1.bf16.msra.mxu0 0
        %1974 = vmatprep.subr.bf16.mxu0 0
        %1975 = vmatpush1.bf16.msra.mxu0 0
        %1976 = vmatprep.subr.bf16.mxu0 0
        %1977 = vmatpush1.bf16.msra.mxu0 0
        %1978 = vmatprep.subr.bf16.mxu0 0
        %1979 = vmatpush1.bf16.msra.mxu0 0
        %1980 = vmatprep.subr.bf16.mxu0 0
        %1981 = vmatpush1.bf16.msra.mxu0 0
        %1982 = vmatprep.subr.bf16.mxu0 0
        %1983 = vmatpush1.bf16.msra.mxu0 0
        %1984 = vmatprep.subr.bf16.mxu0 0
        %1985 = vmatpush1.bf16.msra.mxu0 0
        %1986 = vmatprep.subr.bf16.mxu0 0
        %1987 = vmatpush1.bf16.msra.mxu0 0
        %1988 = vmatprep.subr.bf16.mxu0 0
        %1989 = vmatpush1.bf16.msra.mxu0 0
        %1990 = vmatprep.subr.bf16.mxu0 0
        %1991 = vmatpush1.bf16.msra.mxu0 0
        %1992 = vmatprep.subr.bf16.mxu0 0
        %1993 = vmatpush1.bf16.msra.mxu0 0
        %1994 = vmatprep.subr.bf16.mxu0 0
        %1995 = vmatpush1.bf16.msra.mxu0 0
        %1996 = vmatprep.mubr.bf16.mxu0 0
        %1997 = vmatmul.mubr.bf16.gmra.mrb[0].mxu0 %v1959
        %v1998 = vpop.f32.mrb[0].mxu0
        %v1999 = vadd.f32 0.0, %v1998
        %v2000 = vpop.f32.mrb[0].mxu0
        %v2001 = vpop.f32.mrb[0].mxu0
        %v2002 = vpop.f32.mrb[0].mxu0
        %2003 = vdwg.mxu0
        %2005 = vrot.lane.b32.xlu0 %v1775, 8
        %v2006 = vpop.permute.xlu0 %2005
        %2009 = vrot.lane.b32.xlu0 %v1887, 16
        %v2010 = vpop.permute.xlu0 %2009
        %2013 = vrot.lane.b32.xlu0 %v1999, 24
        %v2014 = vpop.permute.xlu0 %2013
        %v2016 = vsel %vm1558, %v1663, %v2006
        %vm2017 = vcmask 130048
        %v2018 = vsel %vm2017, %v2016, %v2010
        %vm2019 = vcmask 195584
        %v2020 = vsel %vm2019, %v2018, %v2014
        %v2021 = vpack.c.bf16 %v2020, %v2020
        %v2023 = vlaneseq
        %v2024 = vshrl.u32 %v2023, 7
        %v2025 = vsub.s32 0, %v2024
        %v2026 = vrot.slane %v1553, %v2025
        %v2032 = vunpack.c.l.b16 %v1549
        %v2033 = vunpack.c.l.b16 %v1550
        %v2034 = vunpack.c.l.b16 %v1551
        %v2035 = vunpack.c.l.b16 %v1552
        %v2036 = vpack.c.b16 %v2033, %v2032
        %v2037 = vpack.c.b16 %v2035, %v2034
        %v2041 = vsel %vm1443, %v2021, 0
        %2043 = vmatprep.subr.bf16.mxu0 0
        %2044 = vmatpush1.bf16.msra.mxu0 %v2036
        %2045 = vmatprep.subr.bf16.mxu0 0
        %2046 = vmatpush1.bf16.msra.mxu0 %v2037
        %2047 = vmatprep.subr.bf16.mxu0 0
        %2048 = vmatpush1.bf16.msra.mxu0 0
        %2049 = vmatprep.subr.bf16.mxu0 0
        %2050 = vmatpush1.bf16.msra.mxu0 0
        %2051 = vmatprep.subr.bf16.mxu0 0
        %2052 = vmatpush1.bf16.msra.mxu0 0
        %2053 = vmatprep.subr.bf16.mxu0 0
        %2054 = vmatpush1.bf16.msra.mxu0 0
        %2055 = vmatprep.subr.bf16.mxu0 0
        %2056 = vmatpush1.bf16.msra.mxu0 0
        %2057 = vmatprep.subr.bf16.mxu0 0
        %2058 = vmatpush1.bf16.msra.mxu0 0
        %2059 = vmatprep.subr.bf16.mxu0 0
        %2060 = vmatpush1.bf16.msra.mxu0 0
        %2061 = vmatprep.subr.bf16.mxu0 0
        %2062 = vmatpush1.bf16.msra.mxu0 0
        %2063 = vmatprep.subr.bf16.mxu0 0
        %2064 = vmatpush1.bf16.msra.mxu0 0
        %2065 = vmatprep.subr.bf16.mxu0 0
        %2066 = vmatpush1.bf16.msra.mxu0 0
        %2067 = vmatprep.subr.bf16.mxu0 0
        %2068 = vmatpush1.bf16.msra.mxu0 0
        %2069 = vmatprep.subr.bf16.mxu0 0
        %2070 = vmatpush1.bf16.msra.mxu0 0
        %2071 = vmatprep.subr.bf16.mxu0 0
        %2072 = vmatpush1.bf16.msra.mxu0 0
        %2073 = vmatprep.subr.bf16.mxu0 0
        %2074 = vmatpush1.bf16.msra.mxu0 0
        %2075 = vmatprep.mubr.bf16.mxu0 0
        %2076 = vmatmul.mubr.bf16.gmra.mrb[0].mxu0 %v2041
        %v2077 = vpop.f32.mrb[0].mxu0
        %v2078 = vadd.f32 %v2026, %v2077
        %v2079 = vpop.f32.mrb[0].mxu0
        %v2080 = vpop.f32.mrb[0].mxu0
        %v2081 = vpop.f32.mrb[0].mxu0
        %2082 = vdwg.mxu0
        %v2083 = vadd.f32 %v1439, %v2078
        %v2084 = vld [vmem:[%s1135] sm:$0x1]
        %v2085 = vld [vmem:[%s1143] sm:$0x1]
        %v2086 = vsel %vm1443, %v2083, 0.0
        %2087 = vadd.xlane.f32.xlu0 %v2086
        %v2088 = vpop.xlane.xlu0 %2087
        %v2089 = vmul.f32 %v2088, %v1447
        %v2090 = vsub.f32 %v2083, %v2089
        %v2091 = vmul.f32 %v2090, %v2090
        %v2092 = vsel %vm1443, %v2091, 0.0
        %2093 = vadd.xlane.f32.xlu0 %v2092
        %v2094 = vpop.xlane.xlu0 %2093
        %v2095 = vmul.f32 %v2094, %v1454
        %v2096 = vrsqrt.pop %v2095
        %v2097 = vmul.f32 %v2095, %v2096
        %vm2098 = vcmp.eq.f32.partialorder %v2095, inf
        %v2099 = vsel %vm2098, %v2095, %v2097
        %vm2100 = vcmp.eq.f32.partialorder %v2095, 0.0
        %v2101 = vand.u32 %v2095, 2147483648
        %v2102 = vsel %vm2100, %v2101, %v2099
        %v2103 = vadd.f32 %v2102, 1e-06
        %v2104 = vrcp.pop %v2103
        %v2106 = vlaneseq
        %v2107 = vshrl.u32 %v2106, 7
        %v2108 = vsub.s32 0, %v2107
        %v2109 = vrot.slane %v2084, %v2108
        %v2111 = vmul.f32 %v2109, %v2090
        %v2112 = vmul.f32 %v2111, %v2104
        %v2114 = vlaneseq
        %v2115 = vshrl.u32 %v2114, 7
        %v2116 = vsub.s32 0, %v2115
        %v2117 = vrot.slane %v2085, %v2116
        %v2119 = vadd.f32 %v2112, %v2117
        %v2120 = vld [vmem:[%s1425] sm:$0xf]
        %v2121 = vld [vmem:[%s1425 + $0x4] sm:$0xf]
        %v2122 = vld [vmem:[%s1425 + $0x8] sm:$0xf]
        %v2123 = vld [vmem:[%s1425 + $0xc] sm:$0xf]
        %v2124 = vpack.c.bf16 %v2119, %v2119
        %v2125 = vld [vmem:[%s1151] sm:$0x1]
        %v2127 = vlaneseq
        %v2128 = vshrl.u32 %v2127, 7
        %v2129 = vsub.s32 0, %v2128
        %v2130 = vrot.slane %v2125, %v2129
        %v2136 = vunpack.c.l.b16 %v2120
        %v2137 = vunpack.c.l.b16 %v2121
        %v2138 = vunpack.c.l.b16 %v2122
        %v2139 = vunpack.c.l.b16 %v2123
        %v2140 = vpack.c.b16 %v2137, %v2136
        %v2141 = vpack.c.b16 %v2139, %v2138
        %v2145 = vsel %vm1443, %v2124, 0
        %2147 = vmatprep.subr.bf16.mxu0 0
        %2148 = vmatpush1.bf16.msra.mxu0 %v2140
        %2149 = vmatprep.subr.bf16.mxu0 0
        %2150 = vmatpush1.bf16.msra.mxu0 %v2141
        %2151 = vmatprep.subr.bf16.mxu0 0
        %2152 = vmatpush1.bf16.msra.mxu0 0
        %2153 = vmatprep.subr.bf16.mxu0 0
        %2154 = vmatpush1.bf16.msra.mxu0 0
        %2155 = vmatprep.subr.bf16.mxu0 0
        %2156 = vmatpush1.bf16.msra.mxu0 0
        %2157 = vmatprep.subr.bf16.mxu0 0
        %2158 = vmatpush1.bf16.msra.mxu0 0
        %2159 = vmatprep.subr.bf16.mxu0 0
        %2160 = vmatpush1.bf16.msra.mxu0 0
        %2161 = vmatprep.subr.bf16.mxu0 0
        %2162 = vmatpush1.bf16.msra.mxu0 0
        %2163 = vmatprep.subr.bf16.mxu0 0
        %2164 = vmatpush1.bf16.msra.mxu0 0
        %2165 = vmatprep.subr.bf16.mxu0 0
        %2166 = vmatpush1.bf16.msra.mxu0 0
        %2167 = vmatprep.subr.bf16.mxu0 0
        %2168 = vmatpush1.bf16.msra.mxu0 0
        %2169 = vmatprep.subr.bf16.mxu0 0
        %2170 = vmatpush1.bf16.msra.mxu0 0
        %2171 = vmatprep.subr.bf16.mxu0 0
        %2172 = vmatpush1.bf16.msra.mxu0 0
        %2173 = vmatprep.subr.bf16.mxu0 0
        %2174 = vmatpush1.bf16.msra.mxu0 0
        %2175 = vmatprep.subr.bf16.mxu0 0
        %2176 = vmatpush1.bf16.msra.mxu0 0
        %2177 = vmatprep.subr.bf16.mxu0 0
        %2178 = vmatpush1.bf16.msra.mxu0 0
        %2179 = vmatprep.mubr.bf16.mxu0 0
        %2180 = vmatmul.mubr.bf16.gmra.mrb[0].mxu0 %v2145
        %v2181 = vpop.f32.mrb[0].mxu0
        %v2182 = vadd.f32 %v2130, %v2181
        %v2183 = vpop.f32.mrb[0].mxu0
        %v2184 = vpop.f32.mrb[0].mxu0
        %v2185 = vpop.f32.mrb[0].mxu0
        %2186 = vdwg.mxu0
        %v2187 = vld [vmem:[%s1160] sm:$0xf]
        %v2188 = vld [vmem:[%s1160 + $0x4] sm:$0xf]
        %v2189 = vld [vmem:[%s1160 + $0x8] sm:$0xf]
        %v2190 = vld [vmem:[%s1160 + $0xc] sm:$0xf]
        %v2191 = vpack.c.bf16 %v1440, %v1440
        %v2192 = vld [vmem:[%s1168] sm:$0x1]
        %v2194 = vlaneseq
        %v2195 = vshrl.u32 %v2194, 7
        %v2196 = vsub.s32 0, %v2195
        %v2197 = vrot.slane %v2192, %v2196
        %v2203 = vunpack.c.l.b16 %v2187
        %v2204 = vunpack.c.l.b16 %v2188
        %v2205 = vunpack.c.l.b16 %v2189
        %v2206 = vunpack.c.l.b16 %v2190
        %v2207 = vpack.c.b16 %v2204, %v2203
        %v2208 = vpack.c.b16 %v2206, %v2205
        %v2212 = vsel %vm1443, %v2191, 0
        %2214 = vmatprep.subr.bf16.mxu0 0
        %2215 = vmatpush1.bf16.msra.mxu0 %v2207
        %2216 = vmatprep.subr.bf16.mxu0 0
        %2217 = vmatpush1.bf16.msra.mxu0 %v2208
        %2218 = vmatprep.subr.bf16.mxu0 0
        %2219 = vmatpush1.bf16.msra.mxu0 0
        %2220 = vmatprep.subr.bf16.mxu0 0
        %2221 = vmatpush1.bf16.msra.mxu0 0
        %2222 = vmatprep.subr.bf16.mxu0 0
        %2223 = vmatpush1.bf16.msra.mxu0 0
        %2224 = vmatprep.subr.bf16.mxu0 0
        %2225 = vmatpush1.bf16.msra.mxu0 0
        %2226 = vmatprep.subr.bf16.mxu0 0
        %2227 = vmatpush1.bf16.msra.mxu0 0
        %2228 = vmatprep.subr.bf16.mxu0 0
        %2229 = vmatpush1.bf16.msra.mxu0 0
        %2230 = vmatprep.subr.bf16.mxu0 0
        %2231 = vmatpush1.bf16.msra.mxu0 0
        %2232 = vmatprep.subr.bf16.mxu0 0
        %2233 = vmatpush1.bf16.msra.mxu0 0
        %2234 = vmatprep.subr.bf16.mxu0 0
        %2235 = vmatpush1.bf16.msra.mxu0 0
        %2236 = vmatprep.subr.bf16.mxu0 0
        %2237 = vmatpush1.bf16.msra.mxu0 0
        %2238 = vmatprep.subr.bf16.mxu0 0
        %2239 = vmatpush1.bf16.msra.mxu0 0
        %2240 = vmatprep.subr.bf16.mxu0 0
        %2241 = vmatpush1.bf16.msra.mxu0 0
        %2242 = vmatprep.subr.bf16.mxu0 0
        %2243 = vmatpush1.bf16.msra.mxu0 0
        %2244 = vmatprep.subr.bf16.mxu0 0
        %2245 = vmatpush1.bf16.msra.mxu0 0
        %2246 = vmatprep.mubr.bf16.mxu0 0
        %2247 = vmatmul.mubr.bf16.gmra.mrb[0].mxu0 %v2212
        %v2248 = vpop.f32.mrb[0].mxu0
        %v2249 = vadd.f32 %v2197, %v2248
        %v2250 = vpop.f32.mrb[0].mxu0
        %v2251 = vpop.f32.mrb[0].mxu0
        %v2252 = vpop.f32.mrb[0].mxu0
        %2253 = vdwg.mxu0
        %v2254 = vld [vmem:[%s1404] sm:$0x1]
        %v2255 = vunpack.c.l.bf16 %v2254
        %v2256 = vld [vmem:[%s1177] sm:$0xf]
        %v2257 = vld [vmem:[%s1177 + $0x4] sm:$0xf]
        %v2258 = vld [vmem:[%s1177 + $0x8] sm:$0xf]
        %v2259 = vld [vmem:[%s1177 + $0xc] sm:$0xf]
        %v2260 = vld [vmem:[%s1185] sm:$0x1]
        %v2261 = vpack.c.bf16 %v2182, %v2182
        %v2262 = vpack.c.bf16 %v2249, %v2249
        %v2264 = vsel %vm1558, %v2261, 0
        %v2267 = vsel %vm1558, %v2262, 0
        %2269 = vmatprep.subr.bf16.mxu0 0
        %2270 = vmatpush1.bf16.xpose.msra.mxu0 %v2267
        %2271 = vmatprep.subr.bf16.mxu0 0
        %2272 = vmatpush1.bf16.xpose.msra.mxu0 0
        %2273 = vmatprep.subr.bf16.mxu0 0
        %2274 = vmatpush1.bf16.xpose.msra.mxu0 0
        %2275 = vmatprep.subr.bf16.mxu0 0
        %2276 = vmatpush1.bf16.xpose.msra.mxu0 0
        %2277 = vmatprep.subr.bf16.mxu0 0
        %2278 = vmatpush1.bf16.xpose.msra.mxu0 0
        %2279 = vmatprep.subr.bf16.mxu0 0
        %2280 = vmatpush1.bf16.xpose.msra.mxu0 0
        %2281 = vmatprep.subr.bf16.mxu0 0
        %2282 = vmatpush1.bf16.xpose.msra.mxu0 0
        %2283 = vmatprep.subr.bf16.mxu0 0
        %2284 = vmatpush1.bf16.xpose.msra.mxu0 0
        %2285 = vmatprep.subr.bf16.mxu0 0
        %2286 = vmatpush1.bf16.xpose.msra.mxu0 0
        %2287 = vmatprep.subr.bf16.mxu0 0
        %2288 = vmatpush1.bf16.xpose.msra.mxu0 0
        %2289 = vmatprep.subr.bf16.mxu0 0
        %2290 = vmatpush1.bf16.xpose.msra.mxu0 0
        %2291 = vmatprep.subr.bf16.mxu0 0
        %2292 = vmatpush1.bf16.xpose.msra.mxu0 0
        %2293 = vmatprep.subr.bf16.mxu0 0
        %2294 = vmatpush1.bf16.xpose.msra.mxu0 0
        %2295 = vmatprep.subr.bf16.mxu0 0
        %2296 = vmatpush1.bf16.xpose.msra.mxu0 0
        %2297 = vmatprep.subr.bf16.mxu0 0
        %2298 = vmatpush1.bf16.xpose.msra.mxu0 0
        %2299 = vmatprep.subr.bf16.mxu0 0
        %2300 = vmatpush1.bf16.xpose.msra.mxu0 0
        %2301 = vmatprep.mubr.bf16.mxu0 0
        %2302 = vmatmul.mubr.bf16.gmra.mrb[0].mxu0 %v2264
        %v2303 = vpop.f32.mrb[0].mxu0
        %v2304 = vadd.f32 0.0, %v2303
        %v2305 = vpop.f32.mrb[0].mxu0
        %v2306 = vpop.f32.mrb[0].mxu0
        %v2307 = vpop.f32.mrb[0].mxu0
        %2308 = vdwg.mxu0
        %v2309 = vmul.f32 %v2304, 0.35355338
        %v2310 = vlaneseq
        %v2311 = vshrl.u32 %v2310, 7
        %v2312 = vsub.s32 0, %v2311
        %v2313 = vrot.slane %v2255, %v2312
        %v2314 = vadd.f32 %v2309, %v2313
        %v2315 = vsel %vm1558, %v2314, -inf
        %2316 = vmax.xlane.f32.xlu0 %v2315
        %v2317 = vpop.xlane.xlu0 %2316
        %v2318 = vsub.f32 %v2314, %v2317
        %v2319 = vmul.f32 %v2318, 1.442695
        %v2320 = vpow.pop %v2319
        %v2321 = vsel %vm1558, %v2320, 0.0
        %2322 = vadd.xlane.f32.xlu0 %v2321
        %v2323 = vpop.xlane.xlu0 %2322
        %v2324 = vrcp.pop %v2323
        %v2325 = vmul.f32 %v2320, %v2324
        %v2326 = vpack.c.bf16 %v2325, %v2325
        %2328 = vrot.lane.b32.xlu0 %v2262, 96
        %v2329 = vpop.permute.xlu0 %2328
        %v2331 = vsel %vm1558, %v2326, 0
        %v2334 = vsel %vm1624, %v2329, 0
        %2336 = vmatprep.subr.bf16.mxu0 0
        %2337 = vmatpush1.bf16.msra.mxu0 %v2334
        %2338 = vmatprep.subr.bf16.mxu0 0
        %2339 = vmatpush1.bf16.msra.mxu0 0
        %2340 = vmatprep.subr.bf16.mxu0 0
        %2341 = vmatpush1.bf16.msra.mxu0 0
        %2342 = vmatprep.subr.bf16.mxu0 0
        %2343 = vmatpush1.bf16.msra.mxu0 0
        %2344 = vmatprep.subr.bf16.mxu0 0
        %2345 = vmatpush1.bf16.msra.mxu0 0
        %2346 = vmatprep.subr.bf16.mxu0 0
        %2347 = vmatpush1.bf16.msra.mxu0 0
        %2348 = vmatprep.subr.bf16.mxu0 0
        %2349 = vmatpush1.bf16.msra.mxu0 0
        %2350 = vmatprep.subr.bf16.mxu0 0
        %2351 = vmatpush1.bf16.msra.mxu0 0
        %2352 = vmatprep.subr.bf16.mxu0 0
        %2353 = vmatpush1.bf16.msra.mxu0 0
        %2354 = vmatprep.subr.bf16.mxu0 0
        %2355 = vmatpush1.bf16.msra.mxu0 0
        %2356 = vmatprep.subr.bf16.mxu0 0
        %2357 = vmatpush1.bf16.msra.mxu0 0
        %2358 = vmatprep.subr.bf16.mxu0 0
        %2359 = vmatpush1.bf16.msra.mxu0 0
        %2360 = vmatprep.subr.bf16.mxu0 0
        %2361 = vmatpush1.bf16.msra.mxu0 0
        %2362 = vmatprep.subr.bf16.mxu0 0
        %2363 = vmatpush1.bf16.msra.mxu0 0
        %2364 = vmatprep.subr.bf16.mxu0 0
        %2365 = vmatpush1.bf16.msra.mxu0 0
        %2366 = vmatprep.subr.bf16.mxu0 0
        %2367 = vmatpush1.bf16.msra.mxu0 0
        %2368 = vmatprep.mubr.bf16.mxu0 0
        %2369 = vmatmul.mubr.bf16.gmra.mrb[0].mxu0 %v2331
        %v2370 = vpop.f32.mrb[0].mxu0
        %v2371 = vadd.f32 0.0, %v2370
        %v2372 = vpop.f32.mrb[0].mxu0
        %v2373 = vpop.f32.mrb[0].mxu0
        %v2374 = vpop.f32.mrb[0].mxu0
        %2375 = vdwg.mxu0
        %2377 = vrot.lane.b32.xlu0 %v2261, 120
        %v2378 = vpop.permute.xlu0 %2377
        %2379 = vrot.lane.b32.xlu0 %v2262, 120
        %v2380 = vpop.permute.xlu0 %2379
        %v2382 = vsel %vm1558, %v2378, 0
        %v2385 = vsel %vm1558, %v2380, 0
        %2387 = vmatprep.subr.bf16.mxu0 0
        %2388 = vmatpush1.bf16.xpose.msra.mxu0 %v2385
        %2389 = vmatprep.subr.bf16.mxu0 0
        %2390 = vmatpush1.bf16.xpose.msra.mxu0 0
        %2391 = vmatprep.subr.bf16.mxu0 0
        %2392 = vmatpush1.bf16.xpose.msra.mxu0 0
        %2393 = vmatprep.subr.bf16.mxu0 0
        %2394 = vmatpush1.bf16.xpose.msra.mxu0 0
        %2395 = vmatprep.subr.bf16.mxu0 0
        %2396 = vmatpush1.bf16.xpose.msra.mxu0 0
        %2397 = vmatprep.subr.bf16.mxu0 0
        %2398 = vmatpush1.bf16.xpose.msra.mxu0 0
        %2399 = vmatprep.subr.bf16.mxu0 0
        %2400 = vmatpush1.bf16.xpose.msra.mxu0 0
        %2401 = vmatprep.subr.bf16.mxu0 0
        %2402 = vmatpush1.bf16.xpose.msra.mxu0 0
        %2403 = vmatprep.subr.bf16.mxu0 0
        %2404 = vmatpush1.bf16.xpose.msra.mxu0 0
        %2405 = vmatprep.subr.bf16.mxu0 0
        %2406 = vmatpush1.bf16.xpose.msra.mxu0 0
        %2407 = vmatprep.subr.bf16.mxu0 0
        %2408 = vmatpush1.bf16.xpose.msra.mxu0 0
        %2409 = vmatprep.subr.bf16.mxu0 0
        %2410 = vmatpush1.bf16.xpose.msra.mxu0 0
        %2411 = vmatprep.subr.bf16.mxu0 0
        %2412 = vmatpush1.bf16.xpose.msra.mxu0 0
        %2413 = vmatprep.subr.bf16.mxu0 0
        %2414 = vmatpush1.bf16.xpose.msra.mxu0 0
        %2415 = vmatprep.subr.bf16.mxu0 0
        %2416 = vmatpush1.bf16.xpose.msra.mxu0 0
        %2417 = vmatprep.subr.bf16.mxu0 0
        %2418 = vmatpush1.bf16.xpose.msra.mxu0 0
        %2419 = vmatprep.mubr.bf16.mxu0 0
        %2420 = vmatmul.mubr.bf16.gmra.mrb[0].mxu0 %v2382
        %v2421 = vpop.f32.mrb[0].mxu0
        %v2422 = vadd.f32 0.0, %v2421
        %v2423 = vpop.f32.mrb[0].mxu0
        %v2424 = vpop.f32.mrb[0].mxu0
        %v2425 = vpop.f32.mrb[0].mxu0
        %2426 = vdwg.mxu0
        %v2427 = vmul.f32 %v2422, 0.35355338
        %v2428 = vadd.f32 %v2427, %v2313
        %v2429 = vsel %vm1558, %v2428, -inf
        %2430 = vmax.xlane.f32.xlu0 %v2429
        %v2431 = vpop.xlane.xlu0 %2430
        %v2432 = vsub.f32 %v2428, %v2431
        %v2433 = vmul.f32 %v2432, 1.442695
        %v2434 = vpow.pop %v2433
        %v2435 = vsel %vm1558, %v2434, 0.0
        %2436 = vadd.xlane.f32.xlu0 %v2435
        %v2437 = vpop.xlane.xlu0 %2436
        %v2438 = vrcp.pop %v2437
        %v2439 = vmul.f32 %v2434, %v2438
        %v2440 = vpack.c.bf16 %v2439, %v2439
        %2441 = vrot.lane.b32.xlu0 %v2262, 88
        %v2442 = vpop.permute.xlu0 %2441
        %v2444 = vsel %vm1558, %v2440, 0
        %v2447 = vsel %vm1624, %v2442, 0
        %2449 = vmatprep.subr.bf16.mxu0 0
        %2450 = vmatpush1.bf16.msra.mxu0 %v2447
        %2451 = vmatprep.subr.bf16.mxu0 0
        %2452 = vmatpush1.bf16.msra.mxu0 0
        %2453 = vmatprep.subr.bf16.mxu0 0
        %2454 = vmatpush1.bf16.msra.mxu0 0
        %2455 = vmatprep.subr.bf16.mxu0 0
        %2456 = vmatpush1.bf16.msra.mxu0 0
        %2457 = vmatprep.subr.bf16.mxu0 0
        %2458 = vmatpush1.bf16.msra.mxu0 0
        %2459 = vmatprep.subr.bf16.mxu0 0
        %2460 = vmatpush1.bf16.msra.mxu0 0
        %2461 = vmatprep.subr.bf16.mxu0 0
        %2462 = vmatpush1.bf16.msra.mxu0 0
        %2463 = vmatprep.subr.bf16.mxu0 0
        %2464 = vmatpush1.bf16.msra.mxu0 0
        %2465 = vmatprep.subr.bf16.mxu0 0
        %2466 = vmatpush1.bf16.msra.mxu0 0
        %2467 = vmatprep.subr.bf16.mxu0 0
        %2468 = vmatpush1.bf16.msra.mxu0 0
        %2469 = vmatprep.subr.bf16.mxu0 0
        %2470 = vmatpush1.bf16.msra.mxu0 0
        %2471 = vmatprep.subr.bf16.mxu0 0
        %2472 = vmatpush1.bf16.msra.mxu0 0
        %2473 = vmatprep.subr.bf16.mxu0 0
        %2474 = vmatpush1.bf16.msra.mxu0 0
        %2475 = vmatprep.subr.bf16.mxu0 0
        %2476 = vmatpush1.bf16.msra.mxu0 0
        %2477 = vmatprep.subr.bf16.mxu0 0
        %2478 = vmatpush1.bf16.msra.mxu0 0
        %2479 = vmatprep.subr.bf16.mxu0 0
        %2480 = vmatpush1.bf16.msra.mxu0 0
        %2481 = vmatprep.mubr.bf16.mxu0 0
        %2482 = vmatmul.mubr.bf16.gmra.mrb[0].mxu0 %v2444
        %v2483 = vpop.f32.mrb[0].mxu0
        %v2484 = vadd.f32 0.0, %v2483
        %v2485 = vpop.f32.mrb[0].mxu0
        %v2486 = vpop.f32.mrb[0].mxu0
        %v2487 = vpop.f32.mrb[0].mxu0
        %2488 = vdwg.mxu0
        %2489 = vrot.lane.b32.xlu0 %v2261, 112
        %v2490 = vpop.permute.xlu0 %2489
        %2491 = vrot.lane.b32.xlu0 %v2262, 112
        %v2492 = vpop.permute.xlu0 %2491
        %v2494 = vsel %vm1558, %v2490, 0
        %v2497 = vsel %vm1558, %v2492, 0
        %2499 = vmatprep.subr.bf16.mxu0 0
        %2500 = vmatpush1.bf16.xpose.msra.mxu0 %v2497
        %2501 = vmatprep.subr.bf16.mxu0 0
        %2502 = vmatpush1.bf16.xpose.msra.mxu0 0
        %2503 = vmatprep.subr.bf16.mxu0 0
        %2504 = vmatpush1.bf16.xpose.msra.mxu0 0
        %2505 = vmatprep.subr.bf16.mxu0 0
        %2506 = vmatpush1.bf16.xpose.msra.mxu0 0
        %2507 = vmatprep.subr.bf16.mxu0 0
        %2508 = vmatpush1.bf16.xpose.msra.mxu0 0
        %2509 = vmatprep.subr.bf16.mxu0 0
        %2510 = vmatpush1.bf16.xpose.msra.mxu0 0
        %2511 = vmatprep.subr.bf16.mxu0 0
        %2512 = vmatpush1.bf16.xpose.msra.mxu0 0
        %2513 = vmatprep.subr.bf16.mxu0 0
        %2514 = vmatpush1.bf16.xpose.msra.mxu0 0
        %2515 = vmatprep.subr.bf16.mxu0 0
        %2516 = vmatpush1.bf16.xpose.msra.mxu0 0
        %2517 = vmatprep.subr.bf16.mxu0 0
        %2518 = vmatpush1.bf16.xpose.msra.mxu0 0
        %2519 = vmatprep.subr.bf16.mxu0 0
        %2520 = vmatpush1.bf16.xpose.msra.mxu0 0
        %2521 = vmatprep.subr.bf16.mxu0 0
        %2522 = vmatpush1.bf16.xpose.msra.mxu0 0
        %2523 = vmatprep.subr.bf16.mxu0 0
        %2524 = vmatpush1.bf16.xpose.msra.mxu0 0
        %2525 = vmatprep.subr.bf16.mxu0 0
        %2526 = vmatpush1.bf16.xpose.msra.mxu0 0
        %2527 = vmatprep.subr.bf16.mxu0 0
        %2528 = vmatpush1.bf16.xpose.msra.mxu0 0
        %2529 = vmatprep.subr.bf16.mxu0 0
        %2530 = vmatpush1.bf16.xpose.msra.mxu0 0
        %2531 = vmatprep.mubr.bf16.mxu0 0
        %2532 = vmatmul.mubr.bf16.gmra.mrb[0].mxu0 %v2494
        %v2533 = vpop.f32.mrb[0].mxu0
        %v2534 = vadd.f32 0.0, %v2533
        %v2535 = vpop.f32.mrb[0].mxu0
        %v2536 = vpop.f32.mrb[0].mxu0
        %v2537 = vpop.f32.mrb[0].mxu0
        %2538 = vdwg.mxu0
        %v2539 = vmul.f32 %v2534, 0.35355338
        %v2540 = vadd.f32 %v2539, %v2313
        %v2541 = vsel %vm1558, %v2540, -inf
        %2542 = vmax.xlane.f32.xlu0 %v2541
        %v2543 = vpop.xlane.xlu0 %2542
        %v2544 = vsub.f32 %v2540, %v2543
        %v2545 = vmul.f32 %v2544, 1.442695
        %v2546 = vpow.pop %v2545
        %v2547 = vsel %vm1558, %v2546, 0.0
        %2548 = vadd.xlane.f32.xlu0 %v2547
        %v2549 = vpop.xlane.xlu0 %2548
        %v2550 = vrcp.pop %v2549
        %v2551 = vmul.f32 %v2546, %v2550
        %v2552 = vpack.c.bf16 %v2551, %v2551
        %2553 = vrot.lane.b32.xlu0 %v2262, 80
        %v2554 = vpop.permute.xlu0 %2553
        %v2556 = vsel %vm1558, %v2552, 0
        %v2559 = vsel %vm1624, %v2554, 0
        %2561 = vmatprep.subr.bf16.mxu0 0
        %2562 = vmatpush1.bf16.msra.mxu0 %v2559
        %2563 = vmatprep.subr.bf16.mxu0 0
        %2564 = vmatpush1.bf16.msra.mxu0 0
        %2565 = vmatprep.subr.bf16.mxu0 0
        %2566 = vmatpush1.bf16.msra.mxu0 0
        %2567 = vmatprep.subr.bf16.mxu0 0
        %2568 = vmatpush1.bf16.msra.mxu0 0
        %2569 = vmatprep.subr.bf16.mxu0 0
        %2570 = vmatpush1.bf16.msra.mxu0 0
        %2571 = vmatprep.subr.bf16.mxu0 0
        %2572 = vmatpush1.bf16.msra.mxu0 0
        %2573 = vmatprep.subr.bf16.mxu0 0
        %2574 = vmatpush1.bf16.msra.mxu0 0
        %2575 = vmatprep.subr.bf16.mxu0 0
        %2576 = vmatpush1.bf16.msra.mxu0 0
        %2577 = vmatprep.subr.bf16.mxu0 0
        %2578 = vmatpush1.bf16.msra.mxu0 0
        %2579 = vmatprep.subr.bf16.mxu0 0
        %2580 = vmatpush1.bf16.msra.mxu0 0
        %2581 = vmatprep.subr.bf16.mxu0 0
        %2582 = vmatpush1.bf16.msra.mxu0 0
        %2583 = vmatprep.subr.bf16.mxu0 0
        %2584 = vmatpush1.bf16.msra.mxu0 0
        %2585 = vmatprep.subr.bf16.mxu0 0
        %2586 = vmatpush1.bf16.msra.mxu0 0
        %2587 = vmatprep.subr.bf16.mxu0 0
        %2588 = vmatpush1.bf16.msra.mxu0 0
        %2589 = vmatprep.subr.bf16.mxu0 0
        %2590 = vmatpush1.bf16.msra.mxu0 0
        %2591 = vmatprep.subr.bf16.mxu0 0
        %2592 = vmatpush1.bf16.msra.mxu0 0
        %2593 = vmatprep.mubr.bf16.mxu0 0
        %2594 = vmatmul.mubr.bf16.gmra.mrb[0].mxu0 %v2556
        %v2595 = vpop.f32.mrb[0].mxu0
        %v2596 = vadd.f32 0.0, %v2595
        %v2597 = vpop.f32.mrb[0].mxu0
        %v2598 = vpop.f32.mrb[0].mxu0
        %v2599 = vpop.f32.mrb[0].mxu0
        %2600 = vdwg.mxu0
        %2601 = vrot.lane.b32.xlu0 %v2261, 104
        %v2602 = vpop.permute.xlu0 %2601
        %2603 = vrot.lane.b32.xlu0 %v2262, 104
        %v2604 = vpop.permute.xlu0 %2603
        %v2606 = vsel %vm1558, %v2602, 0
        %v2609 = vsel %vm1558, %v2604, 0
        %2611 = vmatprep.subr.bf16.mxu0 0
        %2612 = vmatpush1.bf16.xpose.msra.mxu0 %v2609
        %2613 = vmatprep.subr.bf16.mxu0 0
        %2614 = vmatpush1.bf16.xpose.msra.mxu0 0
        %2615 = vmatprep.subr.bf16.mxu0 0
        %2616 = vmatpush1.bf16.xpose.msra.mxu0 0
        %2617 = vmatprep.subr.bf16.mxu0 0
        %2618 = vmatpush1.bf16.xpose.msra.mxu0 0
        %2619 = vmatprep.subr.bf16.mxu0 0
        %2620 = vmatpush1.bf16.xpose.msra.mxu0 0
        %2621 = vmatprep.subr.bf16.mxu0 0
        %2622 = vmatpush1.bf16.xpose.msra.mxu0 0
        %2623 = vmatprep.subr.bf16.mxu0 0
        %2624 = vmatpush1.bf16.xpose.msra.mxu0 0
        %2625 = vmatprep.subr.bf16.mxu0 0
        %2626 = vmatpush1.bf16.xpose.msra.mxu0 0
        %2627 = vmatprep.subr.bf16.mxu0 0
        %2628 = vmatpush1.bf16.xpose.msra.mxu0 0
        %2629 = vmatprep.subr.bf16.mxu0 0
        %2630 = vmatpush1.bf16.xpose.msra.mxu0 0
        %2631 = vmatprep.subr.bf16.mxu0 0
        %2632 = vmatpush1.bf16.xpose.msra.mxu0 0
        %2633 = vmatprep.subr.bf16.mxu0 0
        %2634 = vmatpush1.bf16.xpose.msra.mxu0 0
        %2635 = vmatprep.subr.bf16.mxu0 0
        %2636 = vmatpush1.bf16.xpose.msra.mxu0 0
        %2637 = vmatprep.subr.bf16.mxu0 0
        %2638 = vmatpush1.bf16.xpose.msra.mxu0 0
        %2639 = vmatprep.subr.bf16.mxu0 0
        %2640 = vmatpush1.bf16.xpose.msra.mxu0 0
        %2641 = vmatprep.subr.bf16.mxu0 0
        %2642 = vmatpush1.bf16.xpose.msra.mxu0 0
        %2643 = vmatprep.mubr.bf16.mxu0 0
        %2644 = vmatmul.mubr.bf16.gmra.mrb[0].mxu0 %v2606
        %v2645 = vpop.f32.mrb[0].mxu0
        %v2646 = vadd.f32 0.0, %v2645
        %v2647 = vpop.f32.mrb[0].mxu0
        %v2648 = vpop.f32.mrb[0].mxu0
        %v2649 = vpop.f32.mrb[0].mxu0
        %2650 = vdwg.mxu0
        %v2651 = vmul.f32 %v2646, 0.35355338
        %v2652 = vadd.f32 %v2651, %v2313
        %v2653 = vsel %vm1558, %v2652, -inf
        %2654 = vmax.xlane.f32.xlu0 %v2653
        %v2655 = vpop.xlane.xlu0 %2654
        %v2656 = vsub.f32 %v2652, %v2655
        %v2657 = vmul.f32 %v2656, 1.442695
        %v2658 = vpow.pop %v2657
        %v2659 = vsel %vm1558, %v2658, 0.0
        %2660 = vadd.xlane.f32.xlu0 %v2659
        %v2661 = vpop.xlane.xlu0 %2660
        %v2662 = vrcp.pop %v2661
        %v2663 = vmul.f32 %v2658, %v2662
        %v2664 = vpack.c.bf16 %v2663, %v2663
        %2665 = vrot.lane.b32.xlu0 %v2262, 72
        %v2666 = vpop.permute.xlu0 %2665
        %v2668 = vsel %vm1558, %v2664, 0
        %v2671 = vsel %vm1624, %v2666, 0
        %2673 = vmatprep.subr.bf16.mxu0 0
        %2674 = vmatpush1.bf16.msra.mxu0 %v2671
        %2675 = vmatprep.subr.bf16.mxu0 0
        %2676 = vmatpush1.bf16.msra.mxu0 0
        %2677 = vmatprep.subr.bf16.mxu0 0
        %2678 = vmatpush1.bf16.msra.mxu0 0
        %2679 = vmatprep.subr.bf16.mxu0 0
        %2680 = vmatpush1.bf16.msra.mxu0 0
        %2681 = vmatprep.subr.bf16.mxu0 0
        %2682 = vmatpush1.bf16.msra.mxu0 0
        %2683 = vmatprep.subr.bf16.mxu0 0
        %2684 = vmatpush1.bf16.msra.mxu0 0
        %2685 = vmatprep.subr.bf16.mxu0 0
        %2686 = vmatpush1.bf16.msra.mxu0 0
        %2687 = vmatprep.subr.bf16.mxu0 0
        %2688 = vmatpush1.bf16.msra.mxu0 0
        %2689 = vmatprep.subr.bf16.mxu0 0
        %2690 = vmatpush1.bf16.msra.mxu0 0
        %2691 = vmatprep.subr.bf16.mxu0 0
        %2692 = vmatpush1.bf16.msra.mxu0 0
        %2693 = vmatprep.subr.bf16.mxu0 0
        %2694 = vmatpush1.bf16.msra.mxu0 0
        %2695 = vmatprep.subr.bf16.mxu0 0
        %2696 = vmatpush1.bf16.msra.mxu0 0
        %2697 = vmatprep.subr.bf16.mxu0 0
        %2698 = vmatpush1.bf16.msra.mxu0 0
        %2699 = vmatprep.subr.bf16.mxu0 0
        %2700 = vmatpush1.bf16.msra.mxu0 0
        %2701 = vmatprep.subr.bf16.mxu0 0
        %2702 = vmatpush1.bf16.msra.mxu0 0
        %2703 = vmatprep.subr.bf16.mxu0 0
        %2704 = vmatpush1.bf16.msra.mxu0 0
        %2705 = vmatprep.mubr.bf16.mxu0 0
        %2706 = vmatmul.mubr.bf16.gmra.mrb[0].mxu0 %v2668
        %v2707 = vpop.f32.mrb[0].mxu0
        %v2708 = vadd.f32 0.0, %v2707
        %v2709 = vpop.f32.mrb[0].mxu0
        %v2710 = vpop.f32.mrb[0].mxu0
        %v2711 = vpop.f32.mrb[0].mxu0
        %2712 = vdwg.mxu0
        %2714 = vrot.lane.b32.xlu0 %v2484, 8
        %v2715 = vpop.permute.xlu0 %2714
        %2718 = vrot.lane.b32.xlu0 %v2596, 16
        %v2719 = vpop.permute.xlu0 %2718
        %2722 = vrot.lane.b32.xlu0 %v2708, 24
        %v2723 = vpop.permute.xlu0 %2722
        %v2725 = vsel %vm1558, %v2371, %v2715
        %v2726 = vsel %vm2017, %v2725, %v2719
        %v2727 = vsel %vm2019, %v2726, %v2723
        %v2728 = vpack.c.bf16 %v2727, %v2727
        %v2730 = vlaneseq
        %v2731 = vshrl.u32 %v2730, 7
        %v2732 = vsub.s32 0, %v2731
        %v2733 = vrot.slane %v2260, %v2732
        %v2739 = vunpack.c.l.b16 %v2256
        %v2740 = vunpack.c.l.b16 %v2257
        %v2741 = vunpack.c.l.b16 %v2258
        %v2742 = vunpack.c.l.b16 %v2259
        %v2743 = vpack.c.b16 %v2740, %v2739
        %v2744 = vpack.c.b16 %v2742, %v2741
        %v2748 = vsel %vm1443, %v2728, 0
        %2750 = vmatprep.subr.bf16.mxu0 0
        %2751 = vmatpush1.bf16.msra.mxu0 %v2743
        %2752 = vmatprep.subr.bf16.mxu0 0
        %2753 = vmatpush1.bf16.msra.mxu0 %v2744
        %2754 = vmatprep.subr.bf16.mxu0 0
        %2755 = vmatpush1.bf16.msra.mxu0 0
        %2756 = vmatprep.subr.bf16.mxu0 0
        %2757 = vmatpush1.bf16.msra.mxu0 0
        %2758 = vmatprep.subr.bf16.mxu0 0
        %2759 = vmatpush1.bf16.msra.mxu0 0
        %2760 = vmatprep.subr.bf16.mxu0 0
        %2761 = vmatpush1.bf16.msra.mxu0 0
        %2762 = vmatprep.subr.bf16.mxu0 0
        %2763 = vmatpush1.bf16.msra.mxu0 0
        %2764 = vmatprep.subr.bf16.mxu0 0
        %2765 = vmatpush1.bf16.msra.mxu0 0
        %2766 = vmatprep.subr.bf16.mxu0 0
        %2767 = vmatpush1.bf16.msra.mxu0 0
        %2768 = vmatprep.subr.bf16.mxu0 0
        %2769 = vmatpush1.bf16.msra.mxu0 0
        %2770 = vmatprep.subr.bf16.mxu0 0
        %2771 = vmatpush1.bf16.msra.mxu0 0
        %2772 = vmatprep.subr.bf16.mxu0 0
        %2773 = vmatpush1.bf16.msra.mxu0 0
        %2774 = vmatprep.subr.bf16.mxu0 0
        %2775 = vmatpush1.bf16.msra.mxu0 0
        %2776 = vmatprep.subr.bf16.mxu0 0
        %2777 = vmatpush1.bf16.msra.mxu0 0
        %2778 = vmatprep.subr.bf16.mxu0 0
        %2779 = vmatpush1.bf16.msra.mxu0 0
        %2780 = vmatprep.subr.bf16.mxu0 0
        %2781 = vmatpush1.bf16.msra.mxu0 0
        %2782 = vmatprep.mubr.bf16.mxu0 0
        %2783 = vmatmul.mubr.bf16.gmra.mrb[0].mxu0 %v2748
        %v2784 = vpop.f32.mrb[0].mxu0
        %v2785 = vadd.f32 %v2733, %v2784
        %v2786 = vpop.f32.mrb[0].mxu0
        %v2787 = vpop.f32.mrb[0].mxu0
        %v2788 = vpop.f32.mrb[0].mxu0
        %2789 = vdwg.mxu0
        %v2790 = vadd.f32 %v2083, %v2785
        %v2791 = vld [vmem:[%s1193] sm:$0x1]
        %v2792 = vld [vmem:[%s1201] sm:$0x1]
        %v2793 = vsel %vm1443, %v2790, 0.0
        %2794 = vadd.xlane.f32.xlu0 %v2793
        %v2795 = vpop.xlane.xlu0 %2794
        %v2796 = vmul.f32 %v2795, %v1447
        %v2797 = vsub.f32 %v2790, %v2796
        %v2798 = vmul.f32 %v2797, %v2797
        %v2799 = vsel %vm1443, %v2798, 0.0
        %2800 = vadd.xlane.f32.xlu0 %v2799
        %v2801 = vpop.xlane.xlu0 %2800
        %v2802 = vmul.f32 %v2801, %v1454
        %v2803 = vrsqrt.pop %v2802
        %v2804 = vmul.f32 %v2802, %v2803
        %vm2805 = vcmp.eq.f32.partialorder %v2802, inf
        %v2806 = vsel %vm2805, %v2802, %v2804
        %vm2807 = vcmp.eq.f32.partialorder %v2802, 0.0
        %v2808 = vand.u32 %v2802, 2147483648
        %v2809 = vsel %vm2807, %v2808, %v2806
        %v2810 = vadd.f32 %v2809, 1e-06
        %v2811 = vrcp.pop %v2810
        %v2813 = vlaneseq
        %v2814 = vshrl.u32 %v2813, 7
        %v2815 = vsub.s32 0, %v2814
        %v2816 = vrot.slane %v2791, %v2815
        %v2818 = vmul.f32 %v2816, %v2797
        %v2819 = vmul.f32 %v2818, %v2811
        %v2821 = vlaneseq
        %v2822 = vshrl.u32 %v2821, 7
        %v2823 = vsub.s32 0, %v2822
        %v2824 = vrot.slane %v2792, %v2823
        %v2826 = vadd.f32 %v2819, %v2824
        %v2827 = vld [vmem:[%s1210] sm:$0xf]
        %v2828 = vld [vmem:[%s1210 + $0x4] sm:$0xf]
        %v2829 = vld [vmem:[%s1210 + $0x8] sm:$0xf]
        %v2830 = vld [vmem:[%s1210 + $0xc] sm:$0xf]
        %v2831 = vpack.c.bf16 %v2826, %v2826
        %v2832 = vld [vmem:[%s1218] sm:$0x1]
        %v2834 = vlaneseq
        %v2835 = vshrl.u32 %v2834, 7
        %v2836 = vsub.s32 0, %v2835
        %v2837 = vrot.slane %v2832, %v2836
        %v2843 = vunpack.c.l.b16 %v2827
        %v2844 = vunpack.c.l.b16 %v2828
        %v2845 = vunpack.c.l.b16 %v2829
        %v2846 = vunpack.c.l.b16 %v2830
        %v2847 = vpack.c.b16 %v2844, %v2843
        %v2848 = vpack.c.b16 %v2846, %v2845
        %v2852 = vsel %vm1443, %v2831, 0
        %2854 = vmatprep.subr.bf16.mxu0 0
        %2855 = vmatpush1.bf16.msra.mxu0 %v2847
        %2856 = vmatprep.subr.bf16.mxu0 0
        %2857 = vmatpush1.bf16.msra.mxu0 %v2848
        %2858 = vmatprep.subr.bf16.mxu0 0
        %2859 = vmatpush1.bf16.msra.mxu0 0
        %2860 = vmatprep.subr.bf16.mxu0 0
        %2861 = vmatpush1.bf16.msra.mxu0 0
        %2862 = vmatprep.subr.bf16.mxu0 0
        %2863 = vmatpush1.bf16.msra.mxu0 0
        %2864 = vmatprep.subr.bf16.mxu0 0
        %2865 = vmatpush1.bf16.msra.mxu0 0
        %2866 = vmatprep.subr.bf16.mxu0 0
        %2867 = vmatpush1.bf16.msra.mxu0 0
        %2868 = vmatprep.subr.bf16.mxu0 0
        %2869 = vmatpush1.bf16.msra.mxu0 0
        %2870 = vmatprep.subr.bf16.mxu0 0
        %2871 = vmatpush1.bf16.msra.mxu0 0
        %2872 = vmatprep.subr.bf16.mxu0 0
        %2873 = vmatpush1.bf16.msra.mxu0 0
        %2874 = vmatprep.subr.bf16.mxu0 0
        %2875 = vmatpush1.bf16.msra.mxu0 0
        %2876 = vmatprep.subr.bf16.mxu0 0
        %2877 = vmatpush1.bf16.msra.mxu0 0
        %2878 = vmatprep.subr.bf16.mxu0 0
        %2879 = vmatpush1.bf16.msra.mxu0 0
        %2880 = vmatprep.subr.bf16.mxu0 0
        %2881 = vmatpush1.bf16.msra.mxu0 0
        %2882 = vmatprep.subr.bf16.mxu0 0
        %2883 = vmatpush1.bf16.msra.mxu0 0
        %2884 = vmatprep.subr.bf16.mxu0 0
        %2885 = vmatpush1.bf16.msra.mxu0 0
        %2886 = vmatprep.mubr.bf16.mxu0 0
        %2887 = vmatmul.mubr.bf16.gmra.mrb[0].mxu0 %v2852
        %v2888 = vpop.f32.mrb[0].mxu0
        %v2889 = vadd.f32 %v2837, %v2888
        %v2890 = vpop.f32.mrb[0].mxu0
        %v2891 = vpop.f32.mrb[0].mxu0
        %v2892 = vpop.f32.mrb[0].mxu0
        %2893 = vdwg.mxu0
        %v2894 = vmax.f32 %v2889, 0.0
        %v2895 = vld [vmem:[%s1430] sm:$0xf]
        %v2896 = vld [vmem:[%s1430 + $0x4] sm:$0xf]
        %v2897 = vld [vmem:[%s1430 + $0x8] sm:$0xf]
        %v2898 = vld [vmem:[%s1430 + $0xc] sm:$0xf]
        %v2899 = vld [vmem:[%s1430 + $0x10] sm:$0xf]
        %v2900 = vld [vmem:[%s1430 + $0x14] sm:$0xf]
        %v2901 = vld [vmem:[%s1430 + $0x18] sm:$0xf]
        %v2902 = vld [vmem:[%s1430 + $0x1c] sm:$0xf]
        %v2903 = vpack.c.bf16 %v2894, %v2894
        %v2912 = vunpack.c.l.b16 %v2895
        %v2913 = vunpack.c.l.b16 %v2896
        %v2914 = vunpack.c.l.b16 %v2897
        %v2915 = vunpack.c.l.b16 %v2898
        %v2916 = vunpack.c.l.b16 %v2899
        %v2917 = vunpack.c.l.b16 %v2900
        %v2918 = vunpack.c.l.b16 %v2901
        %v2919 = vunpack.c.l.b16 %v2902
        %v2920 = vpack.c.b16 %v2913, %v2912
        %v2921 = vpack.c.b16 %v2915, %v2914
        %v2922 = vpack.c.b16 %v2917, %v2916
        %v2923 = vpack.c.b16 %v2919, %v2918
        %vm2928 = vcmask 523264
        %v2930 = vsel %vm2928, %v2903, 0
        %2932 = vmatprep.subr.bf16.mxu0 0
        %2933 = vmatpush1.bf16.msra.mxu0 %v2920
        %2934 = vmatprep.subr.bf16.mxu0 0
        %2935 = vmatpush1.bf16.msra.mxu0 %v2921
        %2936 = vmatprep.subr.bf16.mxu0 0
        %2937 = vmatpush1.bf16.msra.mxu0 %v2922
        %2938 = vmatprep.subr.bf16.mxu0 0
        %2939 = vmatpush1.bf16.msra.mxu0 %v2923
        %2940 = vmatprep.subr.bf16.mxu0 0
        %2941 = vmatpush1.bf16.msra.mxu0 0
        %2942 = vmatprep.subr.bf16.mxu0 0
        %2943 = vmatpush1.bf16.msra.mxu0 0
        %2944 = vmatprep.subr.bf16.mxu0 0
        %2945 = vmatpush1.bf16.msra.mxu0 0
        %2946 = vmatprep.subr.bf16.mxu0 0
        %2947 = vmatpush1.bf16.msra.mxu0 0
        %2948 = vmatprep.subr.bf16.mxu0 0
        %2949 = vmatpush1.bf16.msra.mxu0 0
        %2950 = vmatprep.subr.bf16.mxu0 0
        %2951 = vmatpush1.bf16.msra.mxu0 0
        %2952 = vmatprep.subr.bf16.mxu0 0
        %2953 = vmatpush1.bf16.msra.mxu0 0
        %2954 = vmatprep.subr.bf16.mxu0 0
        %2955 = vmatpush1.bf16.msra.mxu0 0
        %2956 = vmatprep.subr.bf16.mxu0 0
        %2957 = vmatpush1.bf16.msra.mxu0 0
        %2958 = vmatprep.subr.bf16.mxu0 0
        %2959 = vmatpush1.bf16.msra.mxu0 0
        %2960 = vmatprep.subr.bf16.mxu0 0
        %2961 = vmatpush1.bf16.msra.mxu0 0
        %2962 = vmatprep.subr.bf16.mxu0 0
        %2963 = vmatpush1.bf16.msra.mxu0 0
        %2964 = vmatprep.mubr.bf16.mxu0 0
        %2965 = vmatmul.mubr.bf16.gmra.mrb[0].mxu0 %v2930
        %v2966 = vpop.f32.mrb[0].mxu0
        %v2967 = vadd.f32 0.0, %v2966
        %v2968 = vpop.f32.mrb[0].mxu0
        %v2969 = vpop.f32.mrb[0].mxu0
        %v2970 = vpop.f32.mrb[0].mxu0
        %2971 = vdwg.mxu0
        %v2972 = vadd.f32 %v2790, %v2967
        %v2973 = vld [vmem:[%s1226] sm:$0x1]
        %v2975 = vlaneseq
        %v2976 = vshrl.u32 %v2975, 7
        %v2977 = vsub.s32 0, %v2976
        %v2978 = vrot.slane %v2973, %v2977
        %v2980 = vadd.f32 %v2972, %v2978
        %2981 = vst.msk [vmem:[#allocation2] sm:$0xff] %vm1443, %v2980
        %p2982 = scmp.eq.s32.totalorder %s69, 1
        // Predicated region
        $region185: #{decoder_forward.1} parent=123 // pred_check
          %p2983 = pneg %p2982
        $region186: #{decoder_forward.1} parent=123 // pred_check_branch
          %2985 = sbr.rel (%p2983) target = $region188
        $region187: #{decoder_forward.1} parent=123 // pred_region
          %v2986 = vld [vmem:[%s24] sm:$0x1]
          %v2987 = vld [vmem:[%s25] sm:$0x1]
          %v2988 = vsel %vm1443, %v2980, 0.0
          %2989 = vadd.xlane.f32.xlu0 %v2988
          %v2990 = vpop.xlane.xlu0 %2989
          %v2991 = vmul.f32 %v2990, %v1447
          %v2992 = vsub.f32 %v2980, %v2991
          %v2993 = vmul.f32 %v2992, %v2992
          %v2994 = vsel %vm1443, %v2993, 0.0
          %2995 = vadd.xlane.f32.xlu0 %v2994
          %v2996 = vpop.xlane.xlu0 %2995
          %v2997 = vmul.f32 %v2996, %v1454
          %v2998 = vrsqrt.pop %v2997
          %v2999 = vmul.f32 %v2997, %v2998
          %vm3000 = vcmp.eq.f32.partialorder %v2997, inf
          %v3001 = vsel %vm3000, %v2997, %v2999
          %vm3002 = vcmp.eq.f32.partialorder %v2997, 0.0
          %v3003 = vand.u32 %v2997, 2147483648
          %v3004 = vsel %vm3002, %v3003, %v3001
          %v3005 = vadd.f32 %v3004, 1e-06
          %v3006 = vrcp.pop %v3005
          %v3008 = vlaneseq
          %v3009 = vshrl.u32 %v3008, 7
          %v3010 = vsub.s32 0, %v3009
          %v3011 = vrot.slane %v2986, %v3010
          %v3013 = vmul.f32 %v3011, %v2992
          %v3014 = vmul.f32 %v3013, %v3006
          %v3016 = vlaneseq
          %v3017 = vshrl.u32 %v3016, 7
          %v3018 = vsub.s32 0, %v3017
          %v3019 = vrot.slane %v2987, %v3018
          %v3021 = vadd.f32 %v3014, %v3019
          %3022 = vst.msk [vmem:[%s1389] sm:$0xff] %vm1443, %v3021
        $region188: #{decoder_forward.1} parent=123 // pred_fallthru
          _
        %s3023 = sand.u32 %s750, 1
        %s3024 = scalar_lea.sflag [#allocation5], %s3023
        %s3025 = sand.u32 %s750, 1
        %s3026 = smul.addr %s3025, 8
        %s3027 = scalar_lea.vmem [#allocation26], %s3026
        // Predicated region
        $region189: #{decoder_forward.1} parent=123 // pred_check
          %p3028 = pneg %p760
        $region190: #{decoder_forward.1} parent=123 // pred_check_branch
          %3030 = sbr.rel (%p3028) target = $region192
        $region191: #{decoder_forward.1} parent=123 // pred_region
          %s3032 = ssub.s32 128, 128
          %3033 = vsyncadd %s3024, %s3032
          %s3034 = smul.addr %s68, 128
          %s3035 = scalar_lea.hbm %s26, %s3034
          %s3037 = sshll.u32 %s3027, 4
          %s3038 = int_to_ptr.vmem [resolvable:$true] %s3037
          %3040 = dma.vmem_to_hbm [thread:$0]  %s3038, 128, %s3035, %s3024
        $region192: #{decoder_forward.1} parent=123 // pred_fallthru
          _
      $region124: #{decoder_forward.1} parent=5 // pred_fallthru
        _
      %p3041 = scmp.le.s32.totalorder 2, %s59
      // Predicated region
      $region193: #{decoder_forward.1} parent=5 // pred_check
        %p3042 = pneg %p3041
      $region194: #{decoder_forward.1} parent=5 // pred_check_branch
        %3044 = sbr.rel (%p3042) target = $region196
      $region195: #{decoder_forward.1} parent=5 // pred_region
        %s3045 = ssub.s32 %s59, 2
        // Predicated region
        $region197: #{decoder_forward.1} parent=195 // pred_check
          %p3046 = pneg %p766
        $region198: #{decoder_forward.1} parent=195 // pred_check_branch
          %3048 = sbr.rel (%p3046) target = $region200
        $region199: #{decoder_forward.1} parent=195 // pred_region
          %s3049 = sand.u32 %s751, 1
          %s3050 = scalar_lea.sflag [#allocation5], %s3049
          %s3051 = sand.u32 %s751, 1
          %s3052 = smul.addr %s3051, 8
          %s3053 = scalar_lea.vmem [#allocation26], %s3052
          %3054 = dma.done %s3050, 128
        $region200: #{decoder_forward.1} parent=195 // pred_fallthru
          _
      $region196: #{decoder_forward.1} parent=5 // pred_fallthru
        _
    $region6: #{decoder_forward.1} parent=1 // loop_footer
      %s63 = sadd.s32 1, %s59
    $region7: #{decoder_forward.1} parent=1 // loop_footer_branch
      %58 = sbr.rel target = $region3
    $region8: #{decoder_forward.1} parent=1 // loop_exit
      _
    %3055 = vsyncpa [#allocation4], 1
    %s3056 = scalar_lea.sflag [#allocation4], 1
    %3057 = vsyncpa %s3056, 1
    %3058 = vsyncpa [#allocation7], 1
    %s3059 = scalar_lea.sflag [#allocation7], 1
    %3060 = vsyncpa %s3059, 1
    %3061 = vsyncpa [#allocation10], 1
    %s3062 = scalar_lea.sflag [#allocation10], 1
    %3063 = vsyncpa %s3062, 1
    %3064 = vsyncpa [#allocation13], 1
    %s3065 = scalar_lea.sflag [#allocation13], 1
    %3066 = vsyncpa %s3065, 1
    %3067 = vsyncpa [#allocation16], 1
    %s3068 = scalar_lea.sflag [#allocation16], 1
    %3069 = vsyncpa %s3068, 1
    %3070 = vsyncpa [#allocation19], 1
    %s3071 = scalar_lea.sflag [#allocation19], 1
    %3072 = vsyncpa %s3071, 1
    %3073 = vsyncpa [#allocation22], 1
    %s3074 = scalar_lea.sflag [#allocation22], 1
    %3075 = vsyncpa %s3074, 1
    %3076 = vsyncpa [#allocation25], 1
    %s3077 = scalar_lea.sflag [#allocation25], 1
    %3078 = vsyncpa %s3077, 1
    %3079 = vsyncpa [#allocation5], 1
    %s3080 = scalar_lea.sflag [#allocation5], 1
    %3081 = vsyncpa %s3080, 1

</llo_original>
